<compile_context>
chip_gen: v7x
topology: tpu7x:2x2x1
jax: 0.10.0
libtpu: 0.0.40
codegen_flags: <defaults>
</compile_context>

<pallas_src>
import functools
import jax
import jax.numpy as jnp
from jax.experimental import pallas as pl
from jax.experimental.pallas import tpu as pltpu

_VMEM_LIMIT = 48 * 1024 * 1024  # safe on v5e/v6e (128 MiB phys) and v7x (64 MiB phys)


def _round_up(x, m):
    return (x + m - 1) // m * m


def _pick_tile_128(n, max_tile=512):
    """Round n up to a multiple of 128 and pick the largest tile in {512,256,128} dividing it."""
    n_p = _round_up(n, 128)
    for t in (max_tile, 256, 128):
        if t <= max_tile and n_p % t == 0:
            return n_p, t
    return n_p, 128


def _maybe_pad2(x, rows, cols):
    r, c = x.shape
    if rows == r and cols == c:
        return x
    return jnp.pad(x, ((0, rows - r), (0, cols - c)))


def _maybe_pad1(x, n):
    if x.shape[0] == n:
        return x
    return jnp.pad(x, (0, n - x.shape[0]))


# ---------------------------------------------------------------------------
# Pallas kernel 1: M/N/K-tiled GEMM, fused bias (+ optional LeakyReLU) epilogue
# ---------------------------------------------------------------------------
def _gemm_bias_leaky_kernel(a_ref, b_ref, bias_ref, o_ref, *, alpha, apply_leaky):
    k = pl.program_id(2)

    @pl.when(k == 0)
    def _():
        o_ref[...] = jnp.zeros_like(o_ref)

    # bf16 x bf16 -> f32 accumulate directly into the resident output block.
    o_ref[...] += jnp.dot(a_ref[...], b_ref[...], preferred_element_type=jnp.float32)

    @pl.when(k == pl.num_programs(2) - 1)
    def _():
        y = o_ref[...] + bias_ref[...]
        if apply_leaky:
            y = jnp.where(y >= 0, y, alpha * y)
        o_ref[...] = y


def gemm_bias_leaky(a_bf16, b_bf16, bias, alpha):
    """leaky_relu(a @ b + bias, alpha); alpha == 1.0 statically skips the activation."""
    M, K = a_bf16.shape
    _, Cout = b_bf16.shape
    tm = min(256, _round_up(M, 8))
    Mp = _round_up(M, tm)
    Kp, tk = _pick_tile_128(K, 512)
    Np, tn = _pick_tile_128(Cout, 512)

    a_p = _maybe_pad2(a_bf16, Mp, Kp)
    b_p = _maybe_pad2(b_bf16, Kp, Np)
    bias_p = _maybe_pad1(bias.astype(jnp.float32), Np).reshape(1, Np)

    out = pl.pallas_call(
        functools.partial(_gemm_bias_leaky_kernel, alpha=alpha,
                          apply_leaky=(alpha != 1.0)),
        out_shape=jax.ShapeDtypeStruct((Mp, Np), jnp.float32),
        grid_spec=pltpu.PrefetchScalarGridSpec(
            num_scalar_prefetch=0,
            grid=(Mp // tm, Np // tn, Kp // tk),
            in_specs=[
                pl.BlockSpec((tm, tk), lambda i, j, k: (i, k)),
                pl.BlockSpec((tk, tn), lambda i, j, k: (k, j)),
                pl.BlockSpec((1, tn), lambda i, j, k: (0, j)),
            ],
            out_specs=pl.BlockSpec((tm, tn), lambda i, j, k: (i, j)),
        ),
        compiler_params=pltpu.CompilerParams(
            dimension_semantics=("parallel", "parallel", "arbitrary"),
            vmem_limit_bytes=_VMEM_LIMIT),
    )(a_p, b_p, bias_p)
    return out  # padded (Mp, Np); caller slices


# ---------------------------------------------------------------------------
# Pallas kernel 2: M/N/K-tiled GEMM (no bias/act) + fused per-column BN statistics
# ---------------------------------------------------------------------------
def _gemm_stats_kernel(a_ref, b_ref, o_ref, sum_ref, sumsq_ref):
    k = pl.program_id(2)

    @pl.when(k == 0)
    def _():
        o_ref[...] = jnp.zeros_like(o_ref)

    o_ref[...] += jnp.dot(a_ref[...], b_ref[...], preferred_element_type=jnp.float32)

    @pl.when(k == pl.num_programs(2) - 1)
    def _():
        acc = o_ref[...]
        s = jnp.sum(acc, axis=0, keepdims=True)
        ss = jnp.sum(acc * acc, axis=0, keepdims=True)
        sum_ref[...] = jnp.broadcast_to(s, sum_ref.shape)
        sumsq_ref[...] = jnp.broadcast_to(ss, sumsq_ref.shape)


def gemm_conv_stats(a_bf16, b_bf16):
    """Returns (y_padded (Mp,Np) f32, col_sum (Np,), col_sumsq (Np,), tm).

    Padded A rows / B columns are zero so they contribute nothing to the statistics."""
    M, K = a_bf16.shape
    _, Cout = b_bf16.shape
    tm = min(256, _round_up(M, 8))
    Mp = _round_up(M, tm)
    Kp, tk = _pick_tile_128(K, 512)
    Np, tn = _pick_tile_128(Cout, 512)
    mt = Mp // tm

    a_p = _maybe_pad2(a_bf16, Mp, Kp)
    b_p = _maybe_pad2(b_bf16, Kp, Np)

    y, psum, psumsq = pl.pallas_call(
        _gemm_stats_kernel,
        out_shape=(
            jax.ShapeDtypeStruct((Mp, Np), jnp.float32),
            jax.ShapeDtypeStruct((mt * 8, Np), jnp.float32),
            jax.ShapeDtypeStruct((mt * 8, Np), jnp.float32),
        ),
        grid_spec=pltpu.PrefetchScalarGridSpec(
            num_scalar_prefetch=0,
            grid=(mt, Np // tn, Kp // tk),
            in_specs=[
                pl.BlockSpec((tm, tk), lambda i, j, k: (i, k)),
                pl.BlockSpec((tk, tn), lambda i, j, k: (k, j)),
            ],
            out_specs=[
                pl.BlockSpec((tm, tn), lambda i, j, k: (i, j)),
                pl.BlockSpec((8, tn), lambda i, j, k: (i, j)),
                pl.BlockSpec((8, tn), lambda i, j, k: (i, j)),
            ],
        ),
        compiler_params=pltpu.CompilerParams(
            dimension_semantics=("parallel", "parallel", "arbitrary"),
            vmem_limit_bytes=_VMEM_LIMIT),
    )(a_p, b_p)

    # each (8, tn) block holds the tile's column-sums broadcast over 8 rows
    col_sum = psum.reshape(mt, 8, Np)[:, 0, :].sum(axis=0)
    col_sumsq = psumsq.reshape(mt, 8, Np)[:, 0, :].sum(axis=0)
    return y, col_sum, col_sumsq, tm


# ---------------------------------------------------------------------------
# Pallas kernel 3: M-tiled per-column affine + LeakyReLU (BatchNorm apply)
# ---------------------------------------------------------------------------
def _affine_leaky_kernel(x_ref, scale_ref, shift_ref, o_ref, *, alpha):
    y = x_ref[...] * scale_ref[...] + shift_ref[...]
    o_ref[...] = jnp.where(y >= 0, y, alpha * y)


def affine_leaky(x_padded, scale, shift, alpha, tm):
    """x_padded: (Mp, Np) f32 with Mp % tm == 0, Np % 128 == 0."""
    Mp, Np = x_padded.shape
    scale_p = _maybe_pad1(scale.astype(jnp.float32), Np).reshape(1, Np)
    shift_p = _maybe_pad1(shift.astype(jnp.float32), Np).reshape(1, Np)

    # grow the row tile for better HBM-roofline utilization while keeping it a divisor of Mp
    tm_a = tm
    while tm_a * 2 <= 1024 and Mp % (tm_a * 2) == 0:
        tm_a *= 2

    out = pl.pallas_call(
        functools.partial(_affine_leaky_kernel, alpha=alpha),
        out_shape=jax.ShapeDtypeStruct((Mp, Np), jnp.float32),
        grid_spec=pltpu.PrefetchScalarGridSpec(
            num_scalar_prefetch=0,
            grid=(Mp // tm_a,),
            in_specs=[
                pl.BlockSpec((tm_a, Np), lambda i: (i, 0)),
                pl.BlockSpec((1, Np), lambda i: (0, 0)),
                pl.BlockSpec((1, Np), lambda i: (0, 0)),
            ],
            out_specs=pl.BlockSpec((tm_a, Np), lambda i: (i, 0)),
        ),
        compiler_params=pltpu.CompilerParams(
            dimension_semantics=("parallel",),
            vmem_limit_bytes=_VMEM_LIMIT),
    )(x_padded, scale_p, shift_p)
    return out


# ---------------------------------------------------------------------------
# JAX glue: im2col, conv layers
# ---------------------------------------------------------------------------
def im2col(x_nhwc, kh, kw, stride, pad):
    x = jnp.pad(x_nhwc, ((0, 0), (pad, pad), (pad, pad), (0, 0)))
    N, H, W, C = x.shape
    OH = (H - kh) // stride + 1
    OW = (W - kw) // stride + 1
    cols = []
    for i in range(kh):
        for j in range(kw):
            cols.append(x[:, i:i + stride * OH:stride, j:j + stride * OW:stride, :])
    patches = jnp.concatenate(cols, axis=-1)          # (N, OH, OW, kh*kw*C)
    return patches.reshape(N * OH * OW, kh * kw * C), (N, OH, OW)


def _weights_to_gemm_b(w_oihw):
    KH, KW = w_oihw.shape[2], w_oihw.shape[3]
    Cout, Cin = w_oihw.shape[0], w_oihw.shape[1]
    return jnp.transpose(w_oihw, (2, 3, 1, 0)).reshape(KH * KW * Cin, Cout).astype(jnp.bfloat16)


def conv_bias_leaky(x_nhwc, w_oihw, bias, stride, alpha):
    """Conv (PyTorch OIHW weights) with fused bias + LeakyReLU(alpha). alpha=1 -> identity."""
    Cout, Cin, KH, KW = w_oihw.shape
    A, (N, OH, OW) = im2col(x_nhwc.astype(jnp.bfloat16), KH, KW, stride, 1)
    B = _weights_to_gemm_b(w_oihw)
    y_pad = gemm_bias_leaky(A, B, bias, alpha)
    M = N * OH * OW
    return y_pad[:M, :Cout].reshape(N, OH, OW, Cout)


def conv_bn_leaky(x_nhwc, w_oihw, gamma, beta, stride, eps=1e-5, alpha=0.2):
    """Conv (no bias) -> BatchNorm (train-mode batch stats, biased var) -> LeakyReLU(alpha)."""
    Cout, Cin, KH, KW = w_oihw.shape
    A, (N, OH, OW) = im2col(x_nhwc.astype(jnp.bfloat16), KH, KW, stride, 1)
    B = _weights_to_gemm_b(w_oihw)
    y_pad, col_sum, col_sumsq, tm = gemm_conv_stats(A, B)
    M = N * OH * OW
    mean = col_sum[:Cout] / M
    var = jnp.maximum(col_sumsq[:Cout] / M - mean * mean, 0.0)   # biased batch variance
    inv = gamma * jax.lax.rsqrt(var + eps)
    scale = inv
    shift = beta - mean * inv
    z_pad = affine_leaky(y_pad, scale, shift, alpha, tm)
    return z_pad[:M, :Cout].reshape(N, OH, OW, Cout)


# ---------------------------------------------------------------------------
# NLayerDiscriminator
# ---------------------------------------------------------------------------
def init_params(key, input_nc):
    ndf = 64
    # (cin, cout, stride, has_bias, has_bn) exactly as built by the PyTorch __init__
    layout = [
        (input_nc, ndf,     2, True,  False),
        (ndf,      ndf * 2, 2, False, True),
        (ndf * 2,  ndf * 4, 2, False, True),
        (ndf * 4,  ndf * 8, 1, False, True),
        (ndf * 8,  1,       1, True,  False),
    ]
    params = []
    for (cin, cout, stride, has_bias, has_bn) in layout:
        key, k1, k2, k3, k4 = jax.random.split(key, 5)
        w = 0.05 * jax.random.normal(k1, (cout, cin, 4, 4), jnp.float32)
        b = 0.05 * jax.random.normal(k2, (cout,), jnp.float32) if has_bias else None
        if has_bn:
            gamma = 1.0 + 0.1 * jax.random.normal(k3, (cout,), jnp.float32)
            beta = 0.1 * jax.random.normal(k4, (cout,), jnp.float32)
        else:
            gamma = beta = None
        params.append(dict(w=w, b=b, gamma=gamma, beta=beta, stride=stride))
    return params


def nlayer_discriminator_forward(x_nchw, params):
    x = jnp.transpose(x_nchw, (0, 2, 3, 1))  # NCHW -> NHWC
    # layer 0: conv(s=2, bias) + LeakyReLU(0.2)
    p = params[0]
    x = conv_bias_leaky(x, p["w"], p["b"], p["stride"], alpha=0.2)
    # layers 1..3: conv(no bias) + BatchNorm(train) + LeakyReLU(0.2)
    for i in (1, 2, 3):
        p = params[i]
        x = conv_bn_leaky(x, p["w"], p["gamma"], p["beta"], p["stride"], eps=1e-5, alpha=0.2)
    # layer 4: conv(s=1, bias), no activation
    p = params[4]
    x = conv_bias_leaky(x, p["w"], p["b"], p["stride"], alpha=1.0)
    return jnp.transpose(x, (0, 3, 1, 2))  # NHWC -> NCHW


# ---------------------------------------------------------------------------
# Pure-JAX reference (lax.conv, f32) for a correctness check
# ---------------------------------------------------------------------------
def reference_forward(x_nchw, params):
    def conv(x, w, b, stride):
        y = jax.lax.conv_general_dilated(
            x, w, (stride, stride), ((1, 1), (1, 1)),
            dimension_numbers=("NCHW", "OIHW", "NCHW"))
        if b is not None:
            y = y + b[None, :, None, None]
        return y

    def leaky(x):
        return jnp.where(x >= 0, x, 0.2 * x)

    def bn(x, gamma, beta):
        mean = jnp.mean(x, axis=(0, 2, 3), keepdims=True)
        var = jnp.mean((x - mean) ** 2, axis=(0, 2, 3), keepdims=True)
        return (x - mean) / jnp.sqrt(var + 1e-5) * gamma[None, :, None, None] + beta[None, :, None, None]

    x = leaky(conv(x_nchw, params[0]["w"], params[0]["b"], params[0]["stride"]))
    for i in (1, 2, 3):
        p = params[i]
        x = leaky(bn(conv(x, p["w"], None, p["stride"]), p["gamma"], p["beta"]))
    p = params[4]
    return conv(x, p["w"], p["b"], p["stride"])


if __name__ == "__main__":
    key = jax.random.PRNGKey(0)
    kx, kp = jax.random.split(key)
    input_nc = 3
    x = jax.random.normal(kx, (2, input_nc, 32, 32), jnp.float32)
    params = init_params(kp, input_nc)

    out = jax.jit(lambda xx: nlayer_discriminator_forward(xx, params))(x)
    jax.block_until_ready(out)

    ref = reference_forward(x, params)
    assert out.shape == ref.shape == (2, 1, 2, 2), (out.shape, ref.shape)
    # Tolerance reflects bf16 MXU operands (f32 accumulation) vs the f32 reference;
    # genuine layout/stride/BN bugs produce errors orders of magnitude larger.
    max_err = float(jnp.max(jnp.abs(out - ref)))
    assert jnp.allclose(out, ref, rtol=5e-2, atol=5e-2), max_err

    print("KERNEL_OK")
</pallas_src>

<mosaic_0001>
module attributes {stable_mosaic.version = 11 : i64} {
  func.func @_gemm_bias_leaky_kernel(%arg0: i32, %arg1: i32, %arg2: i32, %arg3: memref<256x128xbf16, #tpu.memory_space<vmem>>, %arg4: memref<128x128xbf16, #tpu.memory_space<vmem>>, %arg5: memref<1x128xf32, #tpu.memory_space<vmem>>, %arg6: memref<256x128xf32, #tpu.memory_space<vmem>>) attributes {dimension_semantics = [#tpu.dimension_semantics<parallel>, #tpu.dimension_semantics<parallel>, #tpu.dimension_semantics<arbitrary>], iteration_bounds = array<i64: 2, 1, 1>, scalar_prefetch = 0 : i64, scratch_operands = 0 : i64, tpu.core_type = #tpu.core_type<tc>, window_params = [{transform_indices = @transform_0, window_bounds = array<i64: 256, 128>}, {transform_indices = @transform_1, window_bounds = array<i64: 128, 128>}, {transform_indices = @transform_2, window_bounds = array<i64: 1, 128>}, {transform_indices = @transform_3, window_bounds = array<i64: 256, 128>}]} {
    %c0_i32 = arith.constant 0 : i32
    %0 = arith.cmpi eq, %arg2, %c0_i32 : i32
    %1 = arith.extui %0 : i1 to i32
    %c0_i32_0 = arith.constant 0 : i32
    %2 = arith.cmpi ne, %1, %c0_i32_0 : i32
    scf.if %2 {
      %cst_10 = arith.constant 0.000000e+00 : f32
      %12 = vector.broadcast %cst_10 : f32 to vector<256x128xf32>
      %c0_11 = arith.constant 0 : index
      %c0_12 = arith.constant 0 : index
      %13 = vector.load %arg6[%c0_11, %c0_12] : memref<256x128xf32, #tpu.memory_space<vmem>>, vector<256x128xf32>
      tpu.vector_store %arg6[%c0_11, %c0_12], %12 {strides = array<i32>} : memref<256x128xf32, #tpu.memory_space<vmem>>, vector<256x128xf32>,
    } else {
    }
    %c0 = arith.constant 0 : index
    %c0_1 = arith.constant 0 : index
    %3 = vector.load %arg6[%c0, %c0_1] : memref<256x128xf32, #tpu.memory_space<vmem>>, vector<256x128xf32>
    %c0_2 = arith.constant 0 : index
    %c0_3 = arith.constant 0 : index
    %4 = vector.load %arg3[%c0_2, %c0_3] : memref<256x128xbf16, #tpu.memory_space<vmem>>, vector<256x128xbf16>
    %c0_4 = arith.constant 0 : index
    %c0_5 = arith.constant 0 : index
    %5 = vector.load %arg4[%c0_4, %c0_5] : memref<128x128xbf16, #tpu.memory_space<vmem>>, vector<128x128xbf16>
    %cst = arith.constant dense<0.000000e+00> : vector<256x128xf32>
    %6 = tpu.matmul %4, %5, %cst {dimension_numbers = #tpu.dot_dimension_numbers<[1], [0], [0], [1], [0, 0, 1, 1], [], []>} : vector<256x128xbf16>, vector<128x128xbf16>, vector<256x128xf32> -> vector<256x128xf32>
    %7 = arith.addf %3, %6 : vector<256x128xf32>
    %c0_6 = arith.constant 0 : index
    %c0_7 = arith.constant 0 : index
    %8 = vector.load %arg6[%c0_6, %c0_7] : memref<256x128xf32, #tpu.memory_space<vmem>>, vector<256x128xf32>
    tpu.vector_store %arg6[%c0_6, %c0_7], %7 {strides = array<i32>} : memref<256x128xf32, #tpu.memory_space<vmem>>, vector<256x128xf32>,
    %c0_i32_8 = arith.constant 0 : i32
    %9 = arith.cmpi eq, %arg2, %c0_i32_8 : i32
    %10 = arith.extui %9 : i1 to i32
    %c0_i32_9 = arith.constant 0 : i32
    %11 = arith.cmpi ne, %10, %c0_i32_9 : i32
    scf.if %11 {
      %c0_10 = arith.constant 0 : index
      %c0_11 = arith.constant 0 : index
      %12 = vector.load %arg6[%c0_10, %c0_11] : memref<256x128xf32, #tpu.memory_space<vmem>>, vector<256x128xf32>
      %c0_12 = arith.constant 0 : index
      %c0_13 = arith.constant 0 : index
      %13 = vector.load %arg5[%c0_12, %c0_13] : memref<1x128xf32, #tpu.memory_space<vmem>>, vector<1x128xf32>
      %14 = vector.broadcast %13 : vector<1x128xf32> to vector<256x128xf32>
      %15 = arith.addf %12, %14 : vector<256x128xf32>
      %cst_14 = arith.constant 0.000000e+00 : f32
      %16 = vector.broadcast %cst_14 : f32 to vector<256x128xf32>
      %17 = arith.cmpf oge, %15, %16 : vector<256x128xf32>
      %cst_15 = arith.constant 2.000000e-01 : f32
      %18 = vector.broadcast %cst_15 : f32 to vector<256x128xf32>
      %19 = arith.mulf %18, %15 : vector<256x128xf32>
      %20 = arith.select %17, %15, %19 : vector<256x128xi1>, vector<256x128xf32>
      %c0_16 = arith.constant 0 : index
      %c0_17 = arith.constant 0 : index
      %21 = vector.load %arg6[%c0_16, %c0_17] : memref<256x128xf32, #tpu.memory_space<vmem>>, vector<256x128xf32>
      tpu.vector_store %arg6[%c0_16, %c0_17], %20 {strides = array<i32>} : memref<256x128xf32, #tpu.memory_space<vmem>>, vector<256x128xf32>,
    } else {
    }
    return
  }
  func.func @transform_0(%arg0: i32, %arg1: i32, %arg2: i32) -> (i32, i32) {
    %c0_i32 = arith.constant 0 : i32
    return %arg0, %arg2 : i32, i32
  }
  func.func @transform_1(%arg0: i32, %arg1: i32, %arg2: i32) -> (i32, i32) {
    %c0_i32 = arith.constant 0 : i32
    return %arg2, %arg1 : i32, i32
  }
  func.func @transform_2(%arg0: i32, %arg1: i32, %arg2: i32) -> (i32, i32) {
    %c0_i32 = arith.constant 0 : i32
    %c0_i32_0 = arith.constant 0 : i32
    return %c0_i32, %arg1 : i32, i32
  }
  func.func @transform_3(%arg0: i32, %arg1: i32, %arg2: i32) -> (i32, i32) {
    %c0_i32 = arith.constant 0 : i32
    return %arg0, %arg1 : i32, i32
  }
}

module attributes {stable_mosaic.version = 11 : i64} {
  func.func @_affine_leaky_kernel(%arg0: i32, %arg1: memref<128x128xf32, #tpu.memory_space<vmem>>, %arg2: memref<1x128xf32, #tpu.memory_space<vmem>>, %arg3: memref<1x128xf32, #tpu.memory_space<vmem>>, %arg4: memref<128x128xf32, #tpu.memory_space<vmem>>) attributes {dimension_semantics = [#tpu.dimension_semantics<parallel>], iteration_bounds = array<i64: 1>, scalar_prefetch = 0 : i64, scratch_operands = 0 : i64, tpu.core_type = #tpu.core_type<tc>, window_params = [{transform_indices = @transform_0, window_bounds = array<i64: 128, 128>}, {pipeline_mode = #tpu.pipeline_mode<synchronous>, transform_indices = @transform_1, window_bounds = array<i64: 1, 128>}, {pipeline_mode = #tpu.pipeline_mode<synchronous>, transform_indices = @transform_2, window_bounds = array<i64: 1, 128>}, {transform_indices = @transform_3, window_bounds = array<i64: 128, 128>}]} {
    %c0 = arith.constant 0 : index
    %c0_0 = arith.constant 0 : index
    %0 = vector.load %arg1[%c0, %c0_0] : memref<128x128xf32, #tpu.memory_space<vmem>>, vector<128x128xf32>
    %c0_1 = arith.constant 0 : index
    %c0_2 = arith.constant 0 : index
    %1 = vector.load %arg2[%c0_1, %c0_2] : memref<1x128xf32, #tpu.memory_space<vmem>>, vector<1x128xf32>
    %2 = vector.broadcast %1 : vector<1x128xf32> to vector<128x128xf32>
    %3 = arith.mulf %0, %2 : vector<128x128xf32>
    %c0_3 = arith.constant 0 : index
    %c0_4 = arith.constant 0 : index
    %4 = vector.load %arg3[%c0_3, %c0_4] : memref<1x128xf32, #tpu.memory_space<vmem>>, vector<1x128xf32>
    %5 = vector.broadcast %4 : vector<1x128xf32> to vector<128x128xf32>
    %6 = arith.addf %3, %5 : vector<128x128xf32>
    %cst = arith.constant 0.000000e+00 : f32
    %7 = vector.broadcast %cst : f32 to vector<128x128xf32>
    %8 = arith.cmpf oge, %6, %7 : vector<128x128xf32>
    %cst_5 = arith.constant 2.000000e-01 : f32
    %9 = vector.broadcast %cst_5 : f32 to vector<128x128xf32>
    %10 = arith.mulf %9, %6 : vector<128x128xf32>
    %11 = arith.select %8, %6, %10 : vector<128x128xi1>, vector<128x128xf32>
    %c0_6 = arith.constant 0 : index
    %c0_7 = arith.constant 0 : index
    %12 = vector.load %arg4[%c0_6, %c0_7] : memref<128x128xf32, #tpu.memory_space<vmem>>, vector<128x128xf32>
    tpu.vector_store %arg4[%c0_6, %c0_7], %11 {strides = array<i32>} : memref<128x128xf32, #tpu.memory_space<vmem>>, vector<128x128xf32>,
    return
  }
  func.func @transform_0(%arg0: i32) -> (i32, i32) {
    %c0_i32 = arith.constant 0 : i32
    %c0_i32_0 = arith.constant 0 : i32
    return %arg0, %c0_i32 : i32, i32
  }
  func.func @transform_1(%arg0: i32) -> (i32, i32) {
    %c0_i32 = arith.constant 0 : i32
    %c0_i32_0 = arith.constant 0 : i32
    %c0_i32_1 = arith.constant 0 : i32
    return %c0_i32, %c0_i32_0 : i32, i32
  }
  func.func @transform_2(%arg0: i32) -> (i32, i32) {
    %c0_i32 = arith.constant 0 : i32
    %c0_i32_0 = arith.constant 0 : i32
    %c0_i32_1 = arith.constant 0 : i32
    return %c0_i32, %c0_i32_0 : i32, i32
  }
  func.func @transform_3(%arg0: i32) -> (i32, i32) {
    %c0_i32 = arith.constant 0 : i32
    %c0_i32_0 = arith.constant 0 : i32
    return %arg0, %c0_i32 : i32, i32
  }
}

module attributes {stable_mosaic.version = 11 : i64} {
  func.func @_gemm_stats_kernel(%arg0: i32, %arg1: i32, %arg2: i32, %arg3: memref<128x512xbf16, #tpu.memory_space<vmem>>, %arg4: memref<512x128xbf16, #tpu.memory_space<vmem>>, %arg5: memref<128x128xf32, #tpu.memory_space<vmem>>, %arg6: memref<8x128xf32, #tpu.memory_space<vmem>>, %arg7: memref<8x128xf32, #tpu.memory_space<vmem>>) attributes {dimension_semantics = [#tpu.dimension_semantics<parallel>, #tpu.dimension_semantics<parallel>, #tpu.dimension_semantics<arbitrary>], iteration_bounds = array<i64: 1, 1, 2>, scalar_prefetch = 0 : i64, scratch_operands = 0 : i64, tpu.core_type = #tpu.core_type<tc>, window_params = [{transform_indices = @transform_0, window_bounds = array<i64: 128, 512>}, {transform_indices = @transform_1, window_bounds = array<i64: 512, 128>}, {transform_indices = @transform_2, window_bounds = array<i64: 128, 128>}, {transform_indices = @transform_3, window_bounds = array<i64: 8, 128>}, {transform_indices = @transform_4, window_bounds = array<i64: 8, 128>}]} {
    %c0_i32 = arith.constant 0 : i32
    %0 = arith.cmpi eq, %arg2, %c0_i32 : i32
    %1 = arith.extui %0 : i1 to i32
    %c0_i32_0 = arith.constant 0 : i32
    %2 = arith.cmpi ne, %1, %c0_i32_0 : i32
    scf.if %2 {
      %cst_9 = arith.constant 0.000000e+00 : f32
      %12 = vector.broadcast %cst_9 : f32 to vector<128x128xf32>
      %c0_10 = arith.constant 0 : index
      %c0_11 = arith.constant 0 : index
      %13 = vector.load %arg5[%c0_10, %c0_11] : memref<128x128xf32, #tpu.memory_space<vmem>>, vector<128x128xf32>
      tpu.vector_store %arg5[%c0_10, %c0_11], %12 {strides = array<i32>} : memref<128x128xf32, #tpu.memory_space<vmem>>, vector<128x128xf32>,
    } else {
    }
    %c0 = arith.constant 0 : index
    %c0_1 = arith.constant 0 : index
    %3 = vector.load %arg5[%c0, %c0_1] : memref<128x128xf32, #tpu.memory_space<vmem>>, vector<128x128xf32>
    %c0_2 = arith.constant 0 : index
    %c0_3 = arith.constant 0 : index
    %4 = vector.load %arg3[%c0_2, %c0_3] : memref<128x512xbf16, #tpu.memory_space<vmem>>, vector<128x512xbf16>
    %c0_4 = arith.constant 0 : index
    %c0_5 = arith.constant 0 : index
    %5 = vector.load %arg4[%c0_4, %c0_5] : memref<512x128xbf16, #tpu.memory_space<vmem>>, vector<512x128xbf16>
    %cst = arith.constant dense<0.000000e+00> : vector<128x128xf32>
    %6 = tpu.matmul %4, %5, %cst {dimension_numbers = #tpu.dot_dimension_numbers<[1], [0], [0], [1], [0, 0, 1, 1], [], []>} : vector<128x512xbf16>, vector<512x128xbf16>, vector<128x128xf32> -> vector<128x128xf32>
    %7 = arith.addf %3, %6 : vector<128x128xf32>
    %c0_6 = arith.constant 0 : index
    %c0_7 = arith.constant 0 : index
    %8 = vector.load %arg5[%c0_6, %c0_7] : memref<128x128xf32, #tpu.memory_space<vmem>>, vector<128x128xf32>
    tpu.vector_store %arg5[%c0_6, %c0_7], %7 {strides = array<i32>} : memref<128x128xf32, #tpu.memory_space<vmem>>, vector<128x128xf32>,
    %c1_i32 = arith.constant 1 : i32
    %9 = arith.cmpi eq, %arg2, %c1_i32 : i32
    %10 = arith.extui %9 : i1 to i32
    %c0_i32_8 = arith.constant 0 : i32
    %11 = arith.cmpi ne, %10, %c0_i32_8 : i32
    scf.if %11 {
      %c0_9 = arith.constant 0 : index
      %c0_10 = arith.constant 0 : index
      %12 = vector.load %arg5[%c0_9, %c0_10] : memref<128x128xf32, #tpu.memory_space<vmem>>, vector<128x128xf32>
      %cst_11 = arith.constant dense<0.000000e+00> : vector<128xf32>
      %13 = vector.multi_reduction <add>, %12, %cst_11 [0] : vector<128x128xf32> to vector<128xf32>
      %14 = vector.shape_cast %13 : vector<128xf32> to vector<1x128xf32>
      %15 = arith.mulf %12, %12 : vector<128x128xf32>
      %cst_12 = arith.constant dense<0.000000e+00> : vector<128xf32>
      %16 = vector.multi_reduction <add>, %15, %cst_12 [0] : vector<128x128xf32> to vector<128xf32>
      %17 = vector.shape_cast %16 : vector<128xf32> to vector<1x128xf32>
      %18 = vector.shape_cast %14 : vector<1x128xf32> to vector<1x128xf32>
      %19 = vector.broadcast %18 : vector<1x128xf32> to vector<8x128xf32>
      %c0_13 = arith.constant 0 : index
      %c0_14 = arith.constant 0 : index
      %20 = vector.load %arg6[%c0_13, %c0_14] : memref<8x128xf32, #tpu.memory_space<vmem>>, vector<8x128xf32>
      tpu.vector_store %arg6[%c0_13, %c0_14], %19 {strides = array<i32>} : memref<8x128xf32, #tpu.memory_space<vmem>>, vector<8x128xf32>,
      %21 = vector.shape_cast %17 : vector<1x128xf32> to vector<1x128xf32>
      %22 = vector.broadcast %21 : vector<1x128xf32> to vector<8x128xf32>
      %c0_15 = arith.constant 0 : index
      %c0_16 = arith.constant 0 : index
      %23 = vector.load %arg7[%c0_15, %c0_16] : memref<8x128xf32, #tpu.memory_space<vmem>>, vector<8x128xf32>
      tpu.vector_store %arg7[%c0_15, %c0_16], %22 {strides = array<i32>} : memref<8x128xf32, #tpu.memory_space<vmem>>, vector<8x128xf32>,
    } else {
    }
    return
  }
  func.func @transform_0(%arg0: i32, %arg1: i32, %arg2: i32) -> (i32, i32) {
    %c0_i32 = arith.constant 0 : i32
    return %arg0, %arg2 : i32, i32
  }
  func.func @transform_1(%arg0: i32, %arg1: i32, %arg2: i32) -> (i32, i32) {
    %c0_i32 = arith.constant 0 : i32
    return %arg2, %arg1 : i32, i32
  }
  func.func @transform_2(%arg0: i32, %arg1: i32, %arg2: i32) -> (i32, i32) {
    %c0_i32 = arith.constant 0 : i32
    return %arg0, %arg1 : i32, i32
  }
  func.func @transform_3(%arg0: i32, %arg1: i32, %arg2: i32) -> (i32, i32) {
    %c0_i32 = arith.constant 0 : i32
    return %arg0, %arg1 : i32, i32
  }
  func.func @transform_4(%arg0: i32, %arg1: i32, %arg2: i32) -> (i32, i32) {
    %c0_i32 = arith.constant 0 : i32
    return %arg0, %arg1 : i32, i32
  }
}

module attributes {stable_mosaic.version = 11 : i64} {
  func.func @_gemm_stats_kernel(%arg0: i32, %arg1: i32, %arg2: i32, %arg3: memref<32x512xbf16, #tpu.memory_space<vmem>>, %arg4: memref<512x256xbf16, #tpu.memory_space<vmem>>, %arg5: memref<32x256xf32, #tpu.memory_space<vmem>>, %arg6: memref<8x256xf32, #tpu.memory_space<vmem>>, %arg7: memref<8x256xf32, #tpu.memory_space<vmem>>) attributes {dimension_semantics = [#tpu.dimension_semantics<parallel>, #tpu.dimension_semantics<parallel>, #tpu.dimension_semantics<arbitrary>], iteration_bounds = array<i64: 1, 1, 4>, scalar_prefetch = 0 : i64, scratch_operands = 0 : i64, tpu.core_type = #tpu.core_type<tc>, window_params = [{transform_indices = @transform_0, window_bounds = array<i64: 32, 512>}, {transform_indices = @transform_1, window_bounds = array<i64: 512, 256>}, {transform_indices = @transform_2, window_bounds = array<i64: 32, 256>}, {transform_indices = @transform_3, window_bounds = array<i64: 8, 256>}, {transform_indices = @transform_4, window_bounds = array<i64: 8, 256>}]} {
    %c0_i32 = arith.constant 0 : i32
    %0 = arith.cmpi eq, %arg2, %c0_i32 : i32
    %1 = arith.extui %0 : i1 to i32
    %c0_i32_0 = arith.constant 0 : i32
    %2 = arith.cmpi ne, %1, %c0_i32_0 : i32
    scf.if %2 {
      %cst_9 = arith.constant 0.000000e+00 : f32
      %12 = vector.broadcast %cst_9 : f32 to vector<32x256xf32>
      %c0_10 = arith.constant 0 : index
      %c0_11 = arith.constant 0 : index
      %13 = vector.load %arg5[%c0_10, %c0_11] : memref<32x256xf32, #tpu.memory_space<vmem>>, vector<32x256xf32>
      tpu.vector_store %arg5[%c0_10, %c0_11], %12 {strides = array<i32>} : memref<32x256xf32, #tpu.memory_space<vmem>>, vector<32x256xf32>,
    } else {
    }
    %c0 = arith.constant 0 : index
    %c0_1 = arith.constant 0 : index
    %3 = vector.load %arg5[%c0, %c0_1] : memref<32x256xf32, #tpu.memory_space<vmem>>, vector<32x256xf32>
    %c0_2 = arith.constant 0 : index
    %c0_3 = arith.constant 0 : index
    %4 = vector.load %arg3[%c0_2, %c0_3] : memref<32x512xbf16, #tpu.memory_space<vmem>>, vector<32x512xbf16>
    %c0_4 = arith.constant 0 : index
    %c0_5 = arith.constant 0 : index
    %5 = vector.load %arg4[%c0_4, %c0_5] : memref<512x256xbf16, #tpu.memory_space<vmem>>, vector<512x256xbf16>
    %cst = arith.constant dense<0.000000e+00> : vector<32x256xf32>
    %6 = tpu.matmul %4, %5, %cst {dimension_numbers = #tpu.dot_dimension_numbers<[1], [0], [0], [1], [0, 0, 1, 1], [], []>} : vector<32x512xbf16>, vector<512x256xbf16>, vector<32x256xf32> -> vector<32x256xf32>
    %7 = arith.addf %3, %6 : vector<32x256xf32>
    %c0_6 = arith.constant 0 : index
    %c0_7 = arith.constant 0 : index
    %8 = vector.load %arg5[%c0_6, %c0_7] : memref<32x256xf32, #tpu.memory_space<vmem>>, vector<32x256xf32>
    tpu.vector_store %arg5[%c0_6, %c0_7], %7 {strides = array<i32>} : memref<32x256xf32, #tpu.memory_space<vmem>>, vector<32x256xf32>,
    %c3_i32 = arith.constant 3 : i32
    %9 = arith.cmpi eq, %arg2, %c3_i32 : i32
    %10 = arith.extui %9 : i1 to i32
    %c0_i32_8 = arith.constant 0 : i32
    %11 = arith.cmpi ne, %10, %c0_i32_8 : i32
    scf.if %11 {
      %c0_9 = arith.constant 0 : index
      %c0_10 = arith.constant 0 : index
      %12 = vector.load %arg5[%c0_9, %c0_10] : memref<32x256xf32, #tpu.memory_space<vmem>>, vector<32x256xf32>
      %cst_11 = arith.constant dense<0.000000e+00> : vector<256xf32>
      %13 = vector.multi_reduction <add>, %12, %cst_11 [0] : vector<32x256xf32> to vector<256xf32>
      %14 = vector.shape_cast %13 : vector<256xf32> to vector<1x256xf32>
      %15 = arith.mulf %12, %12 : vector<32x256xf32>
      %cst_12 = arith.constant dense<0.000000e+00> : vector<256xf32>
      %16 = vector.multi_reduction <add>, %15, %cst_12 [0] : vector<32x256xf32> to vector<256xf32>
      %17 = vector.shape_cast %16 : vector<256xf32> to vector<1x256xf32>
      %18 = vector.shape_cast %14 : vector<1x256xf32> to vector<1x256xf32>
      %19 = vector.broadcast %18 : vector<1x256xf32> to vector<8x256xf32>
      %c0_13 = arith.constant 0 : index
      %c0_14 = arith.constant 0 : index
      %20 = vector.load %arg6[%c0_13, %c0_14] : memref<8x256xf32, #tpu.memory_space<vmem>>, vector<8x256xf32>
      tpu.vector_store %arg6[%c0_13, %c0_14], %19 {strides = array<i32>} : memref<8x256xf32, #tpu.memory_space<vmem>>, vector<8x256xf32>,
      %21 = vector.shape_cast %17 : vector<1x256xf32> to vector<1x256xf32>
      %22 = vector.broadcast %21 : vector<1x256xf32> to vector<8x256xf32>
      %c0_15 = arith.constant 0 : index
      %c0_16 = arith.constant 0 : index
      %23 = vector.load %arg7[%c0_15, %c0_16] : memref<8x256xf32, #tpu.memory_space<vmem>>, vector<8x256xf32>
      tpu.vector_store %arg7[%c0_15, %c0_16], %22 {strides = array<i32>} : memref<8x256xf32, #tpu.memory_space<vmem>>, vector<8x256xf32>,
    } else {
    }
    return
  }
  func.func @transform_0(%arg0: i32, %arg1: i32, %arg2: i32) -> (i32, i32) {
    %c0_i32 = arith.constant 0 : i32
    return %arg0, %arg2 : i32, i32
  }
  func.func @transform_1(%arg0: i32, %arg1: i32, %arg2: i32) -> (i32, i32) {
    %c0_i32 = arith.constant 0 : i32
    return %arg2, %arg1 : i32, i32
  }
  func.func @transform_2(%arg0: i32, %arg1: i32, %arg2: i32) -> (i32, i32) {
    %c0_i32 = arith.constant 0 : i32
    return %arg0, %arg1 : i32, i32
  }
  func.func @transform_3(%arg0: i32, %arg1: i32, %arg2: i32) -> (i32, i32) {
    %c0_i32 = arith.constant 0 : i32
    return %arg0, %arg1 : i32, i32
  }
  func.func @transform_4(%arg0: i32, %arg1: i32, %arg2: i32) -> (i32, i32) {
    %c0_i32 = arith.constant 0 : i32
    return %arg0, %arg1 : i32, i32
  }
}

module attributes {stable_mosaic.version = 11 : i64} {
  func.func @_affine_leaky_kernel(%arg0: i32, %arg1: memref<32x256xf32, #tpu.memory_space<vmem>>, %arg2: memref<1x256xf32, #tpu.memory_space<vmem>>, %arg3: memref<1x256xf32, #tpu.memory_space<vmem>>, %arg4: memref<32x256xf32, #tpu.memory_space<vmem>>) attributes {dimension_semantics = [#tpu.dimension_semantics<parallel>], iteration_bounds = array<i64: 1>, scalar_prefetch = 0 : i64, scratch_operands = 0 : i64, tpu.core_type = #tpu.core_type<tc>, window_params = [{transform_indices = @transform_0, window_bounds = array<i64: 32, 256>}, {pipeline_mode = #tpu.pipeline_mode<synchronous>, transform_indices = @transform_1, window_bounds = array<i64: 1, 256>}, {pipeline_mode = #tpu.pipeline_mode<synchronous>, transform_indices = @transform_2, window_bounds = array<i64: 1, 256>}, {transform_indices = @transform_3, window_bounds = array<i64: 32, 256>}]} {
    %c0 = arith.constant 0 : index
    %c0_0 = arith.constant 0 : index
    %0 = vector.load %arg1[%c0, %c0_0] : memref<32x256xf32, #tpu.memory_space<vmem>>, vector<32x256xf32>
    %c0_1 = arith.constant 0 : index
    %c0_2 = arith.constant 0 : index
    %1 = vector.load %arg2[%c0_1, %c0_2] : memref<1x256xf32, #tpu.memory_space<vmem>>, vector<1x256xf32>
    %2 = vector.broadcast %1 : vector<1x256xf32> to vector<32x256xf32>
    %3 = arith.mulf %0, %2 : vector<32x256xf32>
    %c0_3 = arith.constant 0 : index
    %c0_4 = arith.constant 0 : index
    %4 = vector.load %arg3[%c0_3, %c0_4] : memref<1x256xf32, #tpu.memory_space<vmem>>, vector<1x256xf32>
    %5 = vector.broadcast %4 : vector<1x256xf32> to vector<32x256xf32>
    %6 = arith.addf %3, %5 : vector<32x256xf32>
    %cst = arith.constant 0.000000e+00 : f32
    %7 = vector.broadcast %cst : f32 to vector<32x256xf32>
    %8 = arith.cmpf oge, %6, %7 : vector<32x256xf32>
    %cst_5 = arith.constant 2.000000e-01 : f32
    %9 = vector.broadcast %cst_5 : f32 to vector<32x256xf32>
    %10 = arith.mulf %9, %6 : vector<32x256xf32>
    %11 = arith.select %8, %6, %10 : vector<32x256xi1>, vector<32x256xf32>
    %c0_6 = arith.constant 0 : index
    %c0_7 = arith.constant 0 : index
    %12 = vector.load %arg4[%c0_6, %c0_7] : memref<32x256xf32, #tpu.memory_space<vmem>>, vector<32x256xf32>
    tpu.vector_store %arg4[%c0_6, %c0_7], %11 {strides = array<i32>} : memref<32x256xf32, #tpu.memory_space<vmem>>, vector<32x256xf32>,
    return
  }
  func.func @transform_0(%arg0: i32) -> (i32, i32) {
    %c0_i32 = arith.constant 0 : i32
    %c0_i32_0 = arith.constant 0 : i32
    return %arg0, %c0_i32 : i32, i32
  }
  func.func @transform_1(%arg0: i32) -> (i32, i32) {
    %c0_i32 = arith.constant 0 : i32
    %c0_i32_0 = arith.constant 0 : i32
    %c0_i32_1 = arith.constant 0 : i32
    return %c0_i32, %c0_i32_0 : i32, i32
  }
  func.func @transform_2(%arg0: i32) -> (i32, i32) {
    %c0_i32 = arith.constant 0 : i32
    %c0_i32_0 = arith.constant 0 : i32
    %c0_i32_1 = arith.constant 0 : i32
    return %c0_i32, %c0_i32_0 : i32, i32
  }
  func.func @transform_3(%arg0: i32) -> (i32, i32) {
    %c0_i32 = arith.constant 0 : i32
    %c0_i32_0 = arith.constant 0 : i32
    return %arg0, %c0_i32 : i32, i32
  }
}

module attributes {stable_mosaic.version = 11 : i64} {
  func.func @_gemm_stats_kernel(%arg0: i32, %arg1: i32, %arg2: i32, %arg3: memref<24x512xbf16, #tpu.memory_space<vmem>>, %arg4: memref<512x512xbf16, #tpu.memory_space<vmem>>, %arg5: memref<24x512xf32, #tpu.memory_space<vmem>>, %arg6: memref<8x512xf32, #tpu.memory_space<vmem>>, %arg7: memref<8x512xf32, #tpu.memory_space<vmem>>) attributes {dimension_semantics = [#tpu.dimension_semantics<parallel>, #tpu.dimension_semantics<parallel>, #tpu.dimension_semantics<arbitrary>], iteration_bounds = array<i64: 1, 1, 8>, scalar_prefetch = 0 : i64, scratch_operands = 0 : i64, tpu.core_type = #tpu.core_type<tc>, window_params = [{transform_indices = @transform_0, window_bounds = array<i64: 24, 512>}, {transform_indices = @transform_1, window_bounds = array<i64: 512, 512>}, {transform_indices = @transform_2, window_bounds = array<i64: 24, 512>}, {transform_indices = @transform_3, window_bounds = array<i64: 8, 512>}, {transform_indices = @transform_4, window_bounds = array<i64: 8, 512>}]} {
    %c0_i32 = arith.constant 0 : i32
    %0 = arith.cmpi eq, %arg2, %c0_i32 : i32
    %1 = arith.extui %0 : i1 to i32
    %c0_i32_0 = arith.constant 0 : i32
    %2 = arith.cmpi ne, %1, %c0_i32_0 : i32
    scf.if %2 {
      %cst_9 = arith.constant 0.000000e+00 : f32
      %12 = vector.broadcast %cst_9 : f32 to vector<24x512xf32>
      %c0_10 = arith.constant 0 : index
      %c0_11 = arith.constant 0 : index
      %13 = vector.load %arg5[%c0_10, %c0_11] : memref<24x512xf32, #tpu.memory_space<vmem>>, vector<24x512xf32>
      tpu.vector_store %arg5[%c0_10, %c0_11], %12 {strides = array<i32>} : memref<24x512xf32, #tpu.memory_space<vmem>>, vector<24x512xf32>,
    } else {
    }
    %c0 = arith.constant 0 : index
    %c0_1 = arith.constant 0 : index
    %3 = vector.load %arg5[%c0, %c0_1] : memref<24x512xf32, #tpu.memory_space<vmem>>, vector<24x512xf32>
    %c0_2 = arith.constant 0 : index
    %c0_3 = arith.constant 0 : index
    %4 = vector.load %arg3[%c0_2, %c0_3] : memref<24x512xbf16, #tpu.memory_space<vmem>>, vector<24x512xbf16>
    %c0_4 = arith.constant 0 : index
    %c0_5 = arith.constant 0 : index
    %5 = vector.load %arg4[%c0_4, %c0_5] : memref<512x512xbf16, #tpu.memory_space<vmem>>, vector<512x512xbf16>
    %cst = arith.constant dense<0.000000e+00> : vector<24x512xf32>
    %6 = tpu.matmul %4, %5, %cst {dimension_numbers = #tpu.dot_dimension_numbers<[1], [0], [0], [1], [0, 0, 1, 1], [], []>} : vector<24x512xbf16>, vector<512x512xbf16>, vector<24x512xf32> -> vector<24x512xf32>
    %7 = arith.addf %3, %6 : vector<24x512xf32>
    %c0_6 = arith.constant 0 : index
    %c0_7 = arith.constant 0 : index
    %8 = vector.load %arg5[%c0_6, %c0_7] : memref<24x512xf32, #tpu.memory_space<vmem>>, vector<24x512xf32>
    tpu.vector_store %arg5[%c0_6, %c0_7], %7 {strides = array<i32>} : memref<24x512xf32, #tpu.memory_space<vmem>>, vector<24x512xf32>,
    %c7_i32 = arith.constant 7 : i32
    %9 = arith.cmpi eq, %arg2, %c7_i32 : i32
    %10 = arith.extui %9 : i1 to i32
    %c0_i32_8 = arith.constant 0 : i32
    %11 = arith.cmpi ne, %10, %c0_i32_8 : i32
    scf.if %11 {
      %c0_9 = arith.constant 0 : index
      %c0_10 = arith.constant 0 : index
      %12 = vector.load %arg5[%c0_9, %c0_10] : memref<24x512xf32, #tpu.memory_space<vmem>>, vector<24x512xf32>
      %cst_11 = arith.constant dense<0.000000e+00> : vector<512xf32>
      %13 = vector.multi_reduction <add>, %12, %cst_11 [0] : vector<24x512xf32> to vector<512xf32>
      %14 = vector.shape_cast %13 : vector<512xf32> to vector<1x512xf32>
      %15 = arith.mulf %12, %12 : vector<24x512xf32>
      %cst_12 = arith.constant dense<0.000000e+00> : vector<512xf32>
      %16 = vector.multi_reduction <add>, %15, %cst_12 [0] : vector<24x512xf32> to vector<512xf32>
      %17 = vector.shape_cast %16 : vector<512xf32> to vector<1x512xf32>
      %18 = vector.shape_cast %14 : vector<1x512xf32> to vector<1x512xf32>
      %19 = vector.broadcast %18 : vector<1x512xf32> to vector<8x512xf32>
      %c0_13 = arith.constant 0 : index
      %c0_14 = arith.constant 0 : index
      %20 = vector.load %arg6[%c0_13, %c0_14] : memref<8x512xf32, #tpu.memory_space<vmem>>, vector<8x512xf32>
      tpu.vector_store %arg6[%c0_13, %c0_14], %19 {strides = array<i32>} : memref<8x512xf32, #tpu.memory_space<vmem>>, vector<8x512xf32>,
      %21 = vector.shape_cast %17 : vector<1x512xf32> to vector<1x512xf32>
      %22 = vector.broadcast %21 : vector<1x512xf32> to vector<8x512xf32>
      %c0_15 = arith.constant 0 : index
      %c0_16 = arith.constant 0 : index
      %23 = vector.load %arg7[%c0_15, %c0_16] : memref<8x512xf32, #tpu.memory_space<vmem>>, vector<8x512xf32>
      tpu.vector_store %arg7[%c0_15, %c0_16], %22 {strides = array<i32>} : memref<8x512xf32, #tpu.memory_space<vmem>>, vector<8x512xf32>,
    } else {
    }
    return
  }
  func.func @transform_0(%arg0: i32, %arg1: i32, %arg2: i32) -> (i32, i32) {
    %c0_i32 = arith.constant 0 : i32
    return %arg0, %arg2 : i32, i32
  }
  func.func @transform_1(%arg0: i32, %arg1: i32, %arg2: i32) -> (i32, i32) {
    %c0_i32 = arith.constant 0 : i32
    return %arg2, %arg1 : i32, i32
  }
  func.func @transform_2(%arg0: i32, %arg1: i32, %arg2: i32) -> (i32, i32) {
    %c0_i32 = arith.constant 0 : i32
    return %arg0, %arg1 : i32, i32
  }
  func.func @transform_3(%arg0: i32, %arg1: i32, %arg2: i32) -> (i32, i32) {
    %c0_i32 = arith.constant 0 : i32
    return %arg0, %arg1 : i32, i32
  }
  func.func @transform_4(%arg0: i32, %arg1: i32, %arg2: i32) -> (i32, i32) {
    %c0_i32 = arith.constant 0 : i32
    return %arg0, %arg1 : i32, i32
  }
}

module attributes {stable_mosaic.version = 11 : i64} {
  func.func @_affine_leaky_kernel(%arg0: i32, %arg1: memref<24x512xf32, #tpu.memory_space<vmem>>, %arg2: memref<1x512xf32, #tpu.memory_space<vmem>>, %arg3: memref<1x512xf32, #tpu.memory_space<vmem>>, %arg4: memref<24x512xf32, #tpu.memory_space<vmem>>) attributes {dimension_semantics = [#tpu.dimension_semantics<parallel>], iteration_bounds = array<i64: 1>, scalar_prefetch = 0 : i64, scratch_operands = 0 : i64, tpu.core_type = #tpu.core_type<tc>, window_params = [{transform_indices = @transform_0, window_bounds = array<i64: 24, 512>}, {pipeline_mode = #tpu.pipeline_mode<synchronous>, transform_indices = @transform_1, window_bounds = array<i64: 1, 512>}, {pipeline_mode = #tpu.pipeline_mode<synchronous>, transform_indices = @transform_2, window_bounds = array<i64: 1, 512>}, {transform_indices = @transform_3, window_bounds = array<i64: 24, 512>}]} {
    %c0 = arith.constant 0 : index
    %c0_0 = arith.constant 0 : index
    %0 = vector.load %arg1[%c0, %c0_0] : memref<24x512xf32, #tpu.memory_space<vmem>>, vector<24x512xf32>
    %c0_1 = arith.constant 0 : index
    %c0_2 = arith.constant 0 : index
    %1 = vector.load %arg2[%c0_1, %c0_2] : memref<1x512xf32, #tpu.memory_space<vmem>>, vector<1x512xf32>
    %2 = vector.broadcast %1 : vector<1x512xf32> to vector<24x512xf32>
    %3 = arith.mulf %0, %2 : vector<24x512xf32>
    %c0_3 = arith.constant 0 : index
    %c0_4 = arith.constant 0 : index
    %4 = vector.load %arg3[%c0_3, %c0_4] : memref<1x512xf32, #tpu.memory_space<vmem>>, vector<1x512xf32>
    %5 = vector.broadcast %4 : vector<1x512xf32> to vector<24x512xf32>
    %6 = arith.addf %3, %5 : vector<24x512xf32>
    %cst = arith.constant 0.000000e+00 : f32
    %7 = vector.broadcast %cst : f32 to vector<24x512xf32>
    %8 = arith.cmpf oge, %6, %7 : vector<24x512xf32>
    %cst_5 = arith.constant 2.000000e-01 : f32
    %9 = vector.broadcast %cst_5 : f32 to vector<24x512xf32>
    %10 = arith.mulf %9, %6 : vector<24x512xf32>
    %11 = arith.select %8, %6, %10 : vector<24x512xi1>, vector<24x512xf32>
    %c0_6 = arith.constant 0 : index
    %c0_7 = arith.constant 0 : index
    %12 = vector.load %arg4[%c0_6, %c0_7] : memref<24x512xf32, #tpu.memory_space<vmem>>, vector<24x512xf32>
    tpu.vector_store %arg4[%c0_6, %c0_7], %11 {strides = array<i32>} : memref<24x512xf32, #tpu.memory_space<vmem>>, vector<24x512xf32>,
    return
  }
  func.func @transform_0(%arg0: i32) -> (i32, i32) {
    %c0_i32 = arith.constant 0 : i32
    %c0_i32_0 = arith.constant 0 : i32
    return %arg0, %c0_i32 : i32, i32
  }
  func.func @transform_1(%arg0: i32) -> (i32, i32) {
    %c0_i32 = arith.constant 0 : i32
    %c0_i32_0 = arith.constant 0 : i32
    %c0_i32_1 = arith.constant 0 : i32
    return %c0_i32, %c0_i32_0 : i32, i32
  }
  func.func @transform_2(%arg0: i32) -> (i32, i32) {
    %c0_i32 = arith.constant 0 : i32
    %c0_i32_0 = arith.constant 0 : i32
    %c0_i32_1 = arith.constant 0 : i32
    return %c0_i32, %c0_i32_0 : i32, i32
  }
  func.func @transform_3(%arg0: i32) -> (i32, i32) {
    %c0_i32 = arith.constant 0 : i32
    %c0_i32_0 = arith.constant 0 : i32
    return %arg0, %c0_i32 : i32, i32
  }
}

module attributes {stable_mosaic.version = 11 : i64} {
  func.func @_gemm_bias_leaky_kernel(%arg0: i32, %arg1: i32, %arg2: i32, %arg3: memref<8x512xbf16, #tpu.memory_space<vmem>>, %arg4: memref<512x128xbf16, #tpu.memory_space<vmem>>, %arg5: memref<1x128xf32, #tpu.memory_space<vmem>>, %arg6: memref<8x128xf32, #tpu.memory_space<vmem>>) attributes {dimension_semantics = [#tpu.dimension_semantics<parallel>, #tpu.dimension_semantics<parallel>, #tpu.dimension_semantics<arbitrary>], iteration_bounds = array<i64: 1, 1, 16>, scalar_prefetch = 0 : i64, scratch_operands = 0 : i64, tpu.core_type = #tpu.core_type<tc>, window_params = [{transform_indices = @transform_0, window_bounds = array<i64: 8, 512>}, {transform_indices = @transform_1, window_bounds = array<i64: 512, 128>}, {transform_indices = @transform_2, window_bounds = array<i64: 1, 128>}, {transform_indices = @transform_3, window_bounds = array<i64: 8, 128>}]} {
    %c0_i32 = arith.constant 0 : i32
    %0 = arith.cmpi eq, %arg2, %c0_i32 : i32
    %1 = arith.extui %0 : i1 to i32
    %c0_i32_0 = arith.constant 0 : i32
    %2 = arith.cmpi ne, %1, %c0_i32_0 : i32
    scf.if %2 {
      %cst_9 = arith.constant 0.000000e+00 : f32
      %12 = vector.broadcast %cst_9 : f32 to vector<8x128xf32>
      %c0_10 = arith.constant 0 : index
      %c0_11 = arith.constant 0 : index
      %13 = vector.load %arg6[%c0_10, %c0_11] : memref<8x128xf32, #tpu.memory_space<vmem>>, vector<8x128xf32>
      tpu.vector_store %arg6[%c0_10, %c0_11], %12 {strides = array<i32>} : memref<8x128xf32, #tpu.memory_space<vmem>>, vector<8x128xf32>,
    } else {
    }
    %c0 = arith.constant 0 : index
    %c0_1 = arith.constant 0 : index
    %3 = vector.load %arg6[%c0, %c0_1] : memref<8x128xf32, #tpu.memory_space<vmem>>, vector<8x128xf32>
    %c0_2 = arith.constant 0 : index
    %c0_3 = arith.constant 0 : index
    %4 = vector.load %arg3[%c0_2, %c0_3] : memref<8x512xbf16, #tpu.memory_space<vmem>>, vector<8x512xbf16>
    %c0_4 = arith.constant 0 : index
    %c0_5 = arith.constant 0 : index
    %5 = vector.load %arg4[%c0_4, %c0_5] : memref<512x128xbf16, #tpu.memory_space<vmem>>, vector<512x128xbf16>
    %cst = arith.constant dense<0.000000e+00> : vector<8x128xf32>
    %6 = tpu.matmul %4, %5, %cst {dimension_numbers = #tpu.dot_dimension_numbers<[1], [0], [0], [1], [0, 0, 1, 1], [], []>} : vector<8x512xbf16>, vector<512x128xbf16>, vector<8x128xf32> -> vector<8x128xf32>
    %7 = arith.addf %3, %6 : vector<8x128xf32>
    %c0_6 = arith.constant 0 : index
    %c0_7 = arith.constant 0 : index
    %8 = vector.load %arg6[%c0_6, %c0_7] : memref<8x128xf32, #tpu.memory_space<vmem>>, vector<8x128xf32>
    tpu.vector_store %arg6[%c0_6, %c0_7], %7 {strides = array<i32>} : memref<8x128xf32, #tpu.memory_space<vmem>>, vector<8x128xf32>,
    %c15_i32 = arith.constant 15 : i32
    %9 = arith.cmpi eq, %arg2, %c15_i32 : i32
    %10 = arith.extui %9 : i1 to i32
    %c0_i32_8 = arith.constant 0 : i32
    %11 = arith.cmpi ne, %10, %c0_i32_8 : i32
    scf.if %11 {
      %c0_9 = arith.constant 0 : index
      %c0_10 = arith.constant 0 : index
      %12 = vector.load %arg6[%c0_9, %c0_10] : memref<8x128xf32, #tpu.memory_space<vmem>>, vector<8x128xf32>
      %c0_11 = arith.constant 0 : index
      %c0_12 = arith.constant 0 : index
      %13 = vector.load %arg5[%c0_11, %c0_12] : memref<1x128xf32, #tpu.memory_space<vmem>>, vector<1x128xf32>
      %14 = vector.broadcast %13 : vector<1x128xf32> to vector<8x128xf32>
      %15 = arith.addf %12, %14 : vector<8x128xf32>
      %c0_13 = arith.constant 0 : index
      %c0_14 = arith.constant 0 : index
      %16 = vector.load %arg6[%c0_13, %c0_14] : memref<8x128xf32, #tpu.memory_space<vmem>>, vector<8x128xf32>
      tpu.vector_store %arg6[%c0_13, %c0_14], %15 {strides = array<i32>} : memref<8x128xf32, #tpu.memory_space<vmem>>, vector<8x128xf32>,
    } else {
    }
    return
  }
  func.func @transform_0(%arg0: i32, %arg1: i32, %arg2: i32) -> (i32, i32) {
    %c0_i32 = arith.constant 0 : i32
    return %arg0, %arg2 : i32, i32
  }
  func.func @transform_1(%arg0: i32, %arg1: i32, %arg2: i32) -> (i32, i32) {
    %c0_i32 = arith.constant 0 : i32
    return %arg2, %arg1 : i32, i32
  }
  func.func @transform_2(%arg0: i32, %arg1: i32, %arg2: i32) -> (i32, i32) {
    %c0_i32 = arith.constant 0 : i32
    %c0_i32_0 = arith.constant 0 : i32
    return %c0_i32, %arg1 : i32, i32
  }
  func.func @transform_3(%arg0: i32, %arg1: i32, %arg2: i32) -> (i32, i32) {
    %c0_i32 = arith.constant 0 : i32
    return %arg0, %arg1 : i32, i32
  }
}

</mosaic_0001>

<llo_original>
// kernel: _lambda_.8
$region0: #{_lambda_.8}
  #allocation0 [shape = 'u32[]', space=smem, size = 0x4, offset = 0x4, fixed_abs, tag = 'smem constant byte address 0x4 - core index']
  #allocation1 [shape = 'u32[144,128]{1,0:T(1,128)}', space=vmem, size = 0x12000, scoped, tag = 'internal scratch']
  %s0 = inlined_call_operand.vmem [shape: bf16[512,128], index: 0, kind: input, shape index: {}]
  %s1 = inlined_call_operand.vmem [shape: bf16[128,128], index: 1, kind: input, shape index: {}]
  %s2 = inlined_call_operand.vmem [shape: f32[1,128], index: 2, kind: input, shape index: {}]
  %s3 = inlined_call_operand.vmem [shape: f32[512,128], index: 3, kind: output, shape index: {}]
  %s4 = sld [smem:[#allocation0]]
  $region53: #{_lambda_.8} parent=0
    _
  %s6 = ssub.s32 1, %s4
  %s7 = scalar_select 0, %s6, %s4
  loop: start=0, step=1, limit=4
  $region2: #{_lambda_.8} parent=0 // loop_pre_header
    _
  $region3: #{_lambda_.8} parent=0 // loop_header
    %s9 = sphi 0, %s13
    %p10 = scmp.ge.s32.totalorder %s9, 4
    %s16 = sphi 0, %s35
    %s17 = sphi 0, %s31
    %s18 = sphi 0, %s27
    %s19 = sphi 0, %s16
    %s20 = sphi 0, %s17
    %s21 = sphi 0, %s18
    %s22 = sphi 0, %s19
    %s23 = sphi 0, %s20
    %s24 = sphi 0, %s21
    %s40 = sphi 0, %s42
    %s43 = sphi 0, %s40
    %s44 = sphi 0, %s43
    %s60 = sphi 0, %s44
    %s68 = sphi 0, %s70
    %s71 = sphi 0, %s68
    %s72 = sphi 0, %s71
    %s88 = sphi 0, %s72
    %s94 = sphi 0, %s96
    %s97 = sphi 0, %s94
    %s98 = sphi 0, %s97
    %s114 = sphi 0, %s98
    %s122 = sphi 0, %s124
    %s125 = sphi 0, %s122
    %s126 = sphi 0, %s125
    %s142 = sphi 0, %s126
  $region4: #{_lambda_.8} parent=0 // loop_header_branch
    %12 = sbr.rel (%p10) target = $region8
  $region5: #{_lambda_.8} parent=0 // loop_body
    %s14 = ssub.s32 %s9, 1
    %s15 = ssub.s32 %s9, 2
    %s25 = sadd.s32 1, %s18
    %p26 = scmp.ge.s32.totalorder %s25, 1
    %s27 = scalar_select %p26, 0, %s25
    %s28 = sadd.s32 1, %s17
    %s29 = scalar_select %p26, %s28, %s17
    %p30 = scmp.ge.s32.totalorder %s29, 1
    %s31 = scalar_select %p30, 0, %s29
    %s32 = sadd.s32 1, %s16
    %s33 = scalar_select %p30, %s32, %s16
    %p34 = scmp.ge.s32.totalorder %s33, 2
    %s35 = scalar_select %p34, 0, %s33
    %s36 = ssub.s32 %s16, %s35
    %s37 = ssub.s32 %s18, %s27
    %s38 = sor.u32 %s36, %s37
    %p39 = scmp.eq.s32.totalorder %s38, 0
    %s41 = sadd.s32 %s40, 1
    %s42 = scalar_select %p39, %s40, %s41
    %p45 = pneg %p39
    %p46 = scmp.eq.s32.totalorder %s9, 1
    %p47 = por %p45, %p46
    %p48 = scmp.ne.s32.totalorder %s40, %s43
    %p49 = scmp.eq.s32.totalorder %s9, 0
    %p50 = por %p48, %p49
    %p51 = scmp.ne.s32.totalorder %s40, %s43
    %p52 = scmp.eq.s32.totalorder %s14, 1
    %p53 = por %p51, %p52
    %p54 = scmp.ne.s32.totalorder %s43, %s44
    %p55 = scmp.eq.s32.totalorder %s14, 0
    %p56 = por %p54, %p55
    %p57 = scmp.ne.s32.totalorder %s43, %s44
    %p58 = scmp.eq.s32.totalorder %s15, 1
    %p59 = por %p57, %p58
    %p61 = scmp.ne.s32.totalorder %s44, %s60
    %p62 = scmp.eq.s32.totalorder %s15, 0
    %p63 = por %p61, %p62
    %s64 = ssub.s32 %s18, %s27
    %s65 = ssub.s32 %s17, %s31
    %s66 = sor.u32 %s64, %s65
    %p67 = scmp.eq.s32.totalorder %s66, 0
    %s69 = sadd.s32 %s68, 1
    %s70 = scalar_select %p67, %s68, %s69
    %p73 = pneg %p67
    %p74 = scmp.eq.s32.totalorder %s9, 1
    %p75 = por %p73, %p74
    %p76 = scmp.ne.s32.totalorder %s68, %s71
    %p77 = scmp.eq.s32.totalorder %s9, 0
    %p78 = por %p76, %p77
    %p79 = scmp.ne.s32.totalorder %s68, %s71
    %p80 = scmp.eq.s32.totalorder %s14, 1
    %p81 = por %p79, %p80
    %p82 = scmp.ne.s32.totalorder %s71, %s72
    %p83 = scmp.eq.s32.totalorder %s14, 0
    %p84 = por %p82, %p83
    %p85 = scmp.ne.s32.totalorder %s71, %s72
    %p86 = scmp.eq.s32.totalorder %s15, 1
    %p87 = por %p85, %p86
    %p89 = scmp.ne.s32.totalorder %s72, %s88
    %p90 = scmp.eq.s32.totalorder %s15, 0
    %p91 = por %p89, %p90
    %s92 = ssub.s32 %s17, %s31
    %p93 = scmp.eq.s32.totalorder %s92, 0
    %s95 = sadd.s32 %s94, 1
    %s96 = scalar_select %p93, %s94, %s95
    %p99 = pneg %p93
    %p100 = scmp.eq.s32.totalorder %s9, 1
    %p101 = por %p99, %p100
    %p102 = scmp.ne.s32.totalorder %s94, %s97
    %p103 = scmp.eq.s32.totalorder %s9, 0
    %p104 = por %p102, %p103
    %p105 = scmp.ne.s32.totalorder %s94, %s97
    %p106 = scmp.eq.s32.totalorder %s14, 1
    %p107 = por %p105, %p106
    %p108 = scmp.ne.s32.totalorder %s97, %s98
    %p109 = scmp.eq.s32.totalorder %s14, 0
    %p110 = por %p108, %p109
    %p111 = scmp.ne.s32.totalorder %s97, %s98
    %p112 = scmp.eq.s32.totalorder %s15, 1
    %p113 = por %p111, %p112
    %p115 = scmp.ne.s32.totalorder %s98, %s114
    %p116 = scmp.eq.s32.totalorder %s15, 0
    %p117 = por %p115, %p116
    %s118 = ssub.s32 %s16, %s35
    %s119 = ssub.s32 %s17, %s31
    %s120 = sor.u32 %s118, %s119
    %p121 = scmp.eq.s32.totalorder %s120, 0
    %s123 = sadd.s32 %s122, 1
    %s124 = scalar_select %p121, %s122, %s123
    %p127 = pneg %p121
    %p128 = scmp.eq.s32.totalorder %s9, 1
    %p129 = por %p127, %p128
    %p130 = scmp.ne.s32.totalorder %s122, %s125
    %p131 = scmp.eq.s32.totalorder %s9, 0
    %p132 = por %p130, %p131
    %p133 = scmp.ne.s32.totalorder %s122, %s125
    %p134 = scmp.eq.s32.totalorder %s14, 1
    %p135 = por %p133, %p134
    %p136 = scmp.ne.s32.totalorder %s125, %s126
    %p137 = scmp.eq.s32.totalorder %s14, 0
    %p138 = por %p136, %p137
    %p139 = scmp.ne.s32.totalorder %s125, %s126
    %p140 = scmp.eq.s32.totalorder %s15, 1
    %p141 = por %p139, %p140
    %p143 = scmp.ne.s32.totalorder %s126, %s142
    %p144 = scmp.eq.s32.totalorder %s15, 0
    %p145 = por %p143, %p144
    %p146 = scmp.le.s32.totalorder 1, %s9
    %p147 = scmp.lt.s32.totalorder %s9, 3
    %p148 = pnand %p146, %p147
    %p149 = pneg %p148
    // Predicated region
    $region9: #{_lambda_.8} parent=5 // pred_check
      _
    $region10: #{_lambda_.8} parent=5 // pred_check_branch
      %151 = sbr.rel (%p148) target = $region12
    $region11: #{_lambda_.8} parent=5 // pred_region
      %s152 = ssub.s32 %s9, 1
      // Predicated region
      $region13: #{_lambda_.8} parent=11 // pred_check
        %p153 = pneg %p84
      $region14: #{_lambda_.8} parent=11 // pred_check_branch
        %155 = sbr.rel (%p153) target = $region16
      $region15: #{_lambda_.8} parent=11 // pred_region
        %s156 = smul.u32 16, %s21
        %p157 = scmp.lt.s32.totalorder %s156, 15
        %s158 = scalar_select %p157, %s156, 15
        %p159 = scmp.lt.s32.totalorder %s20, 0
        %s160 = scalar_select %p159, %s20, 0
        %s161 = sadd.s32 %s160, %s158
        %s162 = smul.addr %s161, 4
        %s163 = scalar_lea.vmem %s1, %s162
        %s164 = smul.u32 16, %s21
      $region16: #{_lambda_.8} parent=11 // pred_fallthru
        _
      // Predicated region
      $region17: #{_lambda_.8} parent=11 // pred_check
        %p165 = pneg %p110
      $region18: #{_lambda_.8} parent=11 // pred_check_branch
        %167 = sbr.rel (%p165) target = $region20
      $region19: #{_lambda_.8} parent=11 // pred_region
        %p168 = scmp.lt.s32.totalorder %s20, 0
        %s169 = scalar_select %p168, %s20, 0
        %s170 = scalar_lea.vmem %s2, %s169
      $region20: #{_lambda_.8} parent=11 // pred_fallthru
        _
    $region12: #{_lambda_.8} parent=5 // pred_fallthru
      _
    %p171 = scmp.lt.s32.totalorder %s9, 2
    // Predicated region
    $region21: #{_lambda_.8} parent=5 // pred_check
      %p172 = pneg %p171
    $region22: #{_lambda_.8} parent=5 // pred_check_branch
      %174 = sbr.rel (%p172) target = $region24
    $region23: #{_lambda_.8} parent=5 // pred_region
      // Predicated region
      $region25: #{_lambda_.8} parent=23 // pred_check
        %p175 = pneg %p50
      $region26: #{_lambda_.8} parent=23 // pred_check_branch
        %177 = sbr.rel (%p175) target = $region28
      $region27: #{_lambda_.8} parent=23 // pred_region
        %s178 = smul.u32 32, %s16
        %p179 = scmp.lt.s32.totalorder %s178, 63
        %s180 = scalar_select %p179, %s178, 63
        %p181 = scmp.lt.s32.totalorder %s18, 0
        %s182 = scalar_select %p181, %s18, 0
        %s183 = sadd.s32 %s182, %s180
        %s184 = smul.addr %s183, 4
        %s185 = scalar_lea.vmem %s0, %s184
        %s186 = smul.u32 32, %s16
      $region28: #{_lambda_.8} parent=23 // pred_fallthru
        _
    $region24: #{_lambda_.8} parent=5 // pred_fallthru
      _
    %p187 = scmp.le.s32.totalorder 1, %s9
    %p188 = scmp.lt.s32.totalorder %s9, 3
    %p189 = pnand %p187, %p188
    %p190 = pneg %p189
    // Predicated region
    $region29: #{_lambda_.8} parent=5 // pred_check
      _
    $region30: #{_lambda_.8} parent=5 // pred_check_branch
      %192 = sbr.rel (%p189) target = $region32
    $region31: #{_lambda_.8} parent=5 // pred_region
      %s193 = ssub.s32 %s9, 1
      %s194 = smul.u32 32, %s19
      %p195 = scmp.lt.s32.totalorder %s194, 63
      %s196 = scalar_select %p195, %s194, 63
      %p197 = scmp.lt.s32.totalorder %s21, 0
      %s198 = scalar_select %p197, %s21, 0
      %s199 = sadd.s32 %s198, %s196
      %s200 = smul.addr %s199, 4
      %s201 = scalar_lea.vmem %s0, %s200
      %p202 = pneg %p56
      %p203 = pneg %p53
      %s204 = smul.u32 16, %s21
      %p205 = scmp.lt.s32.totalorder %s204, 15
      %s206 = scalar_select %p205, %s204, 15
      %p207 = scmp.lt.s32.totalorder %s20, 0
      %s208 = scalar_select %p207, %s20, 0
      %s209 = sadd.s32 %s208, %s206
      %s210 = smul.addr %s209, 4
      %s211 = scalar_lea.vmem %s1, %s210
      %p212 = pneg %p84
      %p213 = pneg %p81
      %p214 = scmp.lt.s32.totalorder %s20, 0
      %s215 = scalar_select %p214, %s20, 0
      %s216 = scalar_lea.vmem %s2, %s215
      %p217 = pneg %p110
      %p218 = pneg %p107
      %p219 = pneg %p138
      %p220 = pneg %p135
      %s221 = smul.u32 32, %s19
      %p222 = scmp.lt.s32.totalorder %s221, 63
      %s223 = scalar_select %p222, %s221, 63
      %p224 = scmp.lt.s32.totalorder %s20, 0
      %s225 = scalar_select %p224, %s20, 0
      %s226 = sadd.s32 %s225, %s223
      %s227 = smul.addr %s226, 8
      %s228 = scalar_lea.vmem %s3, %s227
      %s229 = smul.u32 32, %s19
      %p230 = scmp.lt.s32.totalorder %s229, 63
      %s231 = scalar_select %p230, %s229, 63
      %p232 = scmp.lt.s32.totalorder %s21, 0
      %s233 = scalar_select %p232, %s21, 0
      %s234 = sadd.s32 %s233, %s231
      %s235 = smul.addr %s234, 4
      %s236 = scalar_lea.vmem %s0, %s235
      %s237 = smul.u32 32, %s19
      %s238 = smul.u32 16, %s21
      %p239 = scmp.lt.s32.totalorder %s238, 15
      %s240 = scalar_select %p239, %s238, 15
      %p241 = scmp.lt.s32.totalorder %s20, 0
      %s242 = scalar_select %p241, %s20, 0
      %s243 = sadd.s32 %s242, %s240
      %s244 = smul.addr %s243, 4
      %s245 = scalar_lea.vmem %s1, %s244
      %s246 = smul.u32 16, %s21
      %p247 = scmp.lt.s32.totalorder %s20, 0
      %s248 = scalar_select %p247, %s20, 0
      %s249 = scalar_lea.vmem %s2, %s248
      %s250 = smul.u32 32, %s19
      %p251 = scmp.lt.s32.totalorder %s250, 63
      %s252 = scalar_select %p251, %s250, 63
      %p253 = scmp.lt.s32.totalorder %s20, 0
      %s254 = scalar_select %p253, %s20, 0
      %s255 = sadd.s32 %s254, %s252
      %s256 = smul.addr %s255, 8
      %s257 = scalar_lea.vmem %s3, %s256
      %s258 = smul.u32 32, %s19
      %p260 = scmp.eq.s32.totalorder %s21, 0
      // Predicated region
      $region33: #{_lambda_.8} parent=31 // pred_check
        %p261 = pneg %p260
      $region34: #{_lambda_.8} parent=31 // pred_check_branch
        %263 = sbr.rel (%p261) target = $region36
      $region35: #{_lambda_.8} parent=31 // pred_region
        %264 = vst [vmem:[%s257] sm:$0xff] 0.0
        %265 = vst [vmem:[%s257 + $0x8] sm:$0xff] 0.0
        %266 = vst [vmem:[%s257 + $0x10] sm:$0xff] 0.0
        %267 = vst [vmem:[%s257 + $0x18] sm:$0xff] 0.0
        %268 = vst [vmem:[%s257 + $0x20] sm:$0xff] 0.0
        %269 = vst [vmem:[%s257 + $0x28] sm:$0xff] 0.0
        %270 = vst [vmem:[%s257 + $0x30] sm:$0xff] 0.0
        %271 = vst [vmem:[%s257 + $0x38] sm:$0xff] 0.0
        %272 = vst [vmem:[%s257 + $0x40] sm:$0xff] 0.0
        %273 = vst [vmem:[%s257 + $0x48] sm:$0xff] 0.0
        %274 = vst [vmem:[%s257 + $0x50] sm:$0xff] 0.0
        %275 = vst [vmem:[%s257 + $0x58] sm:$0xff] 0.0
        %276 = vst [vmem:[%s257 + $0x60] sm:$0xff] 0.0
        %277 = vst [vmem:[%s257 + $0x68] sm:$0xff] 0.0
        %278 = vst [vmem:[%s257 + $0x70] sm:$0xff] 0.0
        %279 = vst [vmem:[%s257 + $0x78] sm:$0xff] 0.0
        %280 = vst [vmem:[%s257 + $0x80] sm:$0xff] 0.0
        %281 = vst [vmem:[%s257 + $0x88] sm:$0xff] 0.0
        %282 = vst [vmem:[%s257 + $0x90] sm:$0xff] 0.0
        %283 = vst [vmem:[%s257 + $0x98] sm:$0xff] 0.0
        %284 = vst [vmem:[%s257 + $0xa0] sm:$0xff] 0.0
        %285 = vst [vmem:[%s257 + $0xa8] sm:$0xff] 0.0
        %286 = vst [vmem:[%s257 + $0xb0] sm:$0xff] 0.0
        %287 = vst [vmem:[%s257 + $0xb8] sm:$0xff] 0.0
        %288 = vst [vmem:[%s257 + $0xc0] sm:$0xff] 0.0
        %289 = vst [vmem:[%s257 + $0xc8] sm:$0xff] 0.0
        %290 = vst [vmem:[%s257 + $0xd0] sm:$0xff] 0.0
        %291 = vst [vmem:[%s257 + $0xd8] sm:$0xff] 0.0
        %292 = vst [vmem:[%s257 + $0xe0] sm:$0xff] 0.0
        %293 = vst [vmem:[%s257 + $0xe8] sm:$0xff] 0.0
        %294 = vst [vmem:[%s257 + $0xf0] sm:$0xff] 0.0
        %295 = vst [vmem:[%s257 + $0xf8] sm:$0xff] 0.0
      $region36: #{_lambda_.8} parent=31 // pred_fallthru
        _
      %v296 = vld [vmem:[%s257] sm:$0xff]
      %v297 = vld [vmem:[%s257 + $0x8] sm:$0xff]
      %v298 = vld [vmem:[%s257 + $0x10] sm:$0xff]
      %v299 = vld [vmem:[%s257 + $0x18] sm:$0xff]
      %v300 = vld [vmem:[%s257 + $0x20] sm:$0xff]
      %v301 = vld [vmem:[%s257 + $0x28] sm:$0xff]
      %v302 = vld [vmem:[%s257 + $0x30] sm:$0xff]
      %v303 = vld [vmem:[%s257 + $0x38] sm:$0xff]
      %v304 = vld [vmem:[%s257 + $0x40] sm:$0xff]
      %v305 = vld [vmem:[%s257 + $0x48] sm:$0xff]
      %v306 = vld [vmem:[%s257 + $0x50] sm:$0xff]
      %v307 = vld [vmem:[%s257 + $0x58] sm:$0xff]
      %v308 = vld [vmem:[%s257 + $0x60] sm:$0xff]
      %v309 = vld [vmem:[%s257 + $0x68] sm:$0xff]
      %v310 = vld [vmem:[%s257 + $0x70] sm:$0xff]
      %v311 = vld [vmem:[%s257 + $0x78] sm:$0xff]
      %v312 = vld [vmem:[%s257 + $0x80] sm:$0xff]
      %v313 = vld [vmem:[%s257 + $0x88] sm:$0xff]
      %v314 = vld [vmem:[%s257 + $0x90] sm:$0xff]
      %v315 = vld [vmem:[%s257 + $0x98] sm:$0xff]
      %v316 = vld [vmem:[%s257 + $0xa0] sm:$0xff]
      %v317 = vld [vmem:[%s257 + $0xa8] sm:$0xff]
      %v318 = vld [vmem:[%s257 + $0xb0] sm:$0xff]
      %v319 = vld [vmem:[%s257 + $0xb8] sm:$0xff]
      %v320 = vld [vmem:[%s257 + $0xc0] sm:$0xff]
      %v321 = vld [vmem:[%s257 + $0xc8] sm:$0xff]
      %v322 = vld [vmem:[%s257 + $0xd0] sm:$0xff]
      %v323 = vld [vmem:[%s257 + $0xd8] sm:$0xff]
      %v324 = vld [vmem:[%s257 + $0xe0] sm:$0xff]
      %v325 = vld [vmem:[%s257 + $0xe8] sm:$0xff]
      %v326 = vld [vmem:[%s257 + $0xf0] sm:$0xff]
      %v327 = vld [vmem:[%s257 + $0xf8] sm:$0xff]
      %v328 = vld [vmem:[%s236] sm:$0xf]
      %v329 = vld [vmem:[%s236 + $0x4] sm:$0xf]
      %v330 = vld [vmem:[%s236 + $0x8] sm:$0xf]
      %v331 = vld [vmem:[%s236 + $0xc] sm:$0xf]
      %v332 = vld [vmem:[%s236 + $0x10] sm:$0xf]
      %v333 = vld [vmem:[%s236 + $0x14] sm:$0xf]
      %v334 = vld [vmem:[%s236 + $0x18] sm:$0xf]
      %v335 = vld [vmem:[%s236 + $0x1c] sm:$0xf]
      %v336 = vld [vmem:[%s236 + $0x20] sm:$0xf]
      %v337 = vld [vmem:[%s236 + $0x24] sm:$0xf]
      %v338 = vld [vmem:[%s236 + $0x28] sm:$0xf]
      %v339 = vld [vmem:[%s236 + $0x2c] sm:$0xf]
      %v340 = vld [vmem:[%s236 + $0x30] sm:$0xf]
      %v341 = vld [vmem:[%s236 + $0x34] sm:$0xf]
      %v342 = vld [vmem:[%s236 + $0x38] sm:$0xf]
      %v343 = vld [vmem:[%s236 + $0x3c] sm:$0xf]
      %v344 = vld [vmem:[%s236 + $0x40] sm:$0xf]
      %v345 = vld [vmem:[%s236 + $0x44] sm:$0xf]
      %v346 = vld [vmem:[%s236 + $0x48] sm:$0xf]
      %v347 = vld [vmem:[%s236 + $0x4c] sm:$0xf]
      %v348 = vld [vmem:[%s236 + $0x50] sm:$0xf]
      %v349 = vld [vmem:[%s236 + $0x54] sm:$0xf]
      %v350 = vld [vmem:[%s236 + $0x58] sm:$0xf]
      %v351 = vld [vmem:[%s236 + $0x5c] sm:$0xf]
      %v352 = vld [vmem:[%s236 + $0x60] sm:$0xf]
      %v353 = vld [vmem:[%s236 + $0x64] sm:$0xf]
      %v354 = vld [vmem:[%s236 + $0x68] sm:$0xf]
      %v355 = vld [vmem:[%s236 + $0x6c] sm:$0xf]
      %v356 = vld [vmem:[%s236 + $0x70] sm:$0xf]
      %v357 = vld [vmem:[%s236 + $0x74] sm:$0xf]
      %v358 = vld [vmem:[%s236 + $0x78] sm:$0xf]
      %v359 = vld [vmem:[%s236 + $0x7c] sm:$0xf]
      %v360 = vld [vmem:[%s245] sm:$0xf]
      %v361 = vld [vmem:[%s245 + $0x4] sm:$0xf]
      %v362 = vld [vmem:[%s245 + $0x8] sm:$0xf]
      %v363 = vld [vmem:[%s245 + $0xc] sm:$0xf]
      %v364 = vld [vmem:[%s245 + $0x10] sm:$0xf]
      %v365 = vld [vmem:[%s245 + $0x14] sm:$0xf]
      %v366 = vld [vmem:[%s245 + $0x18] sm:$0xf]
      %v367 = vld [vmem:[%s245 + $0x1c] sm:$0xf]
      %v368 = vld [vmem:[%s245 + $0x20] sm:$0xf]
      %v369 = vld [vmem:[%s245 + $0x24] sm:$0xf]
      %v370 = vld [vmem:[%s245 + $0x28] sm:$0xf]
      %v371 = vld [vmem:[%s245 + $0x2c] sm:$0xf]
      %v372 = vld [vmem:[%s245 + $0x30] sm:$0xf]
      %v373 = vld [vmem:[%s245 + $0x34] sm:$0xf]
      %v374 = vld [vmem:[%s245 + $0x38] sm:$0xf]
      %v375 = vld [vmem:[%s245 + $0x3c] sm:$0xf]
      %v408 = vunpack.c.l.b16 %v328
      %v409 = vunpack.c.l.b16 %v329
      %v410 = vunpack.c.l.b16 %v330
      %v411 = vunpack.c.l.b16 %v331
      %v412 = vunpack.c.l.b16 %v332
      %v413 = vunpack.c.l.b16 %v333
      %v414 = vunpack.c.l.b16 %v334
      %v415 = vunpack.c.l.b16 %v335
      %v416 = vunpack.c.l.b16 %v336
      %v417 = vunpack.c.l.b16 %v337
      %v418 = vunpack.c.l.b16 %v338
      %v419 = vunpack.c.l.b16 %v339
      %v420 = vunpack.c.l.b16 %v340
      %v421 = vunpack.c.l.b16 %v341
      %v422 = vunpack.c.l.b16 %v342
      %v423 = vunpack.c.l.b16 %v343
      %v424 = vunpack.c.l.b16 %v344
      %v425 = vunpack.c.l.b16 %v345
      %v426 = vunpack.c.l.b16 %v346
      %v427 = vunpack.c.l.b16 %v347
      %v428 = vunpack.c.l.b16 %v348
      %v429 = vunpack.c.l.b16 %v349
      %v430 = vunpack.c.l.b16 %v350
      %v431 = vunpack.c.l.b16 %v351
      %v432 = vunpack.c.l.b16 %v352
      %v433 = vunpack.c.l.b16 %v353
      %v434 = vunpack.c.l.b16 %v354
      %v435 = vunpack.c.l.b16 %v355
      %v436 = vunpack.c.l.b16 %v356
      %v437 = vunpack.c.l.b16 %v357
      %v438 = vunpack.c.l.b16 %v358
      %v439 = vunpack.c.l.b16 %v359
      %v440 = vpack.c.b16 %v409, %v408
      %v441 = vpack.c.b16 %v411, %v410
      %v442 = vpack.c.b16 %v413, %v412
      %v443 = vpack.c.b16 %v415, %v414
      %v444 = vpack.c.b16 %v417, %v416
      %v445 = vpack.c.b16 %v419, %v418
      %v446 = vpack.c.b16 %v421, %v420
      %v447 = vpack.c.b16 %v423, %v422
      %v448 = vpack.c.b16 %v425, %v424
      %v449 = vpack.c.b16 %v427, %v426
      %v450 = vpack.c.b16 %v429, %v428
      %v451 = vpack.c.b16 %v431, %v430
      %v452 = vpack.c.b16 %v433, %v432
      %v453 = vpack.c.b16 %v435, %v434
      %v454 = vpack.c.b16 %v437, %v436
      %v455 = vpack.c.b16 %v439, %v438
      %v488 = vunpack.c.l.b16 %v360
      %v489 = vunpack.c.l.b16 %v361
      %v490 = vunpack.c.l.b16 %v362
      %v491 = vunpack.c.l.b16 %v363
      %v492 = vunpack.c.l.b16 %v364
      %v493 = vunpack.c.l.b16 %v365
      %v494 = vunpack.c.l.b16 %v366
      %v495 = vunpack.c.l.b16 %v367
      %v496 = vunpack.c.l.b16 %v368
      %v497 = vunpack.c.l.b16 %v369
      %v498 = vunpack.c.l.b16 %v370
      %v499 = vunpack.c.l.b16 %v371
      %v500 = vunpack.c.l.b16 %v372
      %v501 = vunpack.c.l.b16 %v373
      %v502 = vunpack.c.l.b16 %v374
      %v503 = vunpack.c.l.b16 %v375
      %v504 = vpack.c.b16 %v489, %v488
      %v505 = vpack.c.b16 %v491, %v490
      %v506 = vpack.c.b16 %v493, %v492
      %v507 = vpack.c.b16 %v495, %v494
      %v508 = vpack.c.b16 %v497, %v496
      %v509 = vpack.c.b16 %v499, %v498
      %v510 = vpack.c.b16 %v501, %v500
      %v511 = vpack.c.b16 %v503, %v502
      %520 = vmatprep.subr.bf16.mxu0 0
      %521 = vmatpush1.bf16.msra.mxu0 %v504
      %522 = vmatprep.subr.bf16.mxu0 0
      %523 = vmatpush1.bf16.msra.mxu0 %v505
      %524 = vmatprep.subr.bf16.mxu0 0
      %525 = vmatpush1.bf16.msra.mxu0 %v506
      %526 = vmatprep.subr.bf16.mxu0 0
      %527 = vmatpush1.bf16.msra.mxu0 %v507
      %528 = vmatprep.subr.bf16.mxu0 0
      %529 = vmatpush1.bf16.msra.mxu0 %v508
      %530 = vmatprep.subr.bf16.mxu0 0
      %531 = vmatpush1.bf16.msra.mxu0 %v509
      %532 = vmatprep.subr.bf16.mxu0 0
      %533 = vmatpush1.bf16.msra.mxu0 %v510
      %534 = vmatprep.subr.bf16.mxu0 0
      %535 = vmatpush1.bf16.msra.mxu0 %v511
      %536 = vmatprep.subr.bf16.mxu0 0
      %537 = vmatpush1.bf16.msra.mxu0 0
      %538 = vmatprep.subr.bf16.mxu0 0
      %539 = vmatpush1.bf16.msra.mxu0 0
      %540 = vmatprep.subr.bf16.mxu0 0
      %541 = vmatpush1.bf16.msra.mxu0 0
      %542 = vmatprep.subr.bf16.mxu0 0
      %543 = vmatpush1.bf16.msra.mxu0 0
      %544 = vmatprep.subr.bf16.mxu0 0
      %545 = vmatpush1.bf16.msra.mxu0 0
      %546 = vmatprep.subr.bf16.mxu0 0
      %547 = vmatpush1.bf16.msra.mxu0 0
      %548 = vmatprep.subr.bf16.mxu0 0
      %549 = vmatpush1.bf16.msra.mxu0 0
      %550 = vmatprep.subr.bf16.mxu0 0
      %551 = vmatpush1.bf16.msra.mxu0 0
      %552 = vmatprep.mubr.bf16.mxu0 0
      %553 = vmatmul.mubr.bf16.gmra.mrb[0].mxu0 %v440
      %v554 = vpop.f32.mrb[0].mxu0
      %v555 = vadd.f32 0.0, %v554
      %v556 = vpop.f32.mrb[0].mxu0
      %v557 = vpop.f32.mrb[0].mxu0
      %v558 = vadd.f32 0.0, %v557
      %v559 = vpop.f32.mrb[0].mxu0
      %560 = vmatprep.mubr.bf16.mxu0 0
      %561 = vmatmul.mubr.bf16.gmra.mrb[0].mxu0 %v441
      %v562 = vpop.f32.mrb[0].mxu0
      %v563 = vadd.f32 0.0, %v562
      %v564 = vpop.f32.mrb[0].mxu0
      %v565 = vpop.f32.mrb[0].mxu0
      %v566 = vadd.f32 0.0, %v565
      %v567 = vpop.f32.mrb[0].mxu0
      %568 = vmatprep.mubr.bf16.mxu0 0
      %569 = vmatmul.mubr.bf16.gmra.mrb[0].mxu0 %v442
      %v570 = vpop.f32.mrb[0].mxu0
      %v571 = vadd.f32 0.0, %v570
      %v572 = vpop.f32.mrb[0].mxu0
      %v573 = vpop.f32.mrb[0].mxu0
      %v574 = vadd.f32 0.0, %v573
      %v575 = vpop.f32.mrb[0].mxu0
      %576 = vmatprep.mubr.bf16.mxu0 0
      %577 = vmatmul.mubr.bf16.gmra.mrb[0].mxu0 %v443
      %v578 = vpop.f32.mrb[0].mxu0
      %v579 = vadd.f32 0.0, %v578
      %v580 = vpop.f32.mrb[0].mxu0
      %v581 = vpop.f32.mrb[0].mxu0
      %v582 = vadd.f32 0.0, %v581
      %v583 = vpop.f32.mrb[0].mxu0
      %584 = vmatprep.mubr.bf16.mxu0 0
      %585 = vmatmul.mubr.bf16.gmra.mrb[0].mxu0 %v444
      %v586 = vpop.f32.mrb[0].mxu0
      %v587 = vadd.f32 0.0, %v586
      %v588 = vpop.f32.mrb[0].mxu0
      %v589 = vpop.f32.mrb[0].mxu0
      %v590 = vadd.f32 0.0, %v589
      %v591 = vpop.f32.mrb[0].mxu0
      %592 = vmatprep.mubr.bf16.mxu0 0
      %593 = vmatmul.mubr.bf16.gmra.mrb[0].mxu0 %v445
      %v594 = vpop.f32.mrb[0].mxu0
      %v595 = vadd.f32 0.0, %v594
      %v596 = vpop.f32.mrb[0].mxu0
      %v597 = vpop.f32.mrb[0].mxu0
      %v598 = vadd.f32 0.0, %v597
      %v599 = vpop.f32.mrb[0].mxu0
      %600 = vmatprep.mubr.bf16.mxu0 0
      %601 = vmatmul.mubr.bf16.gmra.mrb[0].mxu0 %v446
      %v602 = vpop.f32.mrb[0].mxu0
      %v603 = vadd.f32 0.0, %v602
      %v604 = vpop.f32.mrb[0].mxu0
      %v605 = vpop.f32.mrb[0].mxu0
      %v606 = vadd.f32 0.0, %v605
      %v607 = vpop.f32.mrb[0].mxu0
      %608 = vmatprep.mubr.bf16.mxu0 0
      %609 = vmatmul.mubr.bf16.gmra.mrb[0].mxu0 %v447
      %v610 = vpop.f32.mrb[0].mxu0
      %v611 = vadd.f32 0.0, %v610
      %v612 = vpop.f32.mrb[0].mxu0
      %v613 = vpop.f32.mrb[0].mxu0
      %v614 = vadd.f32 0.0, %v613
      %v615 = vpop.f32.mrb[0].mxu0
      %616 = vmatprep.mubr.bf16.mxu0 0
      %617 = vmatmul.mubr.bf16.gmra.mrb[0].mxu0 %v448
      %v618 = vpop.f32.mrb[0].mxu0
      %v619 = vadd.f32 0.0, %v618
      %v620 = vpop.f32.mrb[0].mxu0
      %v621 = vpop.f32.mrb[0].mxu0
      %v622 = vadd.f32 0.0, %v621
      %v623 = vpop.f32.mrb[0].mxu0
      %624 = vmatprep.mubr.bf16.mxu0 0
      %625 = vmatmul.mubr.bf16.gmra.mrb[0].mxu0 %v449
      %v626 = vpop.f32.mrb[0].mxu0
      %v627 = vadd.f32 0.0, %v626
      %v628 = vpop.f32.mrb[0].mxu0
      %v629 = vpop.f32.mrb[0].mxu0
      %v630 = vadd.f32 0.0, %v629
      %v631 = vpop.f32.mrb[0].mxu0
      %632 = vmatprep.mubr.bf16.mxu0 0
      %633 = vmatmul.mubr.bf16.gmra.mrb[0].mxu0 %v450
      %v634 = vpop.f32.mrb[0].mxu0
      %v635 = vadd.f32 0.0, %v634
      %v636 = vpop.f32.mrb[0].mxu0
      %v637 = vpop.f32.mrb[0].mxu0
      %v638 = vadd.f32 0.0, %v637
      %v639 = vpop.f32.mrb[0].mxu0
      %640 = vmatprep.mubr.bf16.mxu0 0
      %641 = vmatmul.mubr.bf16.gmra.mrb[0].mxu0 %v451
      %v642 = vpop.f32.mrb[0].mxu0
      %v643 = vadd.f32 0.0, %v642
      %v644 = vpop.f32.mrb[0].mxu0
      %v645 = vpop.f32.mrb[0].mxu0
      %v646 = vadd.f32 0.0, %v645
      %v647 = vpop.f32.mrb[0].mxu0
      %648 = vmatprep.mubr.bf16.mxu0 0
      %649 = vmatmul.mubr.bf16.gmra.mrb[0].mxu0 %v452
      %v650 = vpop.f32.mrb[0].mxu0
      %v651 = vadd.f32 0.0, %v650
      %v652 = vpop.f32.mrb[0].mxu0
      %v653 = vpop.f32.mrb[0].mxu0
      %v654 = vadd.f32 0.0, %v653
      %v655 = vpop.f32.mrb[0].mxu0
      %656 = vmatprep.mubr.bf16.mxu0 0
      %657 = vmatmul.mubr.bf16.gmra.mrb[0].mxu0 %v453
      %v658 = vpop.f32.mrb[0].mxu0
      %v659 = vadd.f32 0.0, %v658
      %v660 = vpop.f32.mrb[0].mxu0
      %v661 = vpop.f32.mrb[0].mxu0
      %v662 = vadd.f32 0.0, %v661
      %v663 = vpop.f32.mrb[0].mxu0
      %664 = vmatprep.mubr.bf16.mxu0 0
      %665 = vmatmul.mubr.bf16.gmra.mrb[0].mxu0 %v454
      %v666 = vpop.f32.mrb[0].mxu0
      %v667 = vadd.f32 0.0, %v666
      %v668 = vpop.f32.mrb[0].mxu0
      %v669 = vpop.f32.mrb[0].mxu0
      %v670 = vadd.f32 0.0, %v669
      %v671 = vpop.f32.mrb[0].mxu0
      %672 = vmatprep.mubr.bf16.mxu0 0
      %673 = vmatmul.mubr.bf16.gmra.mrb[0].mxu0 %v455
      %v674 = vpop.f32.mrb[0].mxu0
      %v675 = vadd.f32 0.0, %v674
      %v676 = vpop.f32.mrb[0].mxu0
      %v677 = vpop.f32.mrb[0].mxu0
      %v678 = vadd.f32 0.0, %v677
      %v679 = vpop.f32.mrb[0].mxu0
      %680 = vdwg.mxu0
      %v681 = vadd.f32 %v296, %v555
      %v682 = vadd.f32 %v297, %v558
      %v683 = vadd.f32 %v298, %v563
      %v684 = vadd.f32 %v299, %v566
      %v685 = vadd.f32 %v300, %v571
      %v686 = vadd.f32 %v301, %v574
      %v687 = vadd.f32 %v302, %v579
      %v688 = vadd.f32 %v303, %v582
      %v689 = vadd.f32 %v304, %v587
      %v690 = vadd.f32 %v305, %v590
      %v691 = vadd.f32 %v306, %v595
      %v692 = vadd.f32 %v307, %v598
      %v693 = vadd.f32 %v308, %v603
      %v694 = vadd.f32 %v309, %v606
      %v695 = vadd.f32 %v310, %v611
      %v696 = vadd.f32 %v311, %v614
      %v697 = vadd.f32 %v312, %v619
      %v698 = vadd.f32 %v313, %v622
      %v699 = vadd.f32 %v314, %v627
      %v700 = vadd.f32 %v315, %v630
      %v701 = vadd.f32 %v316, %v635
      %v702 = vadd.f32 %v317, %v638
      %v703 = vadd.f32 %v318, %v643
      %v704 = vadd.f32 %v319, %v646
      %v705 = vadd.f32 %v320, %v651
      %v706 = vadd.f32 %v321, %v654
      %v707 = vadd.f32 %v322, %v659
      %v708 = vadd.f32 %v323, %v662
      %v709 = vadd.f32 %v324, %v667
      %v710 = vadd.f32 %v325, %v670
      %v711 = vadd.f32 %v326, %v675
      %v712 = vadd.f32 %v327, %v678
      %713 = vst [vmem:[%s257] sm:$0xff] %v681
      %714 = vst [vmem:[%s257 + $0x8] sm:$0xff] %v682
      %715 = vst [vmem:[%s257 + $0x10] sm:$0xff] %v683
      %716 = vst [vmem:[%s257 + $0x18] sm:$0xff] %v684
      %717 = vst [vmem:[%s257 + $0x20] sm:$0xff] %v685
      %718 = vst [vmem:[%s257 + $0x28] sm:$0xff] %v686
      %719 = vst [vmem:[%s257 + $0x30] sm:$0xff] %v687
      %720 = vst [vmem:[%s257 + $0x38] sm:$0xff] %v688
      %721 = vst [vmem:[%s257 + $0x40] sm:$0xff] %v689
      %722 = vst [vmem:[%s257 + $0x48] sm:$0xff] %v690
      %723 = vst [vmem:[%s257 + $0x50] sm:$0xff] %v691
      %724 = vst [vmem:[%s257 + $0x58] sm:$0xff] %v692
      %725 = vst [vmem:[%s257 + $0x60] sm:$0xff] %v693
      %726 = vst [vmem:[%s257 + $0x68] sm:$0xff] %v694
      %727 = vst [vmem:[%s257 + $0x70] sm:$0xff] %v695
      %728 = vst [vmem:[%s257 + $0x78] sm:$0xff] %v696
      %729 = vst [vmem:[%s257 + $0x80] sm:$0xff] %v697
      %730 = vst [vmem:[%s257 + $0x88] sm:$0xff] %v698
      %731 = vst [vmem:[%s257 + $0x90] sm:$0xff] %v699
      %732 = vst [vmem:[%s257 + $0x98] sm:$0xff] %v700
      %733 = vst [vmem:[%s257 + $0xa0] sm:$0xff] %v701
      %734 = vst [vmem:[%s257 + $0xa8] sm:$0xff] %v702
      %735 = vst [vmem:[%s257 + $0xb0] sm:$0xff] %v703
      %736 = vst [vmem:[%s257 + $0xb8] sm:$0xff] %v704
      %737 = vst [vmem:[%s257 + $0xc0] sm:$0xff] %v705
      %738 = vst [vmem:[%s257 + $0xc8] sm:$0xff] %v706
      %739 = vst [vmem:[%s257 + $0xd0] sm:$0xff] %v707
      %740 = vst [vmem:[%s257 + $0xd8] sm:$0xff] %v708
      %741 = vst [vmem:[%s257 + $0xe0] sm:$0xff] %v709
      %742 = vst [vmem:[%s257 + $0xe8] sm:$0xff] %v710
      %743 = vst [vmem:[%s257 + $0xf0] sm:$0xff] %v711
      %744 = vst [vmem:[%s257 + $0xf8] sm:$0xff] %v712
      // Predicated region
      $region37: #{_lambda_.8} parent=31 // pred_check
        %p745 = pneg %p260
      $region38: #{_lambda_.8} parent=31 // pred_check_branch
        %747 = sbr.rel (%p745) target = $region40
      $region39: #{_lambda_.8} parent=31 // pred_region
        %v748 = vld [vmem:[%s257] sm:$0xff]
        %v749 = vld [vmem:[%s257 + $0x8] sm:$0xff]
        %v750 = vld [vmem:[%s257 + $0x10] sm:$0xff]
        %v751 = vld [vmem:[%s257 + $0x18] sm:$0xff]
        %v752 = vld [vmem:[%s257 + $0x20] sm:$0xff]
        %v753 = vld [vmem:[%s257 + $0x28] sm:$0xff]
        %v754 = vld [vmem:[%s257 + $0x30] sm:$0xff]
        %v755 = vld [vmem:[%s257 + $0x38] sm:$0xff]
        %v756 = vld [vmem:[%s257 + $0x40] sm:$0xff]
        %v757 = vld [vmem:[%s257 + $0x48] sm:$0xff]
        %v758 = vld [vmem:[%s257 + $0x50] sm:$0xff]
        %v759 = vld [vmem:[%s257 + $0x58] sm:$0xff]
        %v760 = vld [vmem:[%s257 + $0x60] sm:$0xff]
        %v761 = vld [vmem:[%s257 + $0x68] sm:$0xff]
        %v762 = vld [vmem:[%s257 + $0x70] sm:$0xff]
        %v763 = vld [vmem:[%s257 + $0x78] sm:$0xff]
        %v764 = vld [vmem:[%s257 + $0x80] sm:$0xff]
        %v765 = vld [vmem:[%s257 + $0x88] sm:$0xff]
        %v766 = vld [vmem:[%s257 + $0x90] sm:$0xff]
        %v767 = vld [vmem:[%s257 + $0x98] sm:$0xff]
        %v768 = vld [vmem:[%s257 + $0xa0] sm:$0xff]
        %v769 = vld [vmem:[%s257 + $0xa8] sm:$0xff]
        %v770 = vld [vmem:[%s257 + $0xb0] sm:$0xff]
        %v771 = vld [vmem:[%s257 + $0xb8] sm:$0xff]
        %v772 = vld [vmem:[%s257 + $0xc0] sm:$0xff]
        %v773 = vld [vmem:[%s257 + $0xc8] sm:$0xff]
        %v774 = vld [vmem:[%s257 + $0xd0] sm:$0xff]
        %v775 = vld [vmem:[%s257 + $0xd8] sm:$0xff]
        %v776 = vld [vmem:[%s257 + $0xe0] sm:$0xff]
        %v777 = vld [vmem:[%s257 + $0xe8] sm:$0xff]
        %v778 = vld [vmem:[%s257 + $0xf0] sm:$0xff]
        %v779 = vld [vmem:[%s257 + $0xf8] sm:$0xff]
        %v780 = vld [vmem:[%s249] sm:$0x1]
        %v782 = vlaneseq
        %v783 = vshrl.u32 %v782, 7
        %v784 = vsub.s32 0, %v783
        %v785 = vrot.slane %v780, %v784
        %v787 = vadd.f32 %v748, %v785
        %v788 = vadd.f32 %v749, %v785
        %v789 = vadd.f32 %v750, %v785
        %v790 = vadd.f32 %v751, %v785
        %v791 = vadd.f32 %v752, %v785
        %v792 = vadd.f32 %v753, %v785
        %v793 = vadd.f32 %v754, %v785
        %v794 = vadd.f32 %v755, %v785
        %v795 = vadd.f32 %v756, %v785
        %v796 = vadd.f32 %v757, %v785
        %v797 = vadd.f32 %v758, %v785
        %v798 = vadd.f32 %v759, %v785
        %v799 = vadd.f32 %v760, %v785
        %v800 = vadd.f32 %v761, %v785
        %v801 = vadd.f32 %v762, %v785
        %v802 = vadd.f32 %v763, %v785
        %v803 = vadd.f32 %v764, %v785
        %v804 = vadd.f32 %v765, %v785
        %v805 = vadd.f32 %v766, %v785
        %v806 = vadd.f32 %v767, %v785
        %v807 = vadd.f32 %v768, %v785
        %v808 = vadd.f32 %v769, %v785
        %v809 = vadd.f32 %v770, %v785
        %v810 = vadd.f32 %v771, %v785
        %v811 = vadd.f32 %v772, %v785
        %v812 = vadd.f32 %v773, %v785
        %v813 = vadd.f32 %v774, %v785
        %v814 = vadd.f32 %v775, %v785
        %v815 = vadd.f32 %v776, %v785
        %v816 = vadd.f32 %v777, %v785
        %v817 = vadd.f32 %v778, %v785
        %v818 = vadd.f32 %v779, %v785
        %vm819 = vcmp.ge.f32.partialorder %v787, 0.0
        %vm820 = vcmp.ge.f32.partialorder %v788, 0.0
        %vm821 = vcmp.ge.f32.partialorder %v789, 0.0
        %vm822 = vcmp.ge.f32.partialorder %v790, 0.0
        %vm823 = vcmp.ge.f32.partialorder %v791, 0.0
        %vm824 = vcmp.ge.f32.partialorder %v792, 0.0
        %vm825 = vcmp.ge.f32.partialorder %v793, 0.0
        %vm826 = vcmp.ge.f32.partialorder %v794, 0.0
        %vm827 = vcmp.ge.f32.partialorder %v795, 0.0
        %vm828 = vcmp.ge.f32.partialorder %v796, 0.0
        %vm829 = vcmp.ge.f32.partialorder %v797, 0.0
        %vm830 = vcmp.ge.f32.partialorder %v798, 0.0
        %vm831 = vcmp.ge.f32.partialorder %v799, 0.0
        %vm832 = vcmp.ge.f32.partialorder %v800, 0.0
        %vm833 = vcmp.ge.f32.partialorder %v801, 0.0
        %vm834 = vcmp.ge.f32.partialorder %v802, 0.0
        %vm835 = vcmp.ge.f32.partialorder %v803, 0.0
        %vm836 = vcmp.ge.f32.partialorder %v804, 0.0
        %vm837 = vcmp.ge.f32.partialorder %v805, 0.0
        %vm838 = vcmp.ge.f32.partialorder %v806, 0.0
        %vm839 = vcmp.ge.f32.partialorder %v807, 0.0
        %vm840 = vcmp.ge.f32.partialorder %v808, 0.0
        %vm841 = vcmp.ge.f32.partialorder %v809, 0.0
        %vm842 = vcmp.ge.f32.partialorder %v810, 0.0
        %vm843 = vcmp.ge.f32.partialorder %v811, 0.0
        %vm844 = vcmp.ge.f32.partialorder %v812, 0.0
        %vm845 = vcmp.ge.f32.partialorder %v813, 0.0
        %vm846 = vcmp.ge.f32.partialorder %v814, 0.0
        %vm847 = vcmp.ge.f32.partialorder %v815, 0.0
        %vm848 = vcmp.ge.f32.partialorder %v816, 0.0
        %vm849 = vcmp.ge.f32.partialorder %v817, 0.0
        %vm850 = vcmp.ge.f32.partialorder %v818, 0.0
        %v851 = vmul.f32 %v787, 0.2
        %v852 = vmul.f32 %v788, 0.2
        %v853 = vmul.f32 %v789, 0.2
        %v854 = vmul.f32 %v790, 0.2
        %v855 = vmul.f32 %v791, 0.2
        %v856 = vmul.f32 %v792, 0.2
        %v857 = vmul.f32 %v793, 0.2
        %v858 = vmul.f32 %v794, 0.2
        %v859 = vmul.f32 %v795, 0.2
        %v860 = vmul.f32 %v796, 0.2
        %v861 = vmul.f32 %v797, 0.2
        %v862 = vmul.f32 %v798, 0.2
        %v863 = vmul.f32 %v799, 0.2
        %v864 = vmul.f32 %v800, 0.2
        %v865 = vmul.f32 %v801, 0.2
        %v866 = vmul.f32 %v802, 0.2
        %v867 = vmul.f32 %v803, 0.2
        %v868 = vmul.f32 %v804, 0.2
        %v869 = vmul.f32 %v805, 0.2
        %v870 = vmul.f32 %v806, 0.2
        %v871 = vmul.f32 %v807, 0.2
        %v872 = vmul.f32 %v808, 0.2
        %v873 = vmul.f32 %v809, 0.2
        %v874 = vmul.f32 %v810, 0.2
        %v875 = vmul.f32 %v811, 0.2
        %v876 = vmul.f32 %v812, 0.2
        %v877 = vmul.f32 %v813, 0.2
        %v878 = vmul.f32 %v814, 0.2
        %v879 = vmul.f32 %v815, 0.2
        %v880 = vmul.f32 %v816, 0.2
        %v881 = vmul.f32 %v817, 0.2
        %v882 = vmul.f32 %v818, 0.2
        %v883 = vsel %vm819, %v787, %v851
        %v884 = vsel %vm820, %v788, %v852
        %v885 = vsel %vm821, %v789, %v853
        %v886 = vsel %vm822, %v790, %v854
        %v887 = vsel %vm823, %v791, %v855
        %v888 = vsel %vm824, %v792, %v856
        %v889 = vsel %vm825, %v793, %v857
        %v890 = vsel %vm826, %v794, %v858
        %v891 = vsel %vm827, %v795, %v859
        %v892 = vsel %vm828, %v796, %v860
        %v893 = vsel %vm829, %v797, %v861
        %v894 = vsel %vm830, %v798, %v862
        %v895 = vsel %vm831, %v799, %v863
        %v896 = vsel %vm832, %v800, %v864
        %v897 = vsel %vm833, %v801, %v865
        %v898 = vsel %vm834, %v802, %v866
        %v899 = vsel %vm835, %v803, %v867
        %v900 = vsel %vm836, %v804, %v868
        %v901 = vsel %vm837, %v805, %v869
        %v902 = vsel %vm838, %v806, %v870
        %v903 = vsel %vm839, %v807, %v871
        %v904 = vsel %vm840, %v808, %v872
        %v905 = vsel %vm841, %v809, %v873
        %v906 = vsel %vm842, %v810, %v874
        %v907 = vsel %vm843, %v811, %v875
        %v908 = vsel %vm844, %v812, %v876
        %v909 = vsel %vm845, %v813, %v877
        %v910 = vsel %vm846, %v814, %v878
        %v911 = vsel %vm847, %v815, %v879
        %v912 = vsel %vm848, %v816, %v880
        %v913 = vsel %vm849, %v817, %v881
        %v914 = vsel %vm850, %v818, %v882
        %915 = vst [vmem:[%s257] sm:$0xff] %v883
        %916 = vst [vmem:[%s257 + $0x8] sm:$0xff] %v884
        %917 = vst [vmem:[%s257 + $0x10] sm:$0xff] %v885
        %918 = vst [vmem:[%s257 + $0x18] sm:$0xff] %v886
        %919 = vst [vmem:[%s257 + $0x20] sm:$0xff] %v887
        %920 = vst [vmem:[%s257 + $0x28] sm:$0xff] %v888
        %921 = vst [vmem:[%s257 + $0x30] sm:$0xff] %v889
        %922 = vst [vmem:[%s257 + $0x38] sm:$0xff] %v890
        %923 = vst [vmem:[%s257 + $0x40] sm:$0xff] %v891
        %924 = vst [vmem:[%s257 + $0x48] sm:$0xff] %v892
        %925 = vst [vmem:[%s257 + $0x50] sm:$0xff] %v893
        %926 = vst [vmem:[%s257 + $0x58] sm:$0xff] %v894
        %927 = vst [vmem:[%s257 + $0x60] sm:$0xff] %v895
        %928 = vst [vmem:[%s257 + $0x68] sm:$0xff] %v896
        %929 = vst [vmem:[%s257 + $0x70] sm:$0xff] %v897
        %930 = vst [vmem:[%s257 + $0x78] sm:$0xff] %v898
        %931 = vst [vmem:[%s257 + $0x80] sm:$0xff] %v899
        %932 = vst [vmem:[%s257 + $0x88] sm:$0xff] %v900
        %933 = vst [vmem:[%s257 + $0x90] sm:$0xff] %v901
        %934 = vst [vmem:[%s257 + $0x98] sm:$0xff] %v902
        %935 = vst [vmem:[%s257 + $0xa0] sm:$0xff] %v903
        %936 = vst [vmem:[%s257 + $0xa8] sm:$0xff] %v904
        %937 = vst [vmem:[%s257 + $0xb0] sm:$0xff] %v905
        %938 = vst [vmem:[%s257 + $0xb8] sm:$0xff] %v906
        %939 = vst [vmem:[%s257 + $0xc0] sm:$0xff] %v907
        %940 = vst [vmem:[%s257 + $0xc8] sm:$0xff] %v908
        %941 = vst [vmem:[%s257 + $0xd0] sm:$0xff] %v909
        %942 = vst [vmem:[%s257 + $0xd8] sm:$0xff] %v910
        %943 = vst [vmem:[%s257 + $0xe0] sm:$0xff] %v911
        %944 = vst [vmem:[%s257 + $0xe8] sm:$0xff] %v912
        %945 = vst [vmem:[%s257 + $0xf0] sm:$0xff] %v913
        %946 = vst [vmem:[%s257 + $0xf8] sm:$0xff] %v914
      $region40: #{_lambda_.8} parent=31 // pred_fallthru
        _
      %s947 = smul.u32 32, %s19
      %p948 = scmp.lt.s32.totalorder %s947, 63
      %s949 = scalar_select %p948, %s947, 63
      %p950 = scmp.lt.s32.totalorder %s20, 0
      %s951 = scalar_select %p950, %s20, 0
      %s952 = sadd.s32 %s951, %s949
      %s953 = smul.addr %s952, 8
      %s954 = scalar_lea.vmem %s3, %s953
      // Predicated region
      $region41: #{_lambda_.8} parent=31 // pred_check
        %p955 = pneg %p135
      $region42: #{_lambda_.8} parent=31 // pred_check_branch
        %957 = sbr.rel (%p955) target = $region44
      $region43: #{_lambda_.8} parent=31 // pred_region
        %s958 = smul.u32 32, %s19
      $region44: #{_lambda_.8} parent=31 // pred_fallthru
        _
    $region32: #{_lambda_.8} parent=5 // pred_fallthru
      _
    %p959 = scmp.le.s32.totalorder 2, %s9
    // Predicated region
    $region45: #{_lambda_.8} parent=5 // pred_check
      %p960 = pneg %p959
    $region46: #{_lambda_.8} parent=5 // pred_check_branch
      %962 = sbr.rel (%p960) target = $region48
    $region47: #{_lambda_.8} parent=5 // pred_region
      %s963 = ssub.s32 %s9, 2
      // Predicated region
      $region49: #{_lambda_.8} parent=47 // pred_check
        %p964 = pneg %p141
      $region50: #{_lambda_.8} parent=47 // pred_check_branch
        %966 = sbr.rel (%p964) target = $region52
      $region51: #{_lambda_.8} parent=47 // pred_region
        %s967 = smul.u32 32, %s22
        %p968 = scmp.lt.s32.totalorder %s967, 63
        %s969 = scalar_select %p968, %s967, 63
        %p970 = scmp.lt.s32.totalorder %s23, 0
        %s971 = scalar_select %p970, %s23, 0
        %s972 = sadd.s32 %s971, %s969
        %s973 = smul.addr %s972, 8
        %s974 = scalar_lea.vmem %s3, %s973
      $region52: #{_lambda_.8} parent=47 // pred_fallthru
        _
    $region48: #{_lambda_.8} parent=5 // pred_fallthru
      _
  $region6: #{_lambda_.8} parent=0 // loop_footer
    %s13 = sadd.s32 1, %s9
  $region7: #{_lambda_.8} parent=0 // loop_footer_branch
    %8 = sbr.rel target = $region3
  $region8: #{_lambda_.8} parent=0 // loop_exit
    _

// kernel: _lambda_.10
$region0: #{_lambda_.10}
  #allocation0 [shape = 'u32[]', space=smem, size = 0x4, offset = 0x4, fixed_abs, tag = 'smem constant byte address 0x4 - core index']
  #allocation1 [shape = 'u32[144,128]{1,0:T(1,128)}', space=vmem, size = 0x12000, scoped, tag = 'internal scratch']
  %s0 = inlined_call_operand.vmem [shape: f32[128,128], index: 0, kind: input, shape index: {}]
  %s1 = inlined_call_operand.vmem [shape: f32[1,128], index: 1, kind: input, shape index: {}]
  %s2 = inlined_call_operand.vmem [shape: f32[1,128], index: 2, kind: input, shape index: {}]
  %s3 = inlined_call_operand.vmem [shape: f32[128,128], index: 3, kind: output, shape index: {}]
  %s4 = sld [smem:[#allocation0]]
  $region22: #{_lambda_.10} parent=0
    _
  %s6 = ssub.s32 1, %s4
  %s7 = scalar_select 0, %s6, %s4
  // Predicated region
  $region2: #{_lambda_.10} parent=0 // pred_check
    _
  $region3: #{_lambda_.10} parent=0 // pred_check_branch
    %9 = sbr.rel (0) target = $region5
  $region4: #{_lambda_.10} parent=0 // pred_region
    _
  $region5: #{_lambda_.10} parent=0 // pred_fallthru
    _
  // Predicated region
  $region6: #{_lambda_.10} parent=0 // pred_check
    _
  $region7: #{_lambda_.10} parent=0 // pred_check_branch
    %11 = sbr.rel (0) target = $region9
  $region8: #{_lambda_.10} parent=0 // pred_region
    _
  $region9: #{_lambda_.10} parent=0 // pred_fallthru
    _
  // Predicated region
  $region10: #{_lambda_.10} parent=0 // pred_check
    _
  $region11: #{_lambda_.10} parent=0 // pred_check_branch
    %13 = sbr.rel (0) target = $region13
  $region12: #{_lambda_.10} parent=0 // pred_region
    _
  $region13: #{_lambda_.10} parent=0 // pred_fallthru
    _
  %v14 = vld [vmem:[%s0] sm:$0xff]
  %v15 = vld [vmem:[%s0 + $0x8] sm:$0xff]
  %v16 = vld [vmem:[%s0 + $0x10] sm:$0xff]
  %v17 = vld [vmem:[%s0 + $0x18] sm:$0xff]
  %v18 = vld [vmem:[%s0 + $0x20] sm:$0xff]
  %v19 = vld [vmem:[%s0 + $0x28] sm:$0xff]
  %v20 = vld [vmem:[%s0 + $0x30] sm:$0xff]
  %v21 = vld [vmem:[%s0 + $0x38] sm:$0xff]
  %v22 = vld [vmem:[%s0 + $0x40] sm:$0xff]
  %v23 = vld [vmem:[%s0 + $0x48] sm:$0xff]
  %v24 = vld [vmem:[%s0 + $0x50] sm:$0xff]
  %v25 = vld [vmem:[%s0 + $0x58] sm:$0xff]
  %v26 = vld [vmem:[%s0 + $0x60] sm:$0xff]
  %v27 = vld [vmem:[%s0 + $0x68] sm:$0xff]
  %v28 = vld [vmem:[%s0 + $0x70] sm:$0xff]
  %v29 = vld [vmem:[%s0 + $0x78] sm:$0xff]
  %v30 = vld [vmem:[%s1] sm:$0x1]
  %v32 = vlaneseq
  %v33 = vshrl.u32 %v32, 7
  %v34 = vsub.s32 0, %v33
  %v35 = vrot.slane %v30, %v34
  %v37 = vmul.f32 %v14, %v35
  %v38 = vmul.f32 %v15, %v35
  %v39 = vmul.f32 %v16, %v35
  %v40 = vmul.f32 %v17, %v35
  %v41 = vmul.f32 %v18, %v35
  %v42 = vmul.f32 %v19, %v35
  %v43 = vmul.f32 %v20, %v35
  %v44 = vmul.f32 %v21, %v35
  %v45 = vmul.f32 %v22, %v35
  %v46 = vmul.f32 %v23, %v35
  %v47 = vmul.f32 %v24, %v35
  %v48 = vmul.f32 %v25, %v35
  %v49 = vmul.f32 %v26, %v35
  %v50 = vmul.f32 %v27, %v35
  %v51 = vmul.f32 %v28, %v35
  %v52 = vmul.f32 %v29, %v35
  %v53 = vld [vmem:[%s2] sm:$0x1]
  %v55 = vlaneseq
  %v56 = vshrl.u32 %v55, 7
  %v57 = vsub.s32 0, %v56
  %v58 = vrot.slane %v53, %v57
  %v60 = vadd.f32 %v37, %v58
  %v61 = vadd.f32 %v38, %v58
  %v62 = vadd.f32 %v39, %v58
  %v63 = vadd.f32 %v40, %v58
  %v64 = vadd.f32 %v41, %v58
  %v65 = vadd.f32 %v42, %v58
  %v66 = vadd.f32 %v43, %v58
  %v67 = vadd.f32 %v44, %v58
  %v68 = vadd.f32 %v45, %v58
  %v69 = vadd.f32 %v46, %v58
  %v70 = vadd.f32 %v47, %v58
  %v71 = vadd.f32 %v48, %v58
  %v72 = vadd.f32 %v49, %v58
  %v73 = vadd.f32 %v50, %v58
  %v74 = vadd.f32 %v51, %v58
  %v75 = vadd.f32 %v52, %v58
  %vm76 = vcmp.ge.f32.partialorder %v60, 0.0
  %vm77 = vcmp.ge.f32.partialorder %v61, 0.0
  %vm78 = vcmp.ge.f32.partialorder %v62, 0.0
  %vm79 = vcmp.ge.f32.partialorder %v63, 0.0
  %vm80 = vcmp.ge.f32.partialorder %v64, 0.0
  %vm81 = vcmp.ge.f32.partialorder %v65, 0.0
  %vm82 = vcmp.ge.f32.partialorder %v66, 0.0
  %vm83 = vcmp.ge.f32.partialorder %v67, 0.0
  %vm84 = vcmp.ge.f32.partialorder %v68, 0.0
  %vm85 = vcmp.ge.f32.partialorder %v69, 0.0
  %vm86 = vcmp.ge.f32.partialorder %v70, 0.0
  %vm87 = vcmp.ge.f32.partialorder %v71, 0.0
  %vm88 = vcmp.ge.f32.partialorder %v72, 0.0
  %vm89 = vcmp.ge.f32.partialorder %v73, 0.0
  %vm90 = vcmp.ge.f32.partialorder %v74, 0.0
  %vm91 = vcmp.ge.f32.partialorder %v75, 0.0
  %v92 = vmul.f32 %v60, 0.2
  %v93 = vmul.f32 %v61, 0.2
  %v94 = vmul.f32 %v62, 0.2
  %v95 = vmul.f32 %v63, 0.2
  %v96 = vmul.f32 %v64, 0.2
  %v97 = vmul.f32 %v65, 0.2
  %v98 = vmul.f32 %v66, 0.2
  %v99 = vmul.f32 %v67, 0.2
  %v100 = vmul.f32 %v68, 0.2
  %v101 = vmul.f32 %v69, 0.2
  %v102 = vmul.f32 %v70, 0.2
  %v103 = vmul.f32 %v71, 0.2
  %v104 = vmul.f32 %v72, 0.2
  %v105 = vmul.f32 %v73, 0.2
  %v106 = vmul.f32 %v74, 0.2
  %v107 = vmul.f32 %v75, 0.2
  %v108 = vsel %vm76, %v60, %v92
  %v109 = vsel %vm77, %v61, %v93
  %v110 = vsel %vm78, %v62, %v94
  %v111 = vsel %vm79, %v63, %v95
  %v112 = vsel %vm80, %v64, %v96
  %v113 = vsel %vm81, %v65, %v97
  %v114 = vsel %vm82, %v66, %v98
  %v115 = vsel %vm83, %v67, %v99
  %v116 = vsel %vm84, %v68, %v100
  %v117 = vsel %vm85, %v69, %v101
  %v118 = vsel %vm86, %v70, %v102
  %v119 = vsel %vm87, %v71, %v103
  %v120 = vsel %vm88, %v72, %v104
  %v121 = vsel %vm89, %v73, %v105
  %v122 = vsel %vm90, %v74, %v106
  %v123 = vsel %vm91, %v75, %v107
  %124 = vst [vmem:[%s3] sm:$0xff] %v108
  %125 = vst [vmem:[%s3 + $0x8] sm:$0xff] %v109
  %126 = vst [vmem:[%s3 + $0x10] sm:$0xff] %v110
  %127 = vst [vmem:[%s3 + $0x18] sm:$0xff] %v111
  %128 = vst [vmem:[%s3 + $0x20] sm:$0xff] %v112
  %129 = vst [vmem:[%s3 + $0x28] sm:$0xff] %v113
  %130 = vst [vmem:[%s3 + $0x30] sm:$0xff] %v114
  %131 = vst [vmem:[%s3 + $0x38] sm:$0xff] %v115
  %132 = vst [vmem:[%s3 + $0x40] sm:$0xff] %v116
  %133 = vst [vmem:[%s3 + $0x48] sm:$0xff] %v117
  %134 = vst [vmem:[%s3 + $0x50] sm:$0xff] %v118
  %135 = vst [vmem:[%s3 + $0x58] sm:$0xff] %v119
  %136 = vst [vmem:[%s3 + $0x60] sm:$0xff] %v120
  %137 = vst [vmem:[%s3 + $0x68] sm:$0xff] %v121
  %138 = vst [vmem:[%s3 + $0x70] sm:$0xff] %v122
  %139 = vst [vmem:[%s3 + $0x78] sm:$0xff] %v123
  // Predicated region
  $region14: #{_lambda_.10} parent=0 // pred_check
    _
  $region15: #{_lambda_.10} parent=0 // pred_check_branch
    %141 = sbr.rel (0) target = $region17
  $region16: #{_lambda_.10} parent=0 // pred_region
    _
  $region17: #{_lambda_.10} parent=0 // pred_fallthru
    _
  // Predicated region
  $region18: #{_lambda_.10} parent=0 // pred_check
    _
  $region19: #{_lambda_.10} parent=0 // pred_check_branch
    %143 = sbr.rel (0) target = $region21
  $region20: #{_lambda_.10} parent=0 // pred_region
    _
  $region21: #{_lambda_.10} parent=0 // pred_fallthru
    _

// kernel: _lambda_.9
$region0: #{_lambda_.9}
  #allocation0 [shape = 'u32[]', space=smem, size = 0x4, offset = 0x4, fixed_abs, tag = 'smem constant byte address 0x4 - core index']
  #allocation1 [shape = 'u32[144,128]{1,0:T(1,128)}', space=vmem, size = 0x12000, scoped, tag = 'internal scratch']
  %s0 = inlined_call_operand.vmem [shape: bf16[128,1024], index: 0, kind: input, shape index: {}]
  %s1 = inlined_call_operand.vmem [shape: bf16[1024,128], index: 1, kind: input, shape index: {}]
  %s2 = inlined_call_operand.vmem [shape: f32[128,128], index: 2, kind: output, shape index: {0}]
  %s3 = inlined_call_operand.vmem [shape: f32[8,128], index: 3, kind: output, shape index: {1}]
  %s4 = inlined_call_operand.vmem [shape: f32[8,128], index: 4, kind: output, shape index: {2}]
  %5 = xla_tuple %s2, %s3, %s4
  %s6 = sld [smem:[#allocation0]]
  $region88: #{_lambda_.9} parent=0
    _
  %s8 = ssub.s32 1, %s6
  %s9 = scalar_select 0, %s8, %s6
  $region1: #{_lambda_.9} parent=0
    #allocation2 [shape = 'u8[262144]{0}', space=vmem, size = 0x40000, scoped, tag = 'input window, operand 0']
    loop: start=0, step=1, limit=4
    $region2: #{_lambda_.9} parent=1 // loop_pre_header
      _
    $region3: #{_lambda_.9} parent=1 // loop_header
      %s11 = sphi 0, %s15
      %p12 = scmp.ge.s32.totalorder %s11, 4
      %s18 = sphi 0, %s37
      %s19 = sphi 0, %s33
      %s20 = sphi 0, %s29
      %s21 = sphi 0, %s18
      %s22 = sphi 0, %s19
      %s23 = sphi 0, %s20
      %s24 = sphi 0, %s21
      %s25 = sphi 0, %s22
      %s26 = sphi 0, %s23
      %s42 = sphi 0, %s44
      %s45 = sphi 0, %s42
      %s46 = sphi 0, %s45
      %s62 = sphi 0, %s46
      %s70 = sphi 0, %s72
      %s73 = sphi 0, %s70
      %s74 = sphi 0, %s73
      %s90 = sphi 0, %s74
      %s98 = sphi 0, %s100
      %s101 = sphi 0, %s98
      %s102 = sphi 0, %s101
      %s118 = sphi 0, %s102
      %s126 = sphi 0, %s128
      %s129 = sphi 0, %s126
      %s130 = sphi 0, %s129
      %s146 = sphi 0, %s130
      %s154 = sphi 0, %s156
      %s157 = sphi 0, %s154
      %s158 = sphi 0, %s157
      %s174 = sphi 0, %s158
    $region4: #{_lambda_.9} parent=1 // loop_header_branch
      %14 = sbr.rel (%p12) target = $region8
    $region5: #{_lambda_.9} parent=1 // loop_body
      %s16 = ssub.s32 %s11, 1
      %s17 = ssub.s32 %s11, 2
      %s27 = sadd.s32 1, %s20
      %p28 = scmp.ge.s32.totalorder %s27, 2
      %s29 = scalar_select %p28, 0, %s27
      %s30 = sadd.s32 1, %s19
      %s31 = scalar_select %p28, %s30, %s19
      %p32 = scmp.ge.s32.totalorder %s31, 1
      %s33 = scalar_select %p32, 0, %s31
      %s34 = sadd.s32 1, %s18
      %s35 = scalar_select %p32, %s34, %s18
      %p36 = scmp.ge.s32.totalorder %s35, 1
      %s37 = scalar_select %p36, 0, %s35
      %s38 = ssub.s32 %s18, %s37
      %s39 = ssub.s32 %s20, %s29
      %s40 = sor.u32 %s38, %s39
      %p41 = scmp.eq.s32.totalorder %s40, 0
      %s43 = sadd.s32 %s42, 1
      %s44 = scalar_select %p41, %s42, %s43
      %p47 = pneg %p41
      %p48 = scmp.eq.s32.totalorder %s11, 1
      %p49 = por %p47, %p48
      %p50 = scmp.ne.s32.totalorder %s42, %s45
      %p51 = scmp.eq.s32.totalorder %s11, 0
      %p52 = por %p50, %p51
      %p53 = scmp.ne.s32.totalorder %s42, %s45
      %p54 = scmp.eq.s32.totalorder %s16, 1
      %p55 = por %p53, %p54
      %p56 = scmp.ne.s32.totalorder %s45, %s46
      %p57 = scmp.eq.s32.totalorder %s16, 0
      %p58 = por %p56, %p57
      %p59 = scmp.ne.s32.totalorder %s45, %s46
      %p60 = scmp.eq.s32.totalorder %s17, 1
      %p61 = por %p59, %p60
      %p63 = scmp.ne.s32.totalorder %s46, %s62
      %p64 = scmp.eq.s32.totalorder %s17, 0
      %p65 = por %p63, %p64
      %s66 = ssub.s32 %s20, %s29
      %s67 = ssub.s32 %s19, %s33
      %s68 = sor.u32 %s66, %s67
      %p69 = scmp.eq.s32.totalorder %s68, 0
      %s71 = sadd.s32 %s70, 1
      %s72 = scalar_select %p69, %s70, %s71
      %p75 = pneg %p69
      %p76 = scmp.eq.s32.totalorder %s11, 1
      %p77 = por %p75, %p76
      %p78 = scmp.ne.s32.totalorder %s70, %s73
      %p79 = scmp.eq.s32.totalorder %s11, 0
      %p80 = por %p78, %p79
      %p81 = scmp.ne.s32.totalorder %s70, %s73
      %p82 = scmp.eq.s32.totalorder %s16, 1
      %p83 = por %p81, %p82
      %p84 = scmp.ne.s32.totalorder %s73, %s74
      %p85 = scmp.eq.s32.totalorder %s16, 0
      %p86 = por %p84, %p85
      %p87 = scmp.ne.s32.totalorder %s73, %s74
      %p88 = scmp.eq.s32.totalorder %s17, 1
      %p89 = por %p87, %p88
      %p91 = scmp.ne.s32.totalorder %s74, %s90
      %p92 = scmp.eq.s32.totalorder %s17, 0
      %p93 = por %p91, %p92
      %s94 = ssub.s32 %s18, %s37
      %s95 = ssub.s32 %s19, %s33
      %s96 = sor.u32 %s94, %s95
      %p97 = scmp.eq.s32.totalorder %s96, 0
      %s99 = sadd.s32 %s98, 1
      %s100 = scalar_select %p97, %s98, %s99
      %p103 = pneg %p97
      %p104 = scmp.eq.s32.totalorder %s11, 1
      %p105 = por %p103, %p104
      %p106 = scmp.ne.s32.totalorder %s98, %s101
      %p107 = scmp.eq.s32.totalorder %s11, 0
      %p108 = por %p106, %p107
      %p109 = scmp.ne.s32.totalorder %s98, %s101
      %p110 = scmp.eq.s32.totalorder %s16, 1
      %p111 = por %p109, %p110
      %p112 = scmp.ne.s32.totalorder %s101, %s102
      %p113 = scmp.eq.s32.totalorder %s16, 0
      %p114 = por %p112, %p113
      %p115 = scmp.ne.s32.totalorder %s101, %s102
      %p116 = scmp.eq.s32.totalorder %s17, 1
      %p117 = por %p115, %p116
      %p119 = scmp.ne.s32.totalorder %s102, %s118
      %p120 = scmp.eq.s32.totalorder %s17, 0
      %p121 = por %p119, %p120
      %s122 = ssub.s32 %s18, %s37
      %s123 = ssub.s32 %s19, %s33
      %s124 = sor.u32 %s122, %s123
      %p125 = scmp.eq.s32.totalorder %s124, 0
      %s127 = sadd.s32 %s126, 1
      %s128 = scalar_select %p125, %s126, %s127
      %p131 = pneg %p125
      %p132 = scmp.eq.s32.totalorder %s11, 1
      %p133 = por %p131, %p132
      %p134 = scmp.ne.s32.totalorder %s126, %s129
      %p135 = scmp.eq.s32.totalorder %s11, 0
      %p136 = por %p134, %p135
      %p137 = scmp.ne.s32.totalorder %s126, %s129
      %p138 = scmp.eq.s32.totalorder %s16, 1
      %p139 = por %p137, %p138
      %p140 = scmp.ne.s32.totalorder %s129, %s130
      %p141 = scmp.eq.s32.totalorder %s16, 0
      %p142 = por %p140, %p141
      %p143 = scmp.ne.s32.totalorder %s129, %s130
      %p144 = scmp.eq.s32.totalorder %s17, 1
      %p145 = por %p143, %p144
      %p147 = scmp.ne.s32.totalorder %s130, %s146
      %p148 = scmp.eq.s32.totalorder %s17, 0
      %p149 = por %p147, %p148
      %s150 = ssub.s32 %s18, %s37
      %s151 = ssub.s32 %s19, %s33
      %s152 = sor.u32 %s150, %s151
      %p153 = scmp.eq.s32.totalorder %s152, 0
      %s155 = sadd.s32 %s154, 1
      %s156 = scalar_select %p153, %s154, %s155
      %p159 = pneg %p153
      %p160 = scmp.eq.s32.totalorder %s11, 1
      %p161 = por %p159, %p160
      %p162 = scmp.ne.s32.totalorder %s154, %s157
      %p163 = scmp.eq.s32.totalorder %s11, 0
      %p164 = por %p162, %p163
      %p165 = scmp.ne.s32.totalorder %s154, %s157
      %p166 = scmp.eq.s32.totalorder %s16, 1
      %p167 = por %p165, %p166
      %p168 = scmp.ne.s32.totalorder %s157, %s158
      %p169 = scmp.eq.s32.totalorder %s16, 0
      %p170 = por %p168, %p169
      %p171 = scmp.ne.s32.totalorder %s157, %s158
      %p172 = scmp.eq.s32.totalorder %s17, 1
      %p173 = por %p171, %p172
      %p175 = scmp.ne.s32.totalorder %s158, %s174
      %p176 = scmp.eq.s32.totalorder %s17, 0
      %p177 = por %p175, %p176
      %p178 = scmp.le.s32.totalorder 1, %s11
      %p179 = scmp.lt.s32.totalorder %s11, 3
      %p180 = pnand %p178, %p179
      %p181 = pneg %p180
      // Predicated region
      $region9: #{_lambda_.9} parent=5 // pred_check
        _
      $region10: #{_lambda_.9} parent=5 // pred_check_branch
        %183 = sbr.rel (%p180) target = $region12
      $region11: #{_lambda_.9} parent=5 // pred_region
        %s184 = ssub.s32 %s11, 1
      $region12: #{_lambda_.9} parent=5 // pred_fallthru
        _
      %p185 = scmp.lt.s32.totalorder %s11, 2
      // Predicated region
      $region13: #{_lambda_.9} parent=5 // pred_check
        %p186 = pneg %p185
      $region14: #{_lambda_.9} parent=5 // pred_check_branch
        %188 = sbr.rel (%p186) target = $region16
      $region15: #{_lambda_.9} parent=5 // pred_region
        // Predicated region
        $region17: #{_lambda_.9} parent=15 // pred_check
          %p189 = pneg %p52
        $region18: #{_lambda_.9} parent=15 // pred_check_branch
          %191 = sbr.rel (%p189) target = $region20
        $region19: #{_lambda_.9} parent=15 // pred_region
          %s192 = sand.u32 %s42, 1
          %s193 = sand.u32 %s42, 1
          %s194 = smul.addr %s193, 256
          %s195 = scalar_lea.vmem [#allocation2], %s194
          %s196 = smul.u32 16, %s18
          %s197 = smul.u32 4, %s20
          %s198 = smul.addr %s196, 8
          %s199 = sadd.s32 %s197, %s198
          %s200 = smul.addr %s199, 4
          %s201 = scalar_lea.vmem %s0, %s200
          // Predicated region
          $region21: #{_lambda_.9} parent=19 // pred_check
            _
          $region22: #{_lambda_.9} parent=19 // pred_check_branch
            %203 = sbr.rel (0) target = $region24
          $region23: #{_lambda_.9} parent=19 // pred_region
            // Predicated region
            $region25: #{_lambda_.9} parent=23 // pred_check
              _
            $region26: #{_lambda_.9} parent=23 // pred_check_branch
              %205 = sbr.rel (0) target = $region28
            $region27: #{_lambda_.9} parent=23 // pred_region
              loop: start=0, step=1, limit=1
              $region29: #{_lambda_.9} parent=27 // loop_pre_header
                _
              $region30: #{_lambda_.9} parent=27 // loop_header
                %s207 = sphi 0, %s211
                %p208 = scmp.ge.s32.totalorder %s207, 1
                %s212 = sphi %s201, %s201
                %s213 = sphi %s195, %s195
              $region31: #{_lambda_.9} parent=27 // loop_header_branch
                %210 = sbr.rel (%p208) target = $region35
              $region32: #{_lambda_.9} parent=27 // loop_body
                %v214 = vld [vmem:[%s212] sm:$0xff]
                %215 = vst [vmem:[%s213] sm:$0xff] %v214
                %v216 = vld [vmem:[%s212 + $0x8] sm:$0xff]
                %217 = vst [vmem:[%s213 + $0x8] sm:$0xff] %v216
                %v218 = vld [vmem:[%s212 + $0x20] sm:$0xff]
                %219 = vst [vmem:[%s213 + $0x10] sm:$0xff] %v218
                %v220 = vld [vmem:[%s212 + $0x28] sm:$0xff]
                %221 = vst [vmem:[%s213 + $0x18] sm:$0xff] %v220
                %v222 = vld [vmem:[%s212 + $0x40] sm:$0xff]
                %223 = vst [vmem:[%s213 + $0x20] sm:$0xff] %v222
                %v224 = vld [vmem:[%s212 + $0x48] sm:$0xff]
                %225 = vst [vmem:[%s213 + $0x28] sm:$0xff] %v224
                %v226 = vld [vmem:[%s212 + $0x60] sm:$0xff]
                %227 = vst [vmem:[%s213 + $0x30] sm:$0xff] %v226
                %v228 = vld [vmem:[%s212 + $0x68] sm:$0xff]
                %229 = vst [vmem:[%s213 + $0x38] sm:$0xff] %v228
                %v230 = vld [vmem:[%s212 + $0x80] sm:$0xff]
                %231 = vst [vmem:[%s213 + $0x40] sm:$0xff] %v230
                %v232 = vld [vmem:[%s212 + $0x88] sm:$0xff]
                %233 = vst [vmem:[%s213 + $0x48] sm:$0xff] %v232
                %v234 = vld [vmem:[%s212 + $0xa0] sm:$0xff]
                %235 = vst [vmem:[%s213 + $0x50] sm:$0xff] %v234
                %v236 = vld [vmem:[%s212 + $0xa8] sm:$0xff]
                %237 = vst [vmem:[%s213 + $0x58] sm:$0xff] %v236
                %v238 = vld [vmem:[%s212 + $0xc0] sm:$0xff]
                %239 = vst [vmem:[%s213 + $0x60] sm:$0xff] %v238
                %v240 = vld [vmem:[%s212 + $0xc8] sm:$0xff]
                %241 = vst [vmem:[%s213 + $0x68] sm:$0xff] %v240
                %v242 = vld [vmem:[%s212 + $0xe0] sm:$0xff]
                %243 = vst [vmem:[%s213 + $0x70] sm:$0xff] %v242
                %v244 = vld [vmem:[%s212 + $0xe8] sm:$0xff]
                %245 = vst [vmem:[%s213 + $0x78] sm:$0xff] %v244
                %v246 = vld [vmem:[%s212 + $0x100] sm:$0xff]
                %247 = vst [vmem:[%s213 + $0x80] sm:$0xff] %v246
                %v248 = vld [vmem:[%s212 + $0x108] sm:$0xff]
                %249 = vst [vmem:[%s213 + $0x88] sm:$0xff] %v248
                %v250 = vld [vmem:[%s212 + $0x120] sm:$0xff]
                %251 = vst [vmem:[%s213 + $0x90] sm:$0xff] %v250
                %v252 = vld [vmem:[%s212 + $0x128] sm:$0xff]
                %253 = vst [vmem:[%s213 + $0x98] sm:$0xff] %v252
                %v254 = vld [vmem:[%s212 + $0x140] sm:$0xff]
                %255 = vst [vmem:[%s213 + $0xa0] sm:$0xff] %v254
                %v256 = vld [vmem:[%s212 + $0x148] sm:$0xff]
                %257 = vst [vmem:[%s213 + $0xa8] sm:$0xff] %v256
                %v258 = vld [vmem:[%s212 + $0x160] sm:$0xff]
                %259 = vst [vmem:[%s213 + $0xb0] sm:$0xff] %v258
                %v260 = vld [vmem:[%s212 + $0x168] sm:$0xff]
                %261 = vst [vmem:[%s213 + $0xb8] sm:$0xff] %v260
                %v262 = vld [vmem:[%s212 + $0x180] sm:$0xff]
                %263 = vst [vmem:[%s213 + $0xc0] sm:$0xff] %v262
                %v264 = vld [vmem:[%s212 + $0x188] sm:$0xff]
                %265 = vst [vmem:[%s213 + $0xc8] sm:$0xff] %v264
                %v266 = vld [vmem:[%s212 + $0x1a0] sm:$0xff]
                %267 = vst [vmem:[%s213 + $0xd0] sm:$0xff] %v266
                %v268 = vld [vmem:[%s212 + $0x1a8] sm:$0xff]
                %269 = vst [vmem:[%s213 + $0xd8] sm:$0xff] %v268
                %v270 = vld [vmem:[%s212 + $0x1c0] sm:$0xff]
                %271 = vst [vmem:[%s213 + $0xe0] sm:$0xff] %v270
                %v272 = vld [vmem:[%s212 + $0x1c8] sm:$0xff]
                %273 = vst [vmem:[%s213 + $0xe8] sm:$0xff] %v272
                %v274 = vld [vmem:[%s212 + $0x1e0] sm:$0xff]
                %275 = vst [vmem:[%s213 + $0xf0] sm:$0xff] %v274
                %v276 = vld [vmem:[%s212 + $0x1e8] sm:$0xff]
                %277 = vst [vmem:[%s213 + $0xf8] sm:$0xff] %v276
              $region33: #{_lambda_.9} parent=27 // loop_footer
                %s211 = sadd.s32 1, %s207
              $region34: #{_lambda_.9} parent=27 // loop_footer_branch
                %206 = sbr.rel target = $region30
              $region35: #{_lambda_.9} parent=27 // loop_exit
                _
            $region28: #{_lambda_.9} parent=23 // pred_fallthru
              _
            // Predicated region
            $region36: #{_lambda_.9} parent=23 // pred_check
              _
            $region37: #{_lambda_.9} parent=23 // pred_check_branch
              %279 = sbr.rel target = $region39
            $region38: #{_lambda_.9} parent=23 // pred_region
              _
            $region39: #{_lambda_.9} parent=23 // pred_fallthru
              _
          $region24: #{_lambda_.9} parent=19 // pred_fallthru
            _
          %280 = vnop
        $region20: #{_lambda_.9} parent=15 // pred_fallthru
          _
        // Predicated region
        $region40: #{_lambda_.9} parent=15 // pred_check
          %p281 = pneg %p80
        $region41: #{_lambda_.9} parent=15 // pred_check_branch
          %283 = sbr.rel (%p281) target = $region43
        $region42: #{_lambda_.9} parent=15 // pred_region
          %s284 = smul.u32 64, %s20
          %p285 = scmp.lt.s32.totalorder %s284, 127
          %s286 = scalar_select %p285, %s284, 127
          %p287 = scmp.lt.s32.totalorder %s19, 0
          %s288 = scalar_select %p287, %s19, 0
          %s289 = sadd.s32 %s288, %s286
          %s290 = smul.addr %s289, 4
          %s291 = scalar_lea.vmem %s1, %s290
          %s292 = smul.u32 64, %s20
        $region43: #{_lambda_.9} parent=15 // pred_fallthru
          _
      $region16: #{_lambda_.9} parent=5 // pred_fallthru
        _
      %p293 = scmp.le.s32.totalorder 1, %s11
      %p294 = scmp.lt.s32.totalorder %s11, 3
      %p295 = pnand %p293, %p294
      %p296 = pneg %p295
      // Predicated region
      $region44: #{_lambda_.9} parent=5 // pred_check
        _
      $region45: #{_lambda_.9} parent=5 // pred_check_branch
        %298 = sbr.rel (%p295) target = $region47
      $region46: #{_lambda_.9} parent=5 // pred_region
        %s299 = ssub.s32 %s11, 1
        %s300 = sand.u32 %s45, 1
        %s301 = sand.u32 %s45, 1
        %s302 = smul.addr %s301, 256
        %s303 = scalar_lea.vmem [#allocation2], %s302
        // Predicated region
        $region48: #{_lambda_.9} parent=46 // pred_check
          %p304 = pneg %p58
        $region49: #{_lambda_.9} parent=46 // pred_check_branch
          %306 = sbr.rel (%p304) target = $region51
        $region50: #{_lambda_.9} parent=46 // pred_region
          _
        $region51: #{_lambda_.9} parent=46 // pred_fallthru
          _
        %s307 = sand.u32 %s45, 1
        %s308 = sand.u32 %s45, 1
        %s309 = smul.addr %s308, 256
        %s310 = scalar_lea.vmem [#allocation2], %s309
        %p311 = pneg %p58
        %p312 = pneg %p55
        %s313 = smul.u32 64, %s23
        %p314 = scmp.lt.s32.totalorder %s313, 127
        %s315 = scalar_select %p314, %s313, 127
        %p316 = scmp.lt.s32.totalorder %s22, 0
        %s317 = scalar_select %p316, %s22, 0
        %s318 = sadd.s32 %s317, %s315
        %s319 = smul.addr %s318, 4
        %s320 = scalar_lea.vmem %s1, %s319
        %p321 = pneg %p86
        %p322 = pneg %p83
        %p323 = pneg %p114
        %p324 = pneg %p111
        %s325 = smul.u32 16, %s21
        %p326 = scmp.lt.s32.totalorder %s325, 15
        %s327 = scalar_select %p326, %s325, 15
        %p328 = scmp.lt.s32.totalorder %s22, 0
        %s329 = scalar_select %p328, %s22, 0
        %s330 = sadd.s32 %s329, %s327
        %s331 = smul.addr %s330, 8
        %s332 = scalar_lea.vmem %s2, %s331
        %p333 = pneg %p142
        %p334 = pneg %p139
        %p335 = scmp.lt.s32.totalorder %s21, 0
        %s336 = scalar_select %p335, %s21, 0
        %p337 = scmp.lt.s32.totalorder %s22, 0
        %s338 = scalar_select %p337, %s22, 0
        %s339 = sadd.s32 %s338, %s336
        %s340 = smul.addr %s339, 8
        %s341 = scalar_lea.vmem %s3, %s340
        %p342 = pneg %p170
        %p343 = pneg %p167
        %p344 = scmp.lt.s32.totalorder %s21, 0
        %s345 = scalar_select %p344, %s21, 0
        %p346 = scmp.lt.s32.totalorder %s22, 0
        %s347 = scalar_select %p346, %s22, 0
        %s348 = sadd.s32 %s347, %s345
        %s349 = smul.addr %s348, 8
        %s350 = scalar_lea.vmem %s4, %s349
        %s351 = smul.u32 16, %s21
        %s352 = smul.u32 4, %s23
        %s353 = smul.u32 64, %s23
        %p354 = scmp.lt.s32.totalorder %s353, 127
        %s355 = scalar_select %p354, %s353, 127
        %p356 = scmp.lt.s32.totalorder %s22, 0
        %s357 = scalar_select %p356, %s22, 0
        %s358 = sadd.s32 %s357, %s355
        %s359 = smul.addr %s358, 4
        %s360 = scalar_lea.vmem %s1, %s359
        %s361 = smul.u32 64, %s23
        %s362 = smul.u32 16, %s21
        %p363 = scmp.lt.s32.totalorder %s362, 15
        %s364 = scalar_select %p363, %s362, 15
        %p365 = scmp.lt.s32.totalorder %s22, 0
        %s366 = scalar_select %p365, %s22, 0
        %s367 = sadd.s32 %s366, %s364
        %s368 = smul.addr %s367, 8
        %s369 = scalar_lea.vmem %s2, %s368
        %s370 = smul.u32 16, %s21
        %p371 = scmp.lt.s32.totalorder %s21, 0
        %s372 = scalar_select %p371, %s21, 0
        %p373 = scmp.lt.s32.totalorder %s22, 0
        %s374 = scalar_select %p373, %s22, 0
        %s375 = sadd.s32 %s374, %s372
        %s376 = smul.addr %s375, 8
        %s377 = scalar_lea.vmem %s3, %s376
        %p378 = scmp.lt.s32.totalorder %s21, 0
        %s379 = scalar_select %p378, %s21, 0
        %p380 = scmp.lt.s32.totalorder %s22, 0
        %s381 = scalar_select %p380, %s22, 0
        %s382 = sadd.s32 %s381, %s379
        %s383 = smul.addr %s382, 8
        %s384 = scalar_lea.vmem %s4, %s383
        %p386 = scmp.eq.s32.totalorder %s23, 0
        // Predicated region
        $region52: #{_lambda_.9} parent=46 // pred_check
          %p387 = pneg %p386
        $region53: #{_lambda_.9} parent=46 // pred_check_branch
          %389 = sbr.rel (%p387) target = $region55
        $region54: #{_lambda_.9} parent=46 // pred_region
          %390 = vst [vmem:[%s369] sm:$0xff] 0.0
          %391 = vst [vmem:[%s369 + $0x8] sm:$0xff] 0.0
          %392 = vst [vmem:[%s369 + $0x10] sm:$0xff] 0.0
          %393 = vst [vmem:[%s369 + $0x18] sm:$0xff] 0.0
          %394 = vst [vmem:[%s369 + $0x20] sm:$0xff] 0.0
          %395 = vst [vmem:[%s369 + $0x28] sm:$0xff] 0.0
          %396 = vst [vmem:[%s369 + $0x30] sm:$0xff] 0.0
          %397 = vst [vmem:[%s369 + $0x38] sm:$0xff] 0.0
          %398 = vst [vmem:[%s369 + $0x40] sm:$0xff] 0.0
          %399 = vst [vmem:[%s369 + $0x48] sm:$0xff] 0.0
          %400 = vst [vmem:[%s369 + $0x50] sm:$0xff] 0.0
          %401 = vst [vmem:[%s369 + $0x58] sm:$0xff] 0.0
          %402 = vst [vmem:[%s369 + $0x60] sm:$0xff] 0.0
          %403 = vst [vmem:[%s369 + $0x68] sm:$0xff] 0.0
          %404 = vst [vmem:[%s369 + $0x70] sm:$0xff] 0.0
          %405 = vst [vmem:[%s369 + $0x78] sm:$0xff] 0.0
        $region55: #{_lambda_.9} parent=46 // pred_fallthru
          _
        %v406 = vld [vmem:[%s369] sm:$0xff]
        %v407 = vld [vmem:[%s369 + $0x8] sm:$0xff]
        %v408 = vld [vmem:[%s369 + $0x10] sm:$0xff]
        %v409 = vld [vmem:[%s369 + $0x18] sm:$0xff]
        %v410 = vld [vmem:[%s369 + $0x20] sm:$0xff]
        %v411 = vld [vmem:[%s369 + $0x28] sm:$0xff]
        %v412 = vld [vmem:[%s369 + $0x30] sm:$0xff]
        %v413 = vld [vmem:[%s369 + $0x38] sm:$0xff]
        %v414 = vld [vmem:[%s369 + $0x40] sm:$0xff]
        %v415 = vld [vmem:[%s369 + $0x48] sm:$0xff]
        %v416 = vld [vmem:[%s369 + $0x50] sm:$0xff]
        %v417 = vld [vmem:[%s369 + $0x58] sm:$0xff]
        %v418 = vld [vmem:[%s369 + $0x60] sm:$0xff]
        %v419 = vld [vmem:[%s369 + $0x68] sm:$0xff]
        %v420 = vld [vmem:[%s369 + $0x70] sm:$0xff]
        %v421 = vld [vmem:[%s369 + $0x78] sm:$0xff]
        %v422 = vld [vmem:[%s303] sm:$0xff]
        %v423 = vld [vmem:[%s303 + $0x8] sm:$0xff]
        %v424 = vld [vmem:[%s303 + $0x10] sm:$0xff]
        %v425 = vld [vmem:[%s303 + $0x18] sm:$0xff]
        %v426 = vld [vmem:[%s303 + $0x20] sm:$0xff]
        %v427 = vld [vmem:[%s303 + $0x28] sm:$0xff]
        %v428 = vld [vmem:[%s303 + $0x30] sm:$0xff]
        %v429 = vld [vmem:[%s303 + $0x38] sm:$0xff]
        %v430 = vld [vmem:[%s303 + $0x40] sm:$0xff]
        %v431 = vld [vmem:[%s303 + $0x48] sm:$0xff]
        %v432 = vld [vmem:[%s303 + $0x50] sm:$0xff]
        %v433 = vld [vmem:[%s303 + $0x58] sm:$0xff]
        %v434 = vld [vmem:[%s303 + $0x60] sm:$0xff]
        %v435 = vld [vmem:[%s303 + $0x68] sm:$0xff]
        %v436 = vld [vmem:[%s303 + $0x70] sm:$0xff]
        %v437 = vld [vmem:[%s303 + $0x78] sm:$0xff]
        %v438 = vld [vmem:[%s303 + $0x80] sm:$0xff]
        %v439 = vld [vmem:[%s303 + $0x88] sm:$0xff]
        %v440 = vld [vmem:[%s303 + $0x90] sm:$0xff]
        %v441 = vld [vmem:[%s303 + $0x98] sm:$0xff]
        %v442 = vld [vmem:[%s303 + $0xa0] sm:$0xff]
        %v443 = vld [vmem:[%s303 + $0xa8] sm:$0xff]
        %v444 = vld [vmem:[%s303 + $0xb0] sm:$0xff]
        %v445 = vld [vmem:[%s303 + $0xb8] sm:$0xff]
        %v446 = vld [vmem:[%s303 + $0xc0] sm:$0xff]
        %v447 = vld [vmem:[%s303 + $0xc8] sm:$0xff]
        %v448 = vld [vmem:[%s303 + $0xd0] sm:$0xff]
        %v449 = vld [vmem:[%s303 + $0xd8] sm:$0xff]
        %v450 = vld [vmem:[%s303 + $0xe0] sm:$0xff]
        %v451 = vld [vmem:[%s303 + $0xe8] sm:$0xff]
        %v452 = vld [vmem:[%s303 + $0xf0] sm:$0xff]
        %v453 = vld [vmem:[%s303 + $0xf8] sm:$0xff]
        %v454 = vld [vmem:[%s360] sm:$0xf]
        %v455 = vld [vmem:[%s360 + $0x4] sm:$0xf]
        %v456 = vld [vmem:[%s360 + $0x8] sm:$0xf]
        %v457 = vld [vmem:[%s360 + $0xc] sm:$0xf]
        %v458 = vld [vmem:[%s360 + $0x10] sm:$0xf]
        %v459 = vld [vmem:[%s360 + $0x14] sm:$0xf]
        %v460 = vld [vmem:[%s360 + $0x18] sm:$0xf]
        %v461 = vld [vmem:[%s360 + $0x1c] sm:$0xf]
        %v462 = vld [vmem:[%s360 + $0x20] sm:$0xf]
        %v463 = vld [vmem:[%s360 + $0x24] sm:$0xf]
        %v464 = vld [vmem:[%s360 + $0x28] sm:$0xf]
        %v465 = vld [vmem:[%s360 + $0x2c] sm:$0xf]
        %v466 = vld [vmem:[%s360 + $0x30] sm:$0xf]
        %v467 = vld [vmem:[%s360 + $0x34] sm:$0xf]
        %v468 = vld [vmem:[%s360 + $0x38] sm:$0xf]
        %v469 = vld [vmem:[%s360 + $0x3c] sm:$0xf]
        %v470 = vld [vmem:[%s360 + $0x40] sm:$0xf]
        %v471 = vld [vmem:[%s360 + $0x44] sm:$0xf]
        %v472 = vld [vmem:[%s360 + $0x48] sm:$0xf]
        %v473 = vld [vmem:[%s360 + $0x4c] sm:$0xf]
        %v474 = vld [vmem:[%s360 + $0x50] sm:$0xf]
        %v475 = vld [vmem:[%s360 + $0x54] sm:$0xf]
        %v476 = vld [vmem:[%s360 + $0x58] sm:$0xf]
        %v477 = vld [vmem:[%s360 + $0x5c] sm:$0xf]
        %v478 = vld [vmem:[%s360 + $0x60] sm:$0xf]
        %v479 = vld [vmem:[%s360 + $0x64] sm:$0xf]
        %v480 = vld [vmem:[%s360 + $0x68] sm:$0xf]
        %v481 = vld [vmem:[%s360 + $0x6c] sm:$0xf]
        %v482 = vld [vmem:[%s360 + $0x70] sm:$0xf]
        %v483 = vld [vmem:[%s360 + $0x74] sm:$0xf]
        %v484 = vld [vmem:[%s360 + $0x78] sm:$0xf]
        %v485 = vld [vmem:[%s360 + $0x7c] sm:$0xf]
        %v486 = vld [vmem:[%s360 + $0x80] sm:$0xf]
        %v487 = vld [vmem:[%s360 + $0x84] sm:$0xf]
        %v488 = vld [vmem:[%s360 + $0x88] sm:$0xf]
        %v489 = vld [vmem:[%s360 + $0x8c] sm:$0xf]
        %v490 = vld [vmem:[%s360 + $0x90] sm:$0xf]
        %v491 = vld [vmem:[%s360 + $0x94] sm:$0xf]
        %v492 = vld [vmem:[%s360 + $0x98] sm:$0xf]
        %v493 = vld [vmem:[%s360 + $0x9c] sm:$0xf]
        %v494 = vld [vmem:[%s360 + $0xa0] sm:$0xf]
        %v495 = vld [vmem:[%s360 + $0xa4] sm:$0xf]
        %v496 = vld [vmem:[%s360 + $0xa8] sm:$0xf]
        %v497 = vld [vmem:[%s360 + $0xac] sm:$0xf]
        %v498 = vld [vmem:[%s360 + $0xb0] sm:$0xf]
        %v499 = vld [vmem:[%s360 + $0xb4] sm:$0xf]
        %v500 = vld [vmem:[%s360 + $0xb8] sm:$0xf]
        %v501 = vld [vmem:[%s360 + $0xbc] sm:$0xf]
        %v502 = vld [vmem:[%s360 + $0xc0] sm:$0xf]
        %v503 = vld [vmem:[%s360 + $0xc4] sm:$0xf]
        %v504 = vld [vmem:[%s360 + $0xc8] sm:$0xf]
        %v505 = vld [vmem:[%s360 + $0xcc] sm:$0xf]
        %v506 = vld [vmem:[%s360 + $0xd0] sm:$0xf]
        %v507 = vld [vmem:[%s360 + $0xd4] sm:$0xf]
        %v508 = vld [vmem:[%s360 + $0xd8] sm:$0xf]
        %v509 = vld [vmem:[%s360 + $0xdc] sm:$0xf]
        %v510 = vld [vmem:[%s360 + $0xe0] sm:$0xf]
        %v511 = vld [vmem:[%s360 + $0xe4] sm:$0xf]
        %v512 = vld [vmem:[%s360 + $0xe8] sm:$0xf]
        %v513 = vld [vmem:[%s360 + $0xec] sm:$0xf]
        %v514 = vld [vmem:[%s360 + $0xf0] sm:$0xf]
        %v515 = vld [vmem:[%s360 + $0xf4] sm:$0xf]
        %v516 = vld [vmem:[%s360 + $0xf8] sm:$0xf]
        %v517 = vld [vmem:[%s360 + $0xfc] sm:$0xf]
        %v550 = vunpack.c.l.b16 %v422
        %v551 = vunpack.c.h.b16 %v422
        %v552 = vunpack.c.l.b16 %v423
        %v553 = vunpack.c.h.b16 %v423
        %v554 = vunpack.c.l.b16 %v424
        %v555 = vunpack.c.h.b16 %v424
        %v556 = vunpack.c.l.b16 %v425
        %v557 = vunpack.c.h.b16 %v425
        %v558 = vunpack.c.l.b16 %v426
        %v559 = vunpack.c.h.b16 %v426
        %v560 = vunpack.c.l.b16 %v427
        %v561 = vunpack.c.h.b16 %v427
        %v562 = vunpack.c.l.b16 %v428
        %v563 = vunpack.c.h.b16 %v428
        %v564 = vunpack.c.l.b16 %v429
        %v565 = vunpack.c.h.b16 %v429
        %v566 = vunpack.c.l.b16 %v430
        %v567 = vunpack.c.h.b16 %v430
        %v568 = vunpack.c.l.b16 %v431
        %v569 = vunpack.c.h.b16 %v431
        %v570 = vunpack.c.l.b16 %v432
        %v571 = vunpack.c.h.b16 %v432
        %v572 = vunpack.c.l.b16 %v433
        %v573 = vunpack.c.h.b16 %v433
        %v574 = vunpack.c.l.b16 %v434
        %v575 = vunpack.c.h.b16 %v434
        %v576 = vunpack.c.l.b16 %v435
        %v577 = vunpack.c.h.b16 %v435
        %v578 = vunpack.c.l.b16 %v436
        %v579 = vunpack.c.h.b16 %v436
        %v580 = vunpack.c.l.b16 %v437
        %v581 = vunpack.c.h.b16 %v437
        %v582 = vunpack.c.l.b16 %v438
        %v583 = vunpack.c.h.b16 %v438
        %v584 = vunpack.c.l.b16 %v439
        %v585 = vunpack.c.h.b16 %v439
        %v586 = vunpack.c.l.b16 %v440
        %v587 = vunpack.c.h.b16 %v440
        %v588 = vunpack.c.l.b16 %v441
        %v589 = vunpack.c.h.b16 %v441
        %v590 = vunpack.c.l.b16 %v442
        %v591 = vunpack.c.h.b16 %v442
        %v592 = vunpack.c.l.b16 %v443
        %v593 = vunpack.c.h.b16 %v443
        %v594 = vunpack.c.l.b16 %v444
        %v595 = vunpack.c.h.b16 %v444
        %v596 = vunpack.c.l.b16 %v445
        %v597 = vunpack.c.h.b16 %v445
        %v598 = vunpack.c.l.b16 %v446
        %v599 = vunpack.c.h.b16 %v446
        %v600 = vunpack.c.l.b16 %v447
        %v601 = vunpack.c.h.b16 %v447
        %v602 = vunpack.c.l.b16 %v448
        %v603 = vunpack.c.h.b16 %v448
        %v604 = vunpack.c.l.b16 %v449
        %v605 = vunpack.c.h.b16 %v449
        %v606 = vunpack.c.l.b16 %v450
        %v607 = vunpack.c.h.b16 %v450
        %v608 = vunpack.c.l.b16 %v451
        %v609 = vunpack.c.h.b16 %v451
        %v610 = vunpack.c.l.b16 %v452
        %v611 = vunpack.c.h.b16 %v452
        %v612 = vunpack.c.l.b16 %v453
        %v613 = vunpack.c.h.b16 %v453
        %v614 = vpack.c.b16 %v554, %v550
        %v615 = vpack.c.b16 %v555, %v551
        %v616 = vpack.c.b16 %v556, %v552
        %v617 = vpack.c.b16 %v557, %v553
        %v618 = vpack.c.b16 %v562, %v558
        %v619 = vpack.c.b16 %v563, %v559
        %v620 = vpack.c.b16 %v564, %v560
        %v621 = vpack.c.b16 %v565, %v561
        %v622 = vpack.c.b16 %v570, %v566
        %v623 = vpack.c.b16 %v571, %v567
        %v624 = vpack.c.b16 %v572, %v568
        %v625 = vpack.c.b16 %v573, %v569
        %v626 = vpack.c.b16 %v578, %v574
        %v627 = vpack.c.b16 %v579, %v575
        %v628 = vpack.c.b16 %v580, %v576
        %v629 = vpack.c.b16 %v581, %v577
        %v630 = vpack.c.b16 %v586, %v582
        %v631 = vpack.c.b16 %v587, %v583
        %v632 = vpack.c.b16 %v588, %v584
        %v633 = vpack.c.b16 %v589, %v585
        %v634 = vpack.c.b16 %v594, %v590
        %v635 = vpack.c.b16 %v595, %v591
        %v636 = vpack.c.b16 %v596, %v592
        %v637 = vpack.c.b16 %v597, %v593
        %v638 = vpack.c.b16 %v602, %v598
        %v639 = vpack.c.b16 %v603, %v599
        %v640 = vpack.c.b16 %v604, %v600
        %v641 = vpack.c.b16 %v605, %v601
        %v642 = vpack.c.b16 %v610, %v606
        %v643 = vpack.c.b16 %v611, %v607
        %v644 = vpack.c.b16 %v612, %v608
        %v645 = vpack.c.b16 %v613, %v609
        %v742 = vunpack.c.l.b16 %v454
        %v743 = vunpack.c.l.b16 %v455
        %v744 = vunpack.c.l.b16 %v456
        %v745 = vunpack.c.l.b16 %v457
        %v746 = vunpack.c.l.b16 %v458
        %v747 = vunpack.c.l.b16 %v459
        %v748 = vunpack.c.l.b16 %v460
        %v749 = vunpack.c.l.b16 %v461
        %v750 = vunpack.c.l.b16 %v462
        %v751 = vunpack.c.l.b16 %v463
        %v752 = vunpack.c.l.b16 %v464
        %v753 = vunpack.c.l.b16 %v465
        %v754 = vunpack.c.l.b16 %v466
        %v755 = vunpack.c.l.b16 %v467
        %v756 = vunpack.c.l.b16 %v468
        %v757 = vunpack.c.l.b16 %v469
        %v758 = vunpack.c.l.b16 %v470
        %v759 = vunpack.c.l.b16 %v471
        %v760 = vunpack.c.l.b16 %v472
        %v761 = vunpack.c.l.b16 %v473
        %v762 = vunpack.c.l.b16 %v474
        %v763 = vunpack.c.l.b16 %v475
        %v764 = vunpack.c.l.b16 %v476
        %v765 = vunpack.c.l.b16 %v477
        %v766 = vunpack.c.l.b16 %v478
        %v767 = vunpack.c.l.b16 %v479
        %v768 = vunpack.c.l.b16 %v480
        %v769 = vunpack.c.l.b16 %v481
        %v770 = vunpack.c.l.b16 %v482
        %v771 = vunpack.c.l.b16 %v483
        %v772 = vunpack.c.l.b16 %v484
        %v773 = vunpack.c.l.b16 %v485
        %v774 = vunpack.c.l.b16 %v486
        %v775 = vunpack.c.l.b16 %v487
        %v776 = vunpack.c.l.b16 %v488
        %v777 = vunpack.c.l.b16 %v489
        %v778 = vunpack.c.l.b16 %v490
        %v779 = vunpack.c.l.b16 %v491
        %v780 = vunpack.c.l.b16 %v492
        %v781 = vunpack.c.l.b16 %v493
        %v782 = vunpack.c.l.b16 %v494
        %v783 = vunpack.c.l.b16 %v495
        %v784 = vunpack.c.l.b16 %v496
        %v785 = vunpack.c.l.b16 %v497
        %v786 = vunpack.c.l.b16 %v498
        %v787 = vunpack.c.l.b16 %v499
        %v788 = vunpack.c.l.b16 %v500
        %v789 = vunpack.c.l.b16 %v501
        %v790 = vunpack.c.l.b16 %v502
        %v791 = vunpack.c.l.b16 %v503
        %v792 = vunpack.c.l.b16 %v504
        %v793 = vunpack.c.l.b16 %v505
        %v794 = vunpack.c.l.b16 %v506
        %v795 = vunpack.c.l.b16 %v507
        %v796 = vunpack.c.l.b16 %v508
        %v797 = vunpack.c.l.b16 %v509
        %v798 = vunpack.c.l.b16 %v510
        %v799 = vunpack.c.l.b16 %v511
        %v800 = vunpack.c.l.b16 %v512
        %v801 = vunpack.c.l.b16 %v513
        %v802 = vunpack.c.l.b16 %v514
        %v803 = vunpack.c.l.b16 %v515
        %v804 = vunpack.c.l.b16 %v516
        %v805 = vunpack.c.l.b16 %v517
        %v806 = vpack.c.b16 %v743, %v742
        %v807 = vpack.c.b16 %v745, %v744
        %v808 = vpack.c.b16 %v747, %v746
        %v809 = vpack.c.b16 %v749, %v748
        %v810 = vpack.c.b16 %v751, %v750
        %v811 = vpack.c.b16 %v753, %v752
        %v812 = vpack.c.b16 %v755, %v754
        %v813 = vpack.c.b16 %v757, %v756
        %v814 = vpack.c.b16 %v759, %v758
        %v815 = vpack.c.b16 %v761, %v760
        %v816 = vpack.c.b16 %v763, %v762
        %v817 = vpack.c.b16 %v765, %v764
        %v818 = vpack.c.b16 %v767, %v766
        %v819 = vpack.c.b16 %v769, %v768
        %v820 = vpack.c.b16 %v771, %v770
        %v821 = vpack.c.b16 %v773, %v772
        %v822 = vpack.c.b16 %v775, %v774
        %v823 = vpack.c.b16 %v777, %v776
        %v824 = vpack.c.b16 %v779, %v778
        %v825 = vpack.c.b16 %v781, %v780
        %v826 = vpack.c.b16 %v783, %v782
        %v827 = vpack.c.b16 %v785, %v784
        %v828 = vpack.c.b16 %v787, %v786
        %v829 = vpack.c.b16 %v789, %v788
        %v830 = vpack.c.b16 %v791, %v790
        %v831 = vpack.c.b16 %v793, %v792
        %v832 = vpack.c.b16 %v795, %v794
        %v833 = vpack.c.b16 %v797, %v796
        %v834 = vpack.c.b16 %v799, %v798
        %v835 = vpack.c.b16 %v801, %v800
        %v836 = vpack.c.b16 %v803, %v802
        %v837 = vpack.c.b16 %v805, %v804
        %870 = vmatprep.subr.bf16.mxu0 0
        %871 = vmatpush1.bf16.msra.mxu0 %v806
        %872 = vmatprep.subr.bf16.mxu0 0
        %873 = vmatpush1.bf16.msra.mxu0 %v807
        %874 = vmatprep.subr.bf16.mxu0 0
        %875 = vmatpush1.bf16.msra.mxu0 %v808
        %876 = vmatprep.subr.bf16.mxu0 0
        %877 = vmatpush1.bf16.msra.mxu0 %v809
        %878 = vmatprep.subr.bf16.mxu0 0
        %879 = vmatpush1.bf16.msra.mxu0 %v810
        %880 = vmatprep.subr.bf16.mxu0 0
        %881 = vmatpush1.bf16.msra.mxu0 %v811
        %882 = vmatprep.subr.bf16.mxu0 0
        %883 = vmatpush1.bf16.msra.mxu0 %v812
        %884 = vmatprep.subr.bf16.mxu0 0
        %885 = vmatpush1.bf16.msra.mxu0 %v813
        %886 = vmatprep.subr.bf16.mxu0 0
        %887 = vmatpush1.bf16.msra.mxu0 %v814
        %888 = vmatprep.subr.bf16.mxu0 0
        %889 = vmatpush1.bf16.msra.mxu0 %v815
        %890 = vmatprep.subr.bf16.mxu0 0
        %891 = vmatpush1.bf16.msra.mxu0 %v816
        %892 = vmatprep.subr.bf16.mxu0 0
        %893 = vmatpush1.bf16.msra.mxu0 %v817
        %894 = vmatprep.subr.bf16.mxu0 0
        %895 = vmatpush1.bf16.msra.mxu0 %v818
        %896 = vmatprep.subr.bf16.mxu0 0
        %897 = vmatpush1.bf16.msra.mxu0 %v819
        %898 = vmatprep.subr.bf16.mxu0 0
        %899 = vmatpush1.bf16.msra.mxu0 %v820
        %900 = vmatprep.subr.bf16.mxu0 0
        %901 = vmatpush1.bf16.msra.mxu0 %v821
        %902 = vmatprep.mubr.bf16.mxu0 %v615
        %903 = vmatmul.mubr.bf16.gmra.mrb[0].mxu0 %v614
        %v904 = vpop.f32.mrb[0].mxu0
        %v905 = vadd.f32 0.0, %v904
        %v906 = vpop.f32.mrb[0].mxu0
        %v907 = vpop.f32.mrb[0].mxu0
        %v908 = vadd.f32 0.0, %v907
        %v909 = vpop.f32.mrb[0].mxu0
        %910 = vmatprep.mubr.bf16.mxu0 %v619
        %911 = vmatmul.mubr.bf16.gmra.mrb[0].mxu0 %v618
        %v912 = vpop.f32.mrb[0].mxu0
        %v913 = vadd.f32 0.0, %v912
        %v914 = vpop.f32.mrb[0].mxu0
        %v915 = vpop.f32.mrb[0].mxu0
        %v916 = vadd.f32 0.0, %v915
        %v917 = vpop.f32.mrb[0].mxu0
        %918 = vmatprep.mubr.bf16.mxu0 %v623
        %919 = vmatmul.mubr.bf16.gmra.mrb[0].mxu0 %v622
        %v920 = vpop.f32.mrb[0].mxu0
        %v921 = vadd.f32 0.0, %v920
        %v922 = vpop.f32.mrb[0].mxu0
        %v923 = vpop.f32.mrb[0].mxu0
        %v924 = vadd.f32 0.0, %v923
        %v925 = vpop.f32.mrb[0].mxu0
        %926 = vmatprep.mubr.bf16.mxu0 %v627
        %927 = vmatmul.mubr.bf16.gmra.mrb[0].mxu0 %v626
        %v928 = vpop.f32.mrb[0].mxu0
        %v929 = vadd.f32 0.0, %v928
        %v930 = vpop.f32.mrb[0].mxu0
        %v931 = vpop.f32.mrb[0].mxu0
        %v932 = vadd.f32 0.0, %v931
        %v933 = vpop.f32.mrb[0].mxu0
        %934 = vmatprep.mubr.bf16.mxu0 %v631
        %935 = vmatmul.mubr.bf16.gmra.mrb[0].mxu0 %v630
        %v936 = vpop.f32.mrb[0].mxu0
        %v937 = vadd.f32 0.0, %v936
        %v938 = vpop.f32.mrb[0].mxu0
        %v939 = vpop.f32.mrb[0].mxu0
        %v940 = vadd.f32 0.0, %v939
        %v941 = vpop.f32.mrb[0].mxu0
        %942 = vmatprep.mubr.bf16.mxu0 %v635
        %943 = vmatmul.mubr.bf16.gmra.mrb[0].mxu0 %v634
        %v944 = vpop.f32.mrb[0].mxu0
        %v945 = vadd.f32 0.0, %v944
        %v946 = vpop.f32.mrb[0].mxu0
        %v947 = vpop.f32.mrb[0].mxu0
        %v948 = vadd.f32 0.0, %v947
        %v949 = vpop.f32.mrb[0].mxu0
        %950 = vmatprep.mubr.bf16.mxu0 %v639
        %951 = vmatmul.mubr.bf16.gmra.mrb[0].mxu0 %v638
        %v952 = vpop.f32.mrb[0].mxu0
        %v953 = vadd.f32 0.0, %v952
        %v954 = vpop.f32.mrb[0].mxu0
        %v955 = vpop.f32.mrb[0].mxu0
        %v956 = vadd.f32 0.0, %v955
        %v957 = vpop.f32.mrb[0].mxu0
        %958 = vmatprep.mubr.bf16.mxu0 %v643
        %959 = vmatmul.mubr.bf16.gmra.mrb[0].mxu0 %v642
        %v960 = vpop.f32.mrb[0].mxu0
        %v961 = vadd.f32 0.0, %v960
        %v962 = vpop.f32.mrb[0].mxu0
        %v963 = vpop.f32.mrb[0].mxu0
        %v964 = vadd.f32 0.0, %v963
        %v965 = vpop.f32.mrb[0].mxu0
        %966 = vdwg.mxu0
        %967 = vmatprep.subr.bf16.mxu0 0
        %968 = vmatpush1.bf16.msra.mxu0 %v822
        %969 = vmatprep.subr.bf16.mxu0 0
        %970 = vmatpush1.bf16.msra.mxu0 %v823
        %971 = vmatprep.subr.bf16.mxu0 0
        %972 = vmatpush1.bf16.msra.mxu0 %v824
        %973 = vmatprep.subr.bf16.mxu0 0
        %974 = vmatpush1.bf16.msra.mxu0 %v825
        %975 = vmatprep.subr.bf16.mxu0 0
        %976 = vmatpush1.bf16.msra.mxu0 %v826
        %977 = vmatprep.subr.bf16.mxu0 0
        %978 = vmatpush1.bf16.msra.mxu0 %v827
        %979 = vmatprep.subr.bf16.mxu0 0
        %980 = vmatpush1.bf16.msra.mxu0 %v828
        %981 = vmatprep.subr.bf16.mxu0 0
        %982 = vmatpush1.bf16.msra.mxu0 %v829
        %983 = vmatprep.subr.bf16.mxu0 0
        %984 = vmatpush1.bf16.msra.mxu0 %v830
        %985 = vmatprep.subr.bf16.mxu0 0
        %986 = vmatpush1.bf16.msra.mxu0 %v831
        %987 = vmatprep.subr.bf16.mxu0 0
        %988 = vmatpush1.bf16.msra.mxu0 %v832
        %989 = vmatprep.subr.bf16.mxu0 0
        %990 = vmatpush1.bf16.msra.mxu0 %v833
        %991 = vmatprep.subr.bf16.mxu0 0
        %992 = vmatpush1.bf16.msra.mxu0 %v834
        %993 = vmatprep.subr.bf16.mxu0 0
        %994 = vmatpush1.bf16.msra.mxu0 %v835
        %995 = vmatprep.subr.bf16.mxu0 0
        %996 = vmatpush1.bf16.msra.mxu0 %v836
        %997 = vmatprep.subr.bf16.mxu0 0
        %998 = vmatpush1.bf16.msra.mxu0 %v837
        %999 = vmatprep.mubr.bf16.mxu0 %v617
        %1000 = vmatmul.mubr.bf16.gmra.mrb[0].mxu0 %v616
        %v1001 = vpop.f32.mrb[0].mxu0
        %v1002 = vadd.f32 %v905, %v1001
        %v1003 = vpop.f32.mrb[0].mxu0
        %v1004 = vpop.f32.mrb[0].mxu0
        %v1005 = vadd.f32 %v908, %v1004
        %v1006 = vpop.f32.mrb[0].mxu0
        %1007 = vmatprep.mubr.bf16.mxu0 %v621
        %1008 = vmatmul.mubr.bf16.gmra.mrb[0].mxu0 %v620
        %v1009 = vpop.f32.mrb[0].mxu0
        %v1010 = vadd.f32 %v913, %v1009
        %v1011 = vpop.f32.mrb[0].mxu0
        %v1012 = vpop.f32.mrb[0].mxu0
        %v1013 = vadd.f32 %v916, %v1012
        %v1014 = vpop.f32.mrb[0].mxu0
        %1015 = vmatprep.mubr.bf16.mxu0 %v625
        %1016 = vmatmul.mubr.bf16.gmra.mrb[0].mxu0 %v624
        %v1017 = vpop.f32.mrb[0].mxu0
        %v1018 = vadd.f32 %v921, %v1017
        %v1019 = vpop.f32.mrb[0].mxu0
        %v1020 = vpop.f32.mrb[0].mxu0
        %v1021 = vadd.f32 %v924, %v1020
        %v1022 = vpop.f32.mrb[0].mxu0
        %1023 = vmatprep.mubr.bf16.mxu0 %v629
        %1024 = vmatmul.mubr.bf16.gmra.mrb[0].mxu0 %v628
        %v1025 = vpop.f32.mrb[0].mxu0
        %v1026 = vadd.f32 %v929, %v1025
        %v1027 = vpop.f32.mrb[0].mxu0
        %v1028 = vpop.f32.mrb[0].mxu0
        %v1029 = vadd.f32 %v932, %v1028
        %v1030 = vpop.f32.mrb[0].mxu0
        %1031 = vmatprep.mubr.bf16.mxu0 %v633
        %1032 = vmatmul.mubr.bf16.gmra.mrb[0].mxu0 %v632
        %v1033 = vpop.f32.mrb[0].mxu0
        %v1034 = vadd.f32 %v937, %v1033
        %v1035 = vpop.f32.mrb[0].mxu0
        %v1036 = vpop.f32.mrb[0].mxu0
        %v1037 = vadd.f32 %v940, %v1036
        %v1038 = vpop.f32.mrb[0].mxu0
        %1039 = vmatprep.mubr.bf16.mxu0 %v637
        %1040 = vmatmul.mubr.bf16.gmra.mrb[0].mxu0 %v636
        %v1041 = vpop.f32.mrb[0].mxu0
        %v1042 = vadd.f32 %v945, %v1041
        %v1043 = vpop.f32.mrb[0].mxu0
        %v1044 = vpop.f32.mrb[0].mxu0
        %v1045 = vadd.f32 %v948, %v1044
        %v1046 = vpop.f32.mrb[0].mxu0
        %1047 = vmatprep.mubr.bf16.mxu0 %v641
        %1048 = vmatmul.mubr.bf16.gmra.mrb[0].mxu0 %v640
        %v1049 = vpop.f32.mrb[0].mxu0
        %v1050 = vadd.f32 %v953, %v1049
        %v1051 = vpop.f32.mrb[0].mxu0
        %v1052 = vpop.f32.mrb[0].mxu0
        %v1053 = vadd.f32 %v956, %v1052
        %v1054 = vpop.f32.mrb[0].mxu0
        %1055 = vmatprep.mubr.bf16.mxu0 %v645
        %1056 = vmatmul.mubr.bf16.gmra.mrb[0].mxu0 %v644
        %v1057 = vpop.f32.mrb[0].mxu0
        %v1058 = vadd.f32 %v961, %v1057
        %v1059 = vpop.f32.mrb[0].mxu0
        %v1060 = vpop.f32.mrb[0].mxu0
        %v1061 = vadd.f32 %v964, %v1060
        %v1062 = vpop.f32.mrb[0].mxu0
        %1063 = vdwg.mxu0
        %v1064 = vadd.f32 %v406, %v1002
        %v1065 = vadd.f32 %v407, %v1005
        %v1066 = vadd.f32 %v408, %v1010
        %v1067 = vadd.f32 %v409, %v1013
        %v1068 = vadd.f32 %v410, %v1018
        %v1069 = vadd.f32 %v411, %v1021
        %v1070 = vadd.f32 %v412, %v1026
        %v1071 = vadd.f32 %v413, %v1029
        %v1072 = vadd.f32 %v414, %v1034
        %v1073 = vadd.f32 %v415, %v1037
        %v1074 = vadd.f32 %v416, %v1042
        %v1075 = vadd.f32 %v417, %v1045
        %v1076 = vadd.f32 %v418, %v1050
        %v1077 = vadd.f32 %v419, %v1053
        %v1078 = vadd.f32 %v420, %v1058
        %v1079 = vadd.f32 %v421, %v1061
        %1080 = vst [vmem:[%s369] sm:$0xff] %v1064
        %1081 = vst [vmem:[%s369 + $0x8] sm:$0xff] %v1065
        %1082 = vst [vmem:[%s369 + $0x10] sm:$0xff] %v1066
        %1083 = vst [vmem:[%s369 + $0x18] sm:$0xff] %v1067
        %1084 = vst [vmem:[%s369 + $0x20] sm:$0xff] %v1068
        %1085 = vst [vmem:[%s369 + $0x28] sm:$0xff] %v1069
        %1086 = vst [vmem:[%s369 + $0x30] sm:$0xff] %v1070
        %1087 = vst [vmem:[%s369 + $0x38] sm:$0xff] %v1071
        %1088 = vst [vmem:[%s369 + $0x40] sm:$0xff] %v1072
        %1089 = vst [vmem:[%s369 + $0x48] sm:$0xff] %v1073
        %1090 = vst [vmem:[%s369 + $0x50] sm:$0xff] %v1074
        %1091 = vst [vmem:[%s369 + $0x58] sm:$0xff] %v1075
        %1092 = vst [vmem:[%s369 + $0x60] sm:$0xff] %v1076
        %1093 = vst [vmem:[%s369 + $0x68] sm:$0xff] %v1077
        %1094 = vst [vmem:[%s369 + $0x70] sm:$0xff] %v1078
        %1095 = vst [vmem:[%s369 + $0x78] sm:$0xff] %v1079
        %p1096 = scmp.eq.s32.totalorder %s23, 1
        // Predicated region
        $region56: #{_lambda_.9} parent=46 // pred_check
          %p1097 = pneg %p1096
        $region57: #{_lambda_.9} parent=46 // pred_check_branch
          %1099 = sbr.rel (%p1097) target = $region59
        $region58: #{_lambda_.9} parent=46 // pred_region
          %v1100 = vld [vmem:[%s369] sm:$0xff]
          %v1101 = vld [vmem:[%s369 + $0x8] sm:$0xff]
          %v1102 = vld [vmem:[%s369 + $0x10] sm:$0xff]
          %v1103 = vld [vmem:[%s369 + $0x18] sm:$0xff]
          %v1104 = vld [vmem:[%s369 + $0x20] sm:$0xff]
          %v1105 = vld [vmem:[%s369 + $0x28] sm:$0xff]
          %v1106 = vld [vmem:[%s369 + $0x30] sm:$0xff]
          %v1107 = vld [vmem:[%s369 + $0x38] sm:$0xff]
          %v1108 = vld [vmem:[%s369 + $0x40] sm:$0xff]
          %v1109 = vld [vmem:[%s369 + $0x48] sm:$0xff]
          %v1110 = vld [vmem:[%s369 + $0x50] sm:$0xff]
          %v1111 = vld [vmem:[%s369 + $0x58] sm:$0xff]
          %v1112 = vld [vmem:[%s369 + $0x60] sm:$0xff]
          %v1113 = vld [vmem:[%s369 + $0x68] sm:$0xff]
          %v1114 = vld [vmem:[%s369 + $0x70] sm:$0xff]
          %v1115 = vld [vmem:[%s369 + $0x78] sm:$0xff]
          %v1116 = vadd.f32 %v1100, %v1101
          %v1117 = vadd.f32 %v1116, %v1102
          %v1118 = vadd.f32 %v1117, %v1103
          %v1119 = vadd.f32 %v1118, %v1104
          %v1120 = vadd.f32 %v1119, %v1105
          %v1121 = vadd.f32 %v1120, %v1106
          %v1122 = vadd.f32 %v1121, %v1107
          %v1123 = vadd.f32 %v1122, %v1108
          %v1124 = vadd.f32 %v1123, %v1109
          %v1125 = vadd.f32 %v1124, %v1110
          %v1126 = vadd.f32 %v1125, %v1111
          %v1127 = vadd.f32 %v1126, %v1112
          %v1128 = vadd.f32 %v1127, %v1113
          %v1129 = vadd.f32 %v1128, %v1114
          %v1130 = vadd.f32 %v1129, %v1115
          %v1131 = vrot.slane %v1130, 4
          %v1132 = vadd.f32 %v1130, %v1131
          %v1133 = vrot.slane %v1132, 2
          %v1134 = vadd.f32 %v1132, %v1133
          %v1135 = vrot.slane %v1134, 1
          %v1136 = vadd.f32 %v1134, %v1135
          %v1137 = vmul.f32 %v1100, %v1100
          %v1138 = vmul.f32 %v1101, %v1101
          %v1139 = vmul.f32 %v1102, %v1102
          %v1140 = vmul.f32 %v1103, %v1103
          %v1141 = vmul.f32 %v1104, %v1104
          %v1142 = vmul.f32 %v1105, %v1105
          %v1143 = vmul.f32 %v1106, %v1106
          %v1144 = vmul.f32 %v1107, %v1107
          %v1145 = vmul.f32 %v1108, %v1108
          %v1146 = vmul.f32 %v1109, %v1109
          %v1147 = vmul.f32 %v1110, %v1110
          %v1148 = vmul.f32 %v1111, %v1111
          %v1149 = vmul.f32 %v1112, %v1112
          %v1150 = vmul.f32 %v1113, %v1113
          %v1151 = vmul.f32 %v1114, %v1114
          %v1152 = vmul.f32 %v1115, %v1115
          %v1153 = vadd.f32 %v1137, %v1138
          %v1154 = vadd.f32 %v1153, %v1139
          %v1155 = vadd.f32 %v1154, %v1140
          %v1156 = vadd.f32 %v1155, %v1141
          %v1157 = vadd.f32 %v1156, %v1142
          %v1158 = vadd.f32 %v1157, %v1143
          %v1159 = vadd.f32 %v1158, %v1144
          %v1160 = vadd.f32 %v1159, %v1145
          %v1161 = vadd.f32 %v1160, %v1146
          %v1162 = vadd.f32 %v1161, %v1147
          %v1163 = vadd.f32 %v1162, %v1148
          %v1164 = vadd.f32 %v1163, %v1149
          %v1165 = vadd.f32 %v1164, %v1150
          %v1166 = vadd.f32 %v1165, %v1151
          %v1167 = vadd.f32 %v1166, %v1152
          %v1168 = vrot.slane %v1167, 4
          %v1169 = vadd.f32 %v1167, %v1168
          %v1170 = vrot.slane %v1169, 2
          %v1171 = vadd.f32 %v1169, %v1170
          %v1172 = vrot.slane %v1171, 1
          %v1173 = vadd.f32 %v1171, %v1172
          %1174 = vst [vmem:[%s377] sm:$0xff] %v1136
          %1175 = vst [vmem:[%s384] sm:$0xff] %v1173
        $region59: #{_lambda_.9} parent=46 // pred_fallthru
          _
        %s1176 = smul.u32 16, %s21
        %p1177 = scmp.lt.s32.totalorder %s1176, 15
        %s1178 = scalar_select %p1177, %s1176, 15
        %p1179 = scmp.lt.s32.totalorder %s22, 0
        %s1180 = scalar_select %p1179, %s22, 0
        %s1181 = sadd.s32 %s1180, %s1178
        %s1182 = smul.addr %s1181, 8
        %s1183 = scalar_lea.vmem %s2, %s1182
        %p1184 = scmp.lt.s32.totalorder %s21, 0
        %s1185 = scalar_select %p1184, %s21, 0
        %p1186 = scmp.lt.s32.totalorder %s22, 0
        %s1187 = scalar_select %p1186, %s22, 0
        %s1188 = sadd.s32 %s1187, %s1185
        %s1189 = smul.addr %s1188, 8
        %s1190 = scalar_lea.vmem %s3, %s1189
        %p1191 = scmp.lt.s32.totalorder %s21, 0
        %s1192 = scalar_select %p1191, %s21, 0
        %p1193 = scmp.lt.s32.totalorder %s22, 0
        %s1194 = scalar_select %p1193, %s22, 0
        %s1195 = sadd.s32 %s1194, %s1192
        %s1196 = smul.addr %s1195, 8
        %s1197 = scalar_lea.vmem %s4, %s1196
        // Predicated region
        $region60: #{_lambda_.9} parent=46 // pred_check
          %p1198 = pneg %p111
        $region61: #{_lambda_.9} parent=46 // pred_check_branch
          %1200 = sbr.rel (%p1198) target = $region63
        $region62: #{_lambda_.9} parent=46 // pred_region
          %s1201 = smul.u32 16, %s21
        $region63: #{_lambda_.9} parent=46 // pred_fallthru
          _
        // Predicated region
        $region64: #{_lambda_.9} parent=46 // pred_check
          %p1202 = pneg %p139
        $region65: #{_lambda_.9} parent=46 // pred_check_branch
          %1204 = sbr.rel (%p1202) target = $region67
        $region66: #{_lambda_.9} parent=46 // pred_region
          _
        $region67: #{_lambda_.9} parent=46 // pred_fallthru
          _
        // Predicated region
        $region68: #{_lambda_.9} parent=46 // pred_check
          %p1205 = pneg %p167
        $region69: #{_lambda_.9} parent=46 // pred_check_branch
          %1207 = sbr.rel (%p1205) target = $region71
        $region70: #{_lambda_.9} parent=46 // pred_region
          _
        $region71: #{_lambda_.9} parent=46 // pred_fallthru
          _
        // Predicated region
        $region72: #{_lambda_.9} parent=46 // pred_check
          %p1208 = pneg %p111
        $region73: #{_lambda_.9} parent=46 // pred_check_branch
          %1210 = sbr.rel (%p1208) target = $region75
        $region74: #{_lambda_.9} parent=46 // pred_region
          %s1211 = smul.u32 16, %s21
          %p1212 = scmp.lt.s32.totalorder %s1211, 15
          %s1213 = scalar_select %p1212, %s1211, 15
          %p1214 = scmp.lt.s32.totalorder %s22, 0
          %s1215 = scalar_select %p1214, %s22, 0
          %s1216 = sadd.s32 %s1215, %s1213
          %s1217 = smul.addr %s1216, 8
          %s1218 = scalar_lea.vmem %s2, %s1217
        $region75: #{_lambda_.9} parent=46 // pred_fallthru
          _
        // Predicated region
        $region76: #{_lambda_.9} parent=46 // pred_check
          %p1219 = pneg %p139
        $region77: #{_lambda_.9} parent=46 // pred_check_branch
          %1221 = sbr.rel (%p1219) target = $region79
        $region78: #{_lambda_.9} parent=46 // pred_region
          %p1222 = scmp.lt.s32.totalorder %s21, 0
          %s1223 = scalar_select %p1222, %s21, 0
          %p1224 = scmp.lt.s32.totalorder %s22, 0
          %s1225 = scalar_select %p1224, %s22, 0
          %s1226 = sadd.s32 %s1225, %s1223
          %s1227 = smul.addr %s1226, 8
          %s1228 = scalar_lea.vmem %s3, %s1227
        $region79: #{_lambda_.9} parent=46 // pred_fallthru
          _
        // Predicated region
        $region80: #{_lambda_.9} parent=46 // pred_check
          %p1229 = pneg %p167
        $region81: #{_lambda_.9} parent=46 // pred_check_branch
          %1231 = sbr.rel (%p1229) target = $region83
        $region82: #{_lambda_.9} parent=46 // pred_region
          %p1232 = scmp.lt.s32.totalorder %s21, 0
          %s1233 = scalar_select %p1232, %s21, 0
          %p1234 = scmp.lt.s32.totalorder %s22, 0
          %s1235 = scalar_select %p1234, %s22, 0
          %s1236 = sadd.s32 %s1235, %s1233
          %s1237 = smul.addr %s1236, 8
          %s1238 = scalar_lea.vmem %s4, %s1237
        $region83: #{_lambda_.9} parent=46 // pred_fallthru
          _
      $region47: #{_lambda_.9} parent=5 // pred_fallthru
        _
      %p1239 = scmp.le.s32.totalorder 2, %s11
      // Predicated region
      $region84: #{_lambda_.9} parent=5 // pred_check
        %p1240 = pneg %p1239
      $region85: #{_lambda_.9} parent=5 // pred_check_branch
        %1242 = sbr.rel (%p1240) target = $region87
      $region86: #{_lambda_.9} parent=5 // pred_region
        %s1243 = ssub.s32 %s11, 2
      $region87: #{_lambda_.9} parent=5 // pred_fallthru
        _
    $region6: #{_lambda_.9} parent=1 // loop_footer
      %s15 = sadd.s32 1, %s11
    $region7: #{_lambda_.9} parent=1 // loop_footer_branch
      %10 = sbr.rel target = $region3
    $region8: #{_lambda_.9} parent=1 // loop_exit
      _

// kernel: _lambda_.12
$region0: #{_lambda_.12}
  #allocation0 [shape = 'u32[]', space=smem, size = 0x4, offset = 0x4, fixed_abs, tag = 'smem constant byte address 0x4 - core index']
  #allocation1 [shape = 'u32[144,128]{1,0:T(1,128)}', space=vmem, size = 0x12000, scoped, tag = 'internal scratch']
  %s0 = inlined_call_operand.vmem [shape: f32[32,256], index: 0, kind: input, shape index: {}]
  %s1 = inlined_call_operand.vmem [shape: f32[1,256], index: 1, kind: input, shape index: {}]
  %s2 = inlined_call_operand.vmem [shape: f32[1,256], index: 2, kind: input, shape index: {}]
  %s3 = inlined_call_operand.vmem [shape: f32[32,256], index: 3, kind: output, shape index: {}]
  %s4 = sld [smem:[#allocation0]]
  $region22: #{_lambda_.12} parent=0
    _
  %s6 = ssub.s32 1, %s4
  %s7 = scalar_select 0, %s6, %s4
  // Predicated region
  $region2: #{_lambda_.12} parent=0 // pred_check
    _
  $region3: #{_lambda_.12} parent=0 // pred_check_branch
    %9 = sbr.rel (0) target = $region5
  $region4: #{_lambda_.12} parent=0 // pred_region
    _
  $region5: #{_lambda_.12} parent=0 // pred_fallthru
    _
  // Predicated region
  $region6: #{_lambda_.12} parent=0 // pred_check
    _
  $region7: #{_lambda_.12} parent=0 // pred_check_branch
    %11 = sbr.rel (0) target = $region9
  $region8: #{_lambda_.12} parent=0 // pred_region
    _
  $region9: #{_lambda_.12} parent=0 // pred_fallthru
    _
  // Predicated region
  $region10: #{_lambda_.12} parent=0 // pred_check
    _
  $region11: #{_lambda_.12} parent=0 // pred_check_branch
    %13 = sbr.rel (0) target = $region13
  $region12: #{_lambda_.12} parent=0 // pred_region
    _
  $region13: #{_lambda_.12} parent=0 // pred_fallthru
    _
  %v14 = vld [vmem:[%s0] sm:$0xff]
  %v15 = vld [vmem:[%s0 + $0x8] sm:$0xff]
  %v16 = vld [vmem:[%s0 + $0x10] sm:$0xff]
  %v17 = vld [vmem:[%s0 + $0x18] sm:$0xff]
  %v18 = vld [vmem:[%s0 + $0x20] sm:$0xff]
  %v19 = vld [vmem:[%s0 + $0x28] sm:$0xff]
  %v20 = vld [vmem:[%s0 + $0x30] sm:$0xff]
  %v21 = vld [vmem:[%s0 + $0x38] sm:$0xff]
  %v22 = vld [vmem:[%s1] sm:$0x3]
  %v24 = vlaneseq
  %v25 = vshrl.u32 %v24, 7
  %v26 = vsub.s32 0, %v25
  %v27 = vrot.slane %v22, %v26
  %v28 = vlaneseq
  %v29 = vshrl.u32 %v28, 7
  %v30 = vsub.s32 1, %v29
  %v31 = vrot.slane %v22, %v30
  %v34 = vmul.f32 %v14, %v27
  %v35 = vmul.f32 %v15, %v31
  %v36 = vmul.f32 %v16, %v27
  %v37 = vmul.f32 %v17, %v31
  %v38 = vmul.f32 %v18, %v27
  %v39 = vmul.f32 %v19, %v31
  %v40 = vmul.f32 %v20, %v27
  %v41 = vmul.f32 %v21, %v31
  %v42 = vld [vmem:[%s2] sm:$0x3]
  %v44 = vlaneseq
  %v45 = vshrl.u32 %v44, 7
  %v46 = vsub.s32 0, %v45
  %v47 = vrot.slane %v42, %v46
  %v48 = vlaneseq
  %v49 = vshrl.u32 %v48, 7
  %v50 = vsub.s32 1, %v49
  %v51 = vrot.slane %v42, %v50
  %v54 = vadd.f32 %v34, %v47
  %v55 = vadd.f32 %v35, %v51
  %v56 = vadd.f32 %v36, %v47
  %v57 = vadd.f32 %v37, %v51
  %v58 = vadd.f32 %v38, %v47
  %v59 = vadd.f32 %v39, %v51
  %v60 = vadd.f32 %v40, %v47
  %v61 = vadd.f32 %v41, %v51
  %vm62 = vcmp.ge.f32.partialorder %v54, 0.0
  %vm63 = vcmp.ge.f32.partialorder %v55, 0.0
  %vm64 = vcmp.ge.f32.partialorder %v56, 0.0
  %vm65 = vcmp.ge.f32.partialorder %v57, 0.0
  %vm66 = vcmp.ge.f32.partialorder %v58, 0.0
  %vm67 = vcmp.ge.f32.partialorder %v59, 0.0
  %vm68 = vcmp.ge.f32.partialorder %v60, 0.0
  %vm69 = vcmp.ge.f32.partialorder %v61, 0.0
  %v70 = vmul.f32 %v54, 0.2
  %v71 = vmul.f32 %v55, 0.2
  %v72 = vmul.f32 %v56, 0.2
  %v73 = vmul.f32 %v57, 0.2
  %v74 = vmul.f32 %v58, 0.2
  %v75 = vmul.f32 %v59, 0.2
  %v76 = vmul.f32 %v60, 0.2
  %v77 = vmul.f32 %v61, 0.2
  %v78 = vsel %vm62, %v54, %v70
  %v79 = vsel %vm63, %v55, %v71
  %v80 = vsel %vm64, %v56, %v72
  %v81 = vsel %vm65, %v57, %v73
  %v82 = vsel %vm66, %v58, %v74
  %v83 = vsel %vm67, %v59, %v75
  %v84 = vsel %vm68, %v60, %v76
  %v85 = vsel %vm69, %v61, %v77
  %86 = vst [vmem:[%s3] sm:$0xff] %v78
  %87 = vst [vmem:[%s3 + $0x8] sm:$0xff] %v79
  %88 = vst [vmem:[%s3 + $0x10] sm:$0xff] %v80
  %89 = vst [vmem:[%s3 + $0x18] sm:$0xff] %v81
  %90 = vst [vmem:[%s3 + $0x20] sm:$0xff] %v82
  %91 = vst [vmem:[%s3 + $0x28] sm:$0xff] %v83
  %92 = vst [vmem:[%s3 + $0x30] sm:$0xff] %v84
  %93 = vst [vmem:[%s3 + $0x38] sm:$0xff] %v85
  // Predicated region
  $region14: #{_lambda_.12} parent=0 // pred_check
    _
  $region15: #{_lambda_.12} parent=0 // pred_check_branch
    %95 = sbr.rel (0) target = $region17
  $region16: #{_lambda_.12} parent=0 // pred_region
    _
  $region17: #{_lambda_.12} parent=0 // pred_fallthru
    _
  // Predicated region
  $region18: #{_lambda_.12} parent=0 // pred_check
    _
  $region19: #{_lambda_.12} parent=0 // pred_check_branch
    %97 = sbr.rel (0) target = $region21
  $region20: #{_lambda_.12} parent=0 // pred_region
    _
  $region21: #{_lambda_.12} parent=0 // pred_fallthru
    _

// kernel: _lambda_.11
$region0: #{_lambda_.11}
  #allocation0 [shape = 'u32[]', space=smem, size = 0x4, offset = 0x4, fixed_abs, tag = 'smem constant byte address 0x4 - core index']
  #allocation1 [shape = 'u32[144,128]{1,0:T(1,128)}', space=vmem, size = 0x12000, scoped, tag = 'internal scratch']
  %s0 = inlined_call_operand.vmem [shape: bf16[32,2048], index: 0, kind: input, shape index: {}]
  %s1 = inlined_call_operand.vmem [shape: bf16[2048,256], index: 1, kind: input, shape index: {}]
  %s2 = inlined_call_operand.vmem [shape: f32[32,256], index: 2, kind: output, shape index: {0}]
  %s3 = inlined_call_operand.vmem [shape: f32[8,256], index: 3, kind: output, shape index: {1}]
  %s4 = inlined_call_operand.vmem [shape: f32[8,256], index: 4, kind: output, shape index: {2}]
  %5 = xla_tuple %s2, %s3, %s4
  %s6 = sld [smem:[#allocation0]]
  $region88: #{_lambda_.11} parent=0
    _
  %s8 = ssub.s32 1, %s6
  %s9 = scalar_select 0, %s8, %s6
  $region1: #{_lambda_.11} parent=0
    #allocation2 [shape = 'u8[65536]{0}', space=vmem, size = 0x10000, scoped, tag = 'input window, operand 0']
    loop: start=0, step=1, limit=6
    $region2: #{_lambda_.11} parent=1 // loop_pre_header
      _
    $region3: #{_lambda_.11} parent=1 // loop_header
      %s11 = sphi 0, %s15
      %p12 = scmp.ge.s32.totalorder %s11, 6
      %s18 = sphi 0, %s37
      %s19 = sphi 0, %s33
      %s20 = sphi 0, %s29
      %s21 = sphi 0, %s18
      %s22 = sphi 0, %s19
      %s23 = sphi 0, %s20
      %s24 = sphi 0, %s21
      %s25 = sphi 0, %s22
      %s26 = sphi 0, %s23
      %s42 = sphi 0, %s44
      %s45 = sphi 0, %s42
      %s46 = sphi 0, %s45
      %s62 = sphi 0, %s46
      %s70 = sphi 0, %s72
      %s73 = sphi 0, %s70
      %s74 = sphi 0, %s73
      %s90 = sphi 0, %s74
      %s98 = sphi 0, %s100
      %s101 = sphi 0, %s98
      %s102 = sphi 0, %s101
      %s118 = sphi 0, %s102
      %s126 = sphi 0, %s128
      %s129 = sphi 0, %s126
      %s130 = sphi 0, %s129
      %s146 = sphi 0, %s130
      %s154 = sphi 0, %s156
      %s157 = sphi 0, %s154
      %s158 = sphi 0, %s157
      %s174 = sphi 0, %s158
    $region4: #{_lambda_.11} parent=1 // loop_header_branch
      %14 = sbr.rel (%p12) target = $region8
    $region5: #{_lambda_.11} parent=1 // loop_body
      %s16 = ssub.s32 %s11, 1
      %s17 = ssub.s32 %s11, 2
      %s27 = sadd.s32 1, %s20
      %p28 = scmp.ge.s32.totalorder %s27, 4
      %s29 = scalar_select %p28, 0, %s27
      %s30 = sadd.s32 1, %s19
      %s31 = scalar_select %p28, %s30, %s19
      %p32 = scmp.ge.s32.totalorder %s31, 1
      %s33 = scalar_select %p32, 0, %s31
      %s34 = sadd.s32 1, %s18
      %s35 = scalar_select %p32, %s34, %s18
      %p36 = scmp.ge.s32.totalorder %s35, 1
      %s37 = scalar_select %p36, 0, %s35
      %s38 = ssub.s32 %s18, %s37
      %s39 = ssub.s32 %s20, %s29
      %s40 = sor.u32 %s38, %s39
      %p41 = scmp.eq.s32.totalorder %s40, 0
      %s43 = sadd.s32 %s42, 1
      %s44 = scalar_select %p41, %s42, %s43
      %p47 = pneg %p41
      %p48 = scmp.eq.s32.totalorder %s11, 3
      %p49 = por %p47, %p48
      %p50 = scmp.ne.s32.totalorder %s42, %s45
      %p51 = scmp.eq.s32.totalorder %s11, 0
      %p52 = por %p50, %p51
      %p53 = scmp.ne.s32.totalorder %s42, %s45
      %p54 = scmp.eq.s32.totalorder %s16, 3
      %p55 = por %p53, %p54
      %p56 = scmp.ne.s32.totalorder %s45, %s46
      %p57 = scmp.eq.s32.totalorder %s16, 0
      %p58 = por %p56, %p57
      %p59 = scmp.ne.s32.totalorder %s45, %s46
      %p60 = scmp.eq.s32.totalorder %s17, 3
      %p61 = por %p59, %p60
      %p63 = scmp.ne.s32.totalorder %s46, %s62
      %p64 = scmp.eq.s32.totalorder %s17, 0
      %p65 = por %p63, %p64
      %s66 = ssub.s32 %s20, %s29
      %s67 = ssub.s32 %s19, %s33
      %s68 = sor.u32 %s66, %s67
      %p69 = scmp.eq.s32.totalorder %s68, 0
      %s71 = sadd.s32 %s70, 1
      %s72 = scalar_select %p69, %s70, %s71
      %p75 = pneg %p69
      %p76 = scmp.eq.s32.totalorder %s11, 3
      %p77 = por %p75, %p76
      %p78 = scmp.ne.s32.totalorder %s70, %s73
      %p79 = scmp.eq.s32.totalorder %s11, 0
      %p80 = por %p78, %p79
      %p81 = scmp.ne.s32.totalorder %s70, %s73
      %p82 = scmp.eq.s32.totalorder %s16, 3
      %p83 = por %p81, %p82
      %p84 = scmp.ne.s32.totalorder %s73, %s74
      %p85 = scmp.eq.s32.totalorder %s16, 0
      %p86 = por %p84, %p85
      %p87 = scmp.ne.s32.totalorder %s73, %s74
      %p88 = scmp.eq.s32.totalorder %s17, 3
      %p89 = por %p87, %p88
      %p91 = scmp.ne.s32.totalorder %s74, %s90
      %p92 = scmp.eq.s32.totalorder %s17, 0
      %p93 = por %p91, %p92
      %s94 = ssub.s32 %s18, %s37
      %s95 = ssub.s32 %s19, %s33
      %s96 = sor.u32 %s94, %s95
      %p97 = scmp.eq.s32.totalorder %s96, 0
      %s99 = sadd.s32 %s98, 1
      %s100 = scalar_select %p97, %s98, %s99
      %p103 = pneg %p97
      %p104 = scmp.eq.s32.totalorder %s11, 3
      %p105 = por %p103, %p104
      %p106 = scmp.ne.s32.totalorder %s98, %s101
      %p107 = scmp.eq.s32.totalorder %s11, 0
      %p108 = por %p106, %p107
      %p109 = scmp.ne.s32.totalorder %s98, %s101
      %p110 = scmp.eq.s32.totalorder %s16, 3
      %p111 = por %p109, %p110
      %p112 = scmp.ne.s32.totalorder %s101, %s102
      %p113 = scmp.eq.s32.totalorder %s16, 0
      %p114 = por %p112, %p113
      %p115 = scmp.ne.s32.totalorder %s101, %s102
      %p116 = scmp.eq.s32.totalorder %s17, 3
      %p117 = por %p115, %p116
      %p119 = scmp.ne.s32.totalorder %s102, %s118
      %p120 = scmp.eq.s32.totalorder %s17, 0
      %p121 = por %p119, %p120
      %s122 = ssub.s32 %s18, %s37
      %s123 = ssub.s32 %s19, %s33
      %s124 = sor.u32 %s122, %s123
      %p125 = scmp.eq.s32.totalorder %s124, 0
      %s127 = sadd.s32 %s126, 1
      %s128 = scalar_select %p125, %s126, %s127
      %p131 = pneg %p125
      %p132 = scmp.eq.s32.totalorder %s11, 3
      %p133 = por %p131, %p132
      %p134 = scmp.ne.s32.totalorder %s126, %s129
      %p135 = scmp.eq.s32.totalorder %s11, 0
      %p136 = por %p134, %p135
      %p137 = scmp.ne.s32.totalorder %s126, %s129
      %p138 = scmp.eq.s32.totalorder %s16, 3
      %p139 = por %p137, %p138
      %p140 = scmp.ne.s32.totalorder %s129, %s130
      %p141 = scmp.eq.s32.totalorder %s16, 0
      %p142 = por %p140, %p141
      %p143 = scmp.ne.s32.totalorder %s129, %s130
      %p144 = scmp.eq.s32.totalorder %s17, 3
      %p145 = por %p143, %p144
      %p147 = scmp.ne.s32.totalorder %s130, %s146
      %p148 = scmp.eq.s32.totalorder %s17, 0
      %p149 = por %p147, %p148
      %s150 = ssub.s32 %s18, %s37
      %s151 = ssub.s32 %s19, %s33
      %s152 = sor.u32 %s150, %s151
      %p153 = scmp.eq.s32.totalorder %s152, 0
      %s155 = sadd.s32 %s154, 1
      %s156 = scalar_select %p153, %s154, %s155
      %p159 = pneg %p153
      %p160 = scmp.eq.s32.totalorder %s11, 3
      %p161 = por %p159, %p160
      %p162 = scmp.ne.s32.totalorder %s154, %s157
      %p163 = scmp.eq.s32.totalorder %s11, 0
      %p164 = por %p162, %p163
      %p165 = scmp.ne.s32.totalorder %s154, %s157
      %p166 = scmp.eq.s32.totalorder %s16, 3
      %p167 = por %p165, %p166
      %p168 = scmp.ne.s32.totalorder %s157, %s158
      %p169 = scmp.eq.s32.totalorder %s16, 0
      %p170 = por %p168, %p169
      %p171 = scmp.ne.s32.totalorder %s157, %s158
      %p172 = scmp.eq.s32.totalorder %s17, 3
      %p173 = por %p171, %p172
      %p175 = scmp.ne.s32.totalorder %s158, %s174
      %p176 = scmp.eq.s32.totalorder %s17, 0
      %p177 = por %p175, %p176
      %p178 = scmp.le.s32.totalorder 1, %s11
      %p179 = scmp.lt.s32.totalorder %s11, 5
      %p180 = pnand %p178, %p179
      %p181 = pneg %p180
      // Predicated region
      $region9: #{_lambda_.11} parent=5 // pred_check
        _
      $region10: #{_lambda_.11} parent=5 // pred_check_branch
        %183 = sbr.rel (%p180) target = $region12
      $region11: #{_lambda_.11} parent=5 // pred_region
        %s184 = ssub.s32 %s11, 1
      $region12: #{_lambda_.11} parent=5 // pred_fallthru
        _
      %p185 = scmp.lt.s32.totalorder %s11, 4
      // Predicated region
      $region13: #{_lambda_.11} parent=5 // pred_check
        %p186 = pneg %p185
      $region14: #{_lambda_.11} parent=5 // pred_check_branch
        %188 = sbr.rel (%p186) target = $region16
      $region15: #{_lambda_.11} parent=5 // pred_region
        // Predicated region
        $region17: #{_lambda_.11} parent=15 // pred_check
          %p189 = pneg %p52
        $region18: #{_lambda_.11} parent=15 // pred_check_branch
          %191 = sbr.rel (%p189) target = $region20
        $region19: #{_lambda_.11} parent=15 // pred_region
          %s192 = sand.u32 %s42, 1
          %s193 = sand.u32 %s42, 1
          %s194 = smul.addr %s193, 64
          %s195 = scalar_lea.vmem [#allocation2], %s194
          %s196 = smul.u32 4, %s18
          %s197 = smul.u32 4, %s20
          %s198 = smul.addr %s196, 16
          %s199 = sadd.s32 %s197, %s198
          %s200 = smul.addr %s199, 4
          %s201 = scalar_lea.vmem %s0, %s200
          // Predicated region
          $region21: #{_lambda_.11} parent=19 // pred_check
            _
          $region22: #{_lambda_.11} parent=19 // pred_check_branch
            %203 = sbr.rel (0) target = $region24
          $region23: #{_lambda_.11} parent=19 // pred_region
            // Predicated region
            $region25: #{_lambda_.11} parent=23 // pred_check
              _
            $region26: #{_lambda_.11} parent=23 // pred_check_branch
              %205 = sbr.rel (0) target = $region28
            $region27: #{_lambda_.11} parent=23 // pred_region
              loop: start=0, step=1, limit=1
              $region29: #{_lambda_.11} parent=27 // loop_pre_header
                _
              $region30: #{_lambda_.11} parent=27 // loop_header
                %s207 = sphi 0, %s211
                %p208 = scmp.ge.s32.totalorder %s207, 1
                %s212 = sphi %s201, %s201
                %s213 = sphi %s195, %s195
              $region31: #{_lambda_.11} parent=27 // loop_header_branch
                %210 = sbr.rel (%p208) target = $region35
              $region32: #{_lambda_.11} parent=27 // loop_body
                %v214 = vld [vmem:[%s212] sm:$0xff]
                %215 = vst [vmem:[%s213] sm:$0xff] %v214
                %v216 = vld [vmem:[%s212 + $0x8] sm:$0xff]
                %217 = vst [vmem:[%s213 + $0x8] sm:$0xff] %v216
                %v218 = vld [vmem:[%s212 + $0x40] sm:$0xff]
                %219 = vst [vmem:[%s213 + $0x10] sm:$0xff] %v218
                %v220 = vld [vmem:[%s212 + $0x48] sm:$0xff]
                %221 = vst [vmem:[%s213 + $0x18] sm:$0xff] %v220
                %v222 = vld [vmem:[%s212 + $0x80] sm:$0xff]
                %223 = vst [vmem:[%s213 + $0x20] sm:$0xff] %v222
                %v224 = vld [vmem:[%s212 + $0x88] sm:$0xff]
                %225 = vst [vmem:[%s213 + $0x28] sm:$0xff] %v224
                %v226 = vld [vmem:[%s212 + $0xc0] sm:$0xff]
                %227 = vst [vmem:[%s213 + $0x30] sm:$0xff] %v226
                %v228 = vld [vmem:[%s212 + $0xc8] sm:$0xff]
                %229 = vst [vmem:[%s213 + $0x38] sm:$0xff] %v228
              $region33: #{_lambda_.11} parent=27 // loop_footer
                %s211 = sadd.s32 1, %s207
              $region34: #{_lambda_.11} parent=27 // loop_footer_branch
                %206 = sbr.rel target = $region30
              $region35: #{_lambda_.11} parent=27 // loop_exit
                _
            $region28: #{_lambda_.11} parent=23 // pred_fallthru
              _
            // Predicated region
            $region36: #{_lambda_.11} parent=23 // pred_check
              _
            $region37: #{_lambda_.11} parent=23 // pred_check_branch
              %231 = sbr.rel target = $region39
            $region38: #{_lambda_.11} parent=23 // pred_region
              _
            $region39: #{_lambda_.11} parent=23 // pred_fallthru
              _
          $region24: #{_lambda_.11} parent=19 // pred_fallthru
            _
          %232 = vnop
        $region20: #{_lambda_.11} parent=15 // pred_fallthru
          _
        // Predicated region
        $region40: #{_lambda_.11} parent=15 // pred_check
          %p233 = pneg %p80
        $region41: #{_lambda_.11} parent=15 // pred_check_branch
          %235 = sbr.rel (%p233) target = $region43
        $region42: #{_lambda_.11} parent=15 // pred_region
          %s236 = smul.u32 64, %s20
          %s237 = smul.u32 2, %s19
          %p238 = scmp.lt.s32.totalorder %s236, 255
          %s239 = scalar_select %p238, %s236, 255
          %p240 = scmp.lt.s32.totalorder %s237, 1
          %s241 = scalar_select %p240, %s237, 1
          %s242 = smul.addr %s239, 2
          %s243 = sadd.s32 %s241, %s242
          %s244 = smul.addr %s243, 4
          %s245 = scalar_lea.vmem %s1, %s244
          %s246 = smul.u32 64, %s20
          %s247 = smul.u32 2, %s19
        $region43: #{_lambda_.11} parent=15 // pred_fallthru
          _
      $region16: #{_lambda_.11} parent=5 // pred_fallthru
        _
      %p248 = scmp.le.s32.totalorder 1, %s11
      %p249 = scmp.lt.s32.totalorder %s11, 5
      %p250 = pnand %p248, %p249
      %p251 = pneg %p250
      // Predicated region
      $region44: #{_lambda_.11} parent=5 // pred_check
        _
      $region45: #{_lambda_.11} parent=5 // pred_check_branch
        %253 = sbr.rel (%p250) target = $region47
      $region46: #{_lambda_.11} parent=5 // pred_region
        %s254 = ssub.s32 %s11, 1
        %s255 = sand.u32 %s45, 1
        %s256 = sand.u32 %s45, 1
        %s257 = smul.addr %s256, 64
        %s258 = scalar_lea.vmem [#allocation2], %s257
        // Predicated region
        $region48: #{_lambda_.11} parent=46 // pred_check
          %p259 = pneg %p58
        $region49: #{_lambda_.11} parent=46 // pred_check_branch
          %261 = sbr.rel (%p259) target = $region51
        $region50: #{_lambda_.11} parent=46 // pred_region
          _
        $region51: #{_lambda_.11} parent=46 // pred_fallthru
          _
        %s262 = sand.u32 %s45, 1
        %s263 = sand.u32 %s45, 1
        %s264 = smul.addr %s263, 64
        %s265 = scalar_lea.vmem [#allocation2], %s264
        %p266 = pneg %p58
        %p267 = pneg %p55
        %s268 = smul.u32 64, %s23
        %s269 = smul.u32 2, %s22
        %p270 = scmp.lt.s32.totalorder %s268, 255
        %s271 = scalar_select %p270, %s268, 255
        %p272 = scmp.lt.s32.totalorder %s269, 1
        %s273 = scalar_select %p272, %s269, 1
        %s274 = smul.addr %s271, 2
        %s275 = sadd.s32 %s273, %s274
        %s276 = smul.addr %s275, 4
        %s277 = scalar_lea.vmem %s1, %s276
        %p278 = pneg %p86
        %p279 = pneg %p83
        %p280 = pneg %p114
        %p281 = pneg %p111
        %s282 = smul.u32 4, %s21
        %s283 = smul.u32 2, %s22
        %p284 = scmp.lt.s32.totalorder %s282, 3
        %s285 = scalar_select %p284, %s282, 3
        %p286 = scmp.lt.s32.totalorder %s283, 1
        %s287 = scalar_select %p286, %s283, 1
        %s288 = smul.addr %s285, 2
        %s289 = sadd.s32 %s287, %s288
        %s290 = smul.addr %s289, 8
        %s291 = scalar_lea.vmem %s2, %s290
        %p292 = pneg %p142
        %p293 = pneg %p139
        %s294 = smul.u32 2, %s22
        %p295 = scmp.lt.s32.totalorder %s21, 0
        %s296 = scalar_select %p295, %s21, 0
        %p297 = scmp.lt.s32.totalorder %s294, 1
        %s298 = scalar_select %p297, %s294, 1
        %s299 = smul.addr %s296, 2
        %s300 = sadd.s32 %s298, %s299
        %s301 = smul.addr %s300, 8
        %s302 = scalar_lea.vmem %s3, %s301
        %p303 = pneg %p170
        %p304 = pneg %p167
        %s305 = smul.u32 2, %s22
        %p306 = scmp.lt.s32.totalorder %s21, 0
        %s307 = scalar_select %p306, %s21, 0
        %p308 = scmp.lt.s32.totalorder %s305, 1
        %s309 = scalar_select %p308, %s305, 1
        %s310 = smul.addr %s307, 2
        %s311 = sadd.s32 %s309, %s310
        %s312 = smul.addr %s311, 8
        %s313 = scalar_lea.vmem %s4, %s312
        %s314 = smul.u32 4, %s21
        %s315 = smul.u32 4, %s23
        %s316 = smul.u32 64, %s23
        %s317 = smul.u32 2, %s22
        %p318 = scmp.lt.s32.totalorder %s316, 255
        %s319 = scalar_select %p318, %s316, 255
        %p320 = scmp.lt.s32.totalorder %s317, 1
        %s321 = scalar_select %p320, %s317, 1
        %s322 = smul.addr %s319, 2
        %s323 = sadd.s32 %s321, %s322
        %s324 = smul.addr %s323, 4
        %s325 = scalar_lea.vmem %s1, %s324
        %s326 = smul.u32 64, %s23
        %s327 = smul.u32 2, %s22
        %s328 = smul.u32 4, %s21
        %s329 = smul.u32 2, %s22
        %p330 = scmp.lt.s32.totalorder %s328, 3
        %s331 = scalar_select %p330, %s328, 3
        %p332 = scmp.lt.s32.totalorder %s329, 1
        %s333 = scalar_select %p332, %s329, 1
        %s334 = smul.addr %s331, 2
        %s335 = sadd.s32 %s333, %s334
        %s336 = smul.addr %s335, 8
        %s337 = scalar_lea.vmem %s2, %s336
        %s338 = smul.u32 4, %s21
        %s339 = smul.u32 2, %s22
        %s340 = smul.u32 2, %s22
        %p341 = scmp.lt.s32.totalorder %s21, 0
        %s342 = scalar_select %p341, %s21, 0
        %p343 = scmp.lt.s32.totalorder %s340, 1
        %s344 = scalar_select %p343, %s340, 1
        %s345 = smul.addr %s342, 2
        %s346 = sadd.s32 %s344, %s345
        %s347 = smul.addr %s346, 8
        %s348 = scalar_lea.vmem %s3, %s347
        %s349 = smul.u32 2, %s22
        %s350 = smul.u32 2, %s22
        %p351 = scmp.lt.s32.totalorder %s21, 0
        %s352 = scalar_select %p351, %s21, 0
        %p353 = scmp.lt.s32.totalorder %s350, 1
        %s354 = scalar_select %p353, %s350, 1
        %s355 = smul.addr %s352, 2
        %s356 = sadd.s32 %s354, %s355
        %s357 = smul.addr %s356, 8
        %s358 = scalar_lea.vmem %s4, %s357
        %s359 = smul.u32 2, %s22
        %p360 = scmp.eq.s32.totalorder %s23, 0
        // Predicated region
        $region52: #{_lambda_.11} parent=46 // pred_check
          %p361 = pneg %p360
        $region53: #{_lambda_.11} parent=46 // pred_check_branch
          %363 = sbr.rel (%p361) target = $region55
        $region54: #{_lambda_.11} parent=46 // pred_region
          %364 = vst [vmem:[%s337] sm:$0xff] 0.0
          %365 = vst [vmem:[%s337 + $0x8] sm:$0xff] 0.0
          %366 = vst [vmem:[%s337 + $0x10] sm:$0xff] 0.0
          %367 = vst [vmem:[%s337 + $0x18] sm:$0xff] 0.0
          %368 = vst [vmem:[%s337 + $0x20] sm:$0xff] 0.0
          %369 = vst [vmem:[%s337 + $0x28] sm:$0xff] 0.0
          %370 = vst [vmem:[%s337 + $0x30] sm:$0xff] 0.0
          %371 = vst [vmem:[%s337 + $0x38] sm:$0xff] 0.0
        $region55: #{_lambda_.11} parent=46 // pred_fallthru
          _
        %v372 = vld [vmem:[%s337] sm:$0xff]
        %v373 = vld [vmem:[%s337 + $0x8] sm:$0xff]
        %v374 = vld [vmem:[%s337 + $0x10] sm:$0xff]
        %v375 = vld [vmem:[%s337 + $0x18] sm:$0xff]
        %v376 = vld [vmem:[%s337 + $0x20] sm:$0xff]
        %v377 = vld [vmem:[%s337 + $0x28] sm:$0xff]
        %v378 = vld [vmem:[%s337 + $0x30] sm:$0xff]
        %v379 = vld [vmem:[%s337 + $0x38] sm:$0xff]
        %v380 = vld [vmem:[%s258] sm:$0xff]
        %v381 = vld [vmem:[%s258 + $0x8] sm:$0xff]
        %v382 = vld [vmem:[%s258 + $0x10] sm:$0xff]
        %v383 = vld [vmem:[%s258 + $0x18] sm:$0xff]
        %v384 = vld [vmem:[%s258 + $0x20] sm:$0xff]
        %v385 = vld [vmem:[%s258 + $0x28] sm:$0xff]
        %v386 = vld [vmem:[%s258 + $0x30] sm:$0xff]
        %v387 = vld [vmem:[%s258 + $0x38] sm:$0xff]
        %v388 = vld [vmem:[%s325] sm:$0xff]
        %v389 = vld [vmem:[%s325 + $0x8] sm:$0xff]
        %v390 = vld [vmem:[%s325 + $0x10] sm:$0xff]
        %v391 = vld [vmem:[%s325 + $0x18] sm:$0xff]
        %v392 = vld [vmem:[%s325 + $0x20] sm:$0xff]
        %v393 = vld [vmem:[%s325 + $0x28] sm:$0xff]
        %v394 = vld [vmem:[%s325 + $0x30] sm:$0xff]
        %v395 = vld [vmem:[%s325 + $0x38] sm:$0xff]
        %v396 = vld [vmem:[%s325 + $0x40] sm:$0xff]
        %v397 = vld [vmem:[%s325 + $0x48] sm:$0xff]
        %v398 = vld [vmem:[%s325 + $0x50] sm:$0xff]
        %v399 = vld [vmem:[%s325 + $0x58] sm:$0xff]
        %v400 = vld [vmem:[%s325 + $0x60] sm:$0xff]
        %v401 = vld [vmem:[%s325 + $0x68] sm:$0xff]
        %v402 = vld [vmem:[%s325 + $0x70] sm:$0xff]
        %v403 = vld [vmem:[%s325 + $0x78] sm:$0xff]
        %v404 = vld [vmem:[%s325 + $0x80] sm:$0xff]
        %v405 = vld [vmem:[%s325 + $0x88] sm:$0xff]
        %v406 = vld [vmem:[%s325 + $0x90] sm:$0xff]
        %v407 = vld [vmem:[%s325 + $0x98] sm:$0xff]
        %v408 = vld [vmem:[%s325 + $0xa0] sm:$0xff]
        %v409 = vld [vmem:[%s325 + $0xa8] sm:$0xff]
        %v410 = vld [vmem:[%s325 + $0xb0] sm:$0xff]
        %v411 = vld [vmem:[%s325 + $0xb8] sm:$0xff]
        %v412 = vld [vmem:[%s325 + $0xc0] sm:$0xff]
        %v413 = vld [vmem:[%s325 + $0xc8] sm:$0xff]
        %v414 = vld [vmem:[%s325 + $0xd0] sm:$0xff]
        %v415 = vld [vmem:[%s325 + $0xd8] sm:$0xff]
        %v416 = vld [vmem:[%s325 + $0xe0] sm:$0xff]
        %v417 = vld [vmem:[%s325 + $0xe8] sm:$0xff]
        %v418 = vld [vmem:[%s325 + $0xf0] sm:$0xff]
        %v419 = vld [vmem:[%s325 + $0xf8] sm:$0xff]
        %v420 = vld [vmem:[%s325 + $0x100] sm:$0xff]
        %v421 = vld [vmem:[%s325 + $0x108] sm:$0xff]
        %v422 = vld [vmem:[%s325 + $0x110] sm:$0xff]
        %v423 = vld [vmem:[%s325 + $0x118] sm:$0xff]
        %v424 = vld [vmem:[%s325 + $0x120] sm:$0xff]
        %v425 = vld [vmem:[%s325 + $0x128] sm:$0xff]
        %v426 = vld [vmem:[%s325 + $0x130] sm:$0xff]
        %v427 = vld [vmem:[%s325 + $0x138] sm:$0xff]
        %v428 = vld [vmem:[%s325 + $0x140] sm:$0xff]
        %v429 = vld [vmem:[%s325 + $0x148] sm:$0xff]
        %v430 = vld [vmem:[%s325 + $0x150] sm:$0xff]
        %v431 = vld [vmem:[%s325 + $0x158] sm:$0xff]
        %v432 = vld [vmem:[%s325 + $0x160] sm:$0xff]
        %v433 = vld [vmem:[%s325 + $0x168] sm:$0xff]
        %v434 = vld [vmem:[%s325 + $0x170] sm:$0xff]
        %v435 = vld [vmem:[%s325 + $0x178] sm:$0xff]
        %v436 = vld [vmem:[%s325 + $0x180] sm:$0xff]
        %v437 = vld [vmem:[%s325 + $0x188] sm:$0xff]
        %v438 = vld [vmem:[%s325 + $0x190] sm:$0xff]
        %v439 = vld [vmem:[%s325 + $0x198] sm:$0xff]
        %v440 = vld [vmem:[%s325 + $0x1a0] sm:$0xff]
        %v441 = vld [vmem:[%s325 + $0x1a8] sm:$0xff]
        %v442 = vld [vmem:[%s325 + $0x1b0] sm:$0xff]
        %v443 = vld [vmem:[%s325 + $0x1b8] sm:$0xff]
        %v444 = vld [vmem:[%s325 + $0x1c0] sm:$0xff]
        %v445 = vld [vmem:[%s325 + $0x1c8] sm:$0xff]
        %v446 = vld [vmem:[%s325 + $0x1d0] sm:$0xff]
        %v447 = vld [vmem:[%s325 + $0x1d8] sm:$0xff]
        %v448 = vld [vmem:[%s325 + $0x1e0] sm:$0xff]
        %v449 = vld [vmem:[%s325 + $0x1e8] sm:$0xff]
        %v450 = vld [vmem:[%s325 + $0x1f0] sm:$0xff]
        %v451 = vld [vmem:[%s325 + $0x1f8] sm:$0xff]
        %v460 = vunpack.c.l.b16 %v380
        %v461 = vunpack.c.h.b16 %v380
        %v462 = vunpack.c.l.b16 %v381
        %v463 = vunpack.c.h.b16 %v381
        %v464 = vunpack.c.l.b16 %v382
        %v465 = vunpack.c.h.b16 %v382
        %v466 = vunpack.c.l.b16 %v383
        %v467 = vunpack.c.h.b16 %v383
        %v468 = vunpack.c.l.b16 %v384
        %v469 = vunpack.c.h.b16 %v384
        %v470 = vunpack.c.l.b16 %v385
        %v471 = vunpack.c.h.b16 %v385
        %v472 = vunpack.c.l.b16 %v386
        %v473 = vunpack.c.h.b16 %v386
        %v474 = vunpack.c.l.b16 %v387
        %v475 = vunpack.c.h.b16 %v387
        %v476 = vpack.c.b16 %v464, %v460
        %v477 = vpack.c.b16 %v465, %v461
        %v478 = vpack.c.b16 %v466, %v462
        %v479 = vpack.c.b16 %v467, %v463
        %v480 = vpack.c.b16 %v472, %v468
        %v481 = vpack.c.b16 %v473, %v469
        %v482 = vpack.c.b16 %v474, %v470
        %v483 = vpack.c.b16 %v475, %v471
        %v556 = vunpack.c.l.b16 %v388
        %v557 = vunpack.c.h.b16 %v388
        %v558 = vunpack.c.l.b16 %v389
        %v559 = vunpack.c.h.b16 %v389
        %v560 = vunpack.c.l.b16 %v390
        %v561 = vunpack.c.h.b16 %v390
        %v562 = vunpack.c.l.b16 %v391
        %v563 = vunpack.c.h.b16 %v391
        %v564 = vunpack.c.l.b16 %v392
        %v565 = vunpack.c.h.b16 %v392
        %v566 = vunpack.c.l.b16 %v393
        %v567 = vunpack.c.h.b16 %v393
        %v568 = vunpack.c.l.b16 %v394
        %v569 = vunpack.c.h.b16 %v394
        %v570 = vunpack.c.l.b16 %v395
        %v571 = vunpack.c.h.b16 %v395
        %v572 = vunpack.c.l.b16 %v396
        %v573 = vunpack.c.h.b16 %v396
        %v574 = vunpack.c.l.b16 %v397
        %v575 = vunpack.c.h.b16 %v397
        %v576 = vunpack.c.l.b16 %v398
        %v577 = vunpack.c.h.b16 %v398
        %v578 = vunpack.c.l.b16 %v399
        %v579 = vunpack.c.h.b16 %v399
        %v580 = vunpack.c.l.b16 %v400
        %v581 = vunpack.c.h.b16 %v400
        %v582 = vunpack.c.l.b16 %v401
        %v583 = vunpack.c.h.b16 %v401
        %v584 = vunpack.c.l.b16 %v402
        %v585 = vunpack.c.h.b16 %v402
        %v586 = vunpack.c.l.b16 %v403
        %v587 = vunpack.c.h.b16 %v403
        %v588 = vunpack.c.l.b16 %v404
        %v589 = vunpack.c.h.b16 %v404
        %v590 = vunpack.c.l.b16 %v405
        %v591 = vunpack.c.h.b16 %v405
        %v592 = vunpack.c.l.b16 %v406
        %v593 = vunpack.c.h.b16 %v406
        %v594 = vunpack.c.l.b16 %v407
        %v595 = vunpack.c.h.b16 %v407
        %v596 = vunpack.c.l.b16 %v408
        %v597 = vunpack.c.h.b16 %v408
        %v598 = vunpack.c.l.b16 %v409
        %v599 = vunpack.c.h.b16 %v409
        %v600 = vunpack.c.l.b16 %v410
        %v601 = vunpack.c.h.b16 %v410
        %v602 = vunpack.c.l.b16 %v411
        %v603 = vunpack.c.h.b16 %v411
        %v604 = vunpack.c.l.b16 %v412
        %v605 = vunpack.c.h.b16 %v412
        %v606 = vunpack.c.l.b16 %v413
        %v607 = vunpack.c.h.b16 %v413
        %v608 = vunpack.c.l.b16 %v414
        %v609 = vunpack.c.h.b16 %v414
        %v610 = vunpack.c.l.b16 %v415
        %v611 = vunpack.c.h.b16 %v415
        %v612 = vunpack.c.l.b16 %v416
        %v613 = vunpack.c.h.b16 %v416
        %v614 = vunpack.c.l.b16 %v417
        %v615 = vunpack.c.h.b16 %v417
        %v616 = vunpack.c.l.b16 %v418
        %v617 = vunpack.c.h.b16 %v418
        %v618 = vunpack.c.l.b16 %v419
        %v619 = vunpack.c.h.b16 %v419
        %v620 = vunpack.c.l.b16 %v420
        %v621 = vunpack.c.h.b16 %v420
        %v622 = vunpack.c.l.b16 %v421
        %v623 = vunpack.c.h.b16 %v421
        %v624 = vunpack.c.l.b16 %v422
        %v625 = vunpack.c.h.b16 %v422
        %v626 = vunpack.c.l.b16 %v423
        %v627 = vunpack.c.h.b16 %v423
        %v628 = vunpack.c.l.b16 %v424
        %v629 = vunpack.c.h.b16 %v424
        %v630 = vunpack.c.l.b16 %v425
        %v631 = vunpack.c.h.b16 %v425
        %v632 = vunpack.c.l.b16 %v426
        %v633 = vunpack.c.h.b16 %v426
        %v634 = vunpack.c.l.b16 %v427
        %v635 = vunpack.c.h.b16 %v427
        %v636 = vunpack.c.l.b16 %v428
        %v637 = vunpack.c.h.b16 %v428
        %v638 = vunpack.c.l.b16 %v429
        %v639 = vunpack.c.h.b16 %v429
        %v640 = vunpack.c.l.b16 %v430
        %v641 = vunpack.c.h.b16 %v430
        %v642 = vunpack.c.l.b16 %v431
        %v643 = vunpack.c.h.b16 %v431
        %v644 = vunpack.c.l.b16 %v432
        %v645 = vunpack.c.h.b16 %v432
        %v646 = vunpack.c.l.b16 %v433
        %v647 = vunpack.c.h.b16 %v433
        %v648 = vunpack.c.l.b16 %v434
        %v649 = vunpack.c.h.b16 %v434
        %v650 = vunpack.c.l.b16 %v435
        %v651 = vunpack.c.h.b16 %v435
        %v652 = vunpack.c.l.b16 %v436
        %v653 = vunpack.c.h.b16 %v436
        %v654 = vunpack.c.l.b16 %v437
        %v655 = vunpack.c.h.b16 %v437
        %v656 = vunpack.c.l.b16 %v438
        %v657 = vunpack.c.h.b16 %v438
        %v658 = vunpack.c.l.b16 %v439
        %v659 = vunpack.c.h.b16 %v439
        %v660 = vunpack.c.l.b16 %v440
        %v661 = vunpack.c.h.b16 %v440
        %v662 = vunpack.c.l.b16 %v441
        %v663 = vunpack.c.h.b16 %v441
        %v664 = vunpack.c.l.b16 %v442
        %v665 = vunpack.c.h.b16 %v442
        %v666 = vunpack.c.l.b16 %v443
        %v667 = vunpack.c.h.b16 %v443
        %v668 = vunpack.c.l.b16 %v444
        %v669 = vunpack.c.h.b16 %v444
        %v670 = vunpack.c.l.b16 %v445
        %v671 = vunpack.c.h.b16 %v445
        %v672 = vunpack.c.l.b16 %v446
        %v673 = vunpack.c.h.b16 %v446
        %v674 = vunpack.c.l.b16 %v447
        %v675 = vunpack.c.h.b16 %v447
        %v676 = vunpack.c.l.b16 %v448
        %v677 = vunpack.c.h.b16 %v448
        %v678 = vunpack.c.l.b16 %v449
        %v679 = vunpack.c.h.b16 %v449
        %v680 = vunpack.c.l.b16 %v450
        %v681 = vunpack.c.h.b16 %v450
        %v682 = vunpack.c.l.b16 %v451
        %v683 = vunpack.c.h.b16 %v451
        %v684 = vpack.c.b16 %v558, %v556
        %v685 = vpack.c.b16 %v559, %v557
        %v686 = vpack.c.b16 %v562, %v560
        %v687 = vpack.c.b16 %v563, %v561
        %v688 = vpack.c.b16 %v566, %v564
        %v689 = vpack.c.b16 %v567, %v565
        %v690 = vpack.c.b16 %v570, %v568
        %v691 = vpack.c.b16 %v571, %v569
        %v692 = vpack.c.b16 %v574, %v572
        %v693 = vpack.c.b16 %v575, %v573
        %v694 = vpack.c.b16 %v578, %v576
        %v695 = vpack.c.b16 %v579, %v577
        %v696 = vpack.c.b16 %v582, %v580
        %v697 = vpack.c.b16 %v583, %v581
        %v698 = vpack.c.b16 %v586, %v584
        %v699 = vpack.c.b16 %v587, %v585
        %v700 = vpack.c.b16 %v590, %v588
        %v701 = vpack.c.b16 %v591, %v589
        %v702 = vpack.c.b16 %v594, %v592
        %v703 = vpack.c.b16 %v595, %v593
        %v704 = vpack.c.b16 %v598, %v596
        %v705 = vpack.c.b16 %v599, %v597
        %v706 = vpack.c.b16 %v602, %v600
        %v707 = vpack.c.b16 %v603, %v601
        %v708 = vpack.c.b16 %v606, %v604
        %v709 = vpack.c.b16 %v607, %v605
        %v710 = vpack.c.b16 %v610, %v608
        %v711 = vpack.c.b16 %v611, %v609
        %v712 = vpack.c.b16 %v614, %v612
        %v713 = vpack.c.b16 %v615, %v613
        %v714 = vpack.c.b16 %v618, %v616
        %v715 = vpack.c.b16 %v619, %v617
        %v716 = vpack.c.b16 %v622, %v620
        %v717 = vpack.c.b16 %v623, %v621
        %v718 = vpack.c.b16 %v626, %v624
        %v719 = vpack.c.b16 %v627, %v625
        %v720 = vpack.c.b16 %v630, %v628
        %v721 = vpack.c.b16 %v631, %v629
        %v722 = vpack.c.b16 %v634, %v632
        %v723 = vpack.c.b16 %v635, %v633
        %v724 = vpack.c.b16 %v638, %v636
        %v725 = vpack.c.b16 %v639, %v637
        %v726 = vpack.c.b16 %v642, %v640
        %v727 = vpack.c.b16 %v643, %v641
        %v728 = vpack.c.b16 %v646, %v644
        %v729 = vpack.c.b16 %v647, %v645
        %v730 = vpack.c.b16 %v650, %v648
        %v731 = vpack.c.b16 %v651, %v649
        %v732 = vpack.c.b16 %v654, %v652
        %v733 = vpack.c.b16 %v655, %v653
        %v734 = vpack.c.b16 %v658, %v656
        %v735 = vpack.c.b16 %v659, %v657
        %v736 = vpack.c.b16 %v662, %v660
        %v737 = vpack.c.b16 %v663, %v661
        %v738 = vpack.c.b16 %v666, %v664
        %v739 = vpack.c.b16 %v667, %v665
        %v740 = vpack.c.b16 %v670, %v668
        %v741 = vpack.c.b16 %v671, %v669
        %v742 = vpack.c.b16 %v674, %v672
        %v743 = vpack.c.b16 %v675, %v673
        %v744 = vpack.c.b16 %v678, %v676
        %v745 = vpack.c.b16 %v679, %v677
        %v746 = vpack.c.b16 %v682, %v680
        %v747 = vpack.c.b16 %v683, %v681
        %812 = vmatprep.subr.bf16.mxu0 %v685
        %813 = vmatpush1.bf16.msra.mxu0 %v684
        %814 = vmatprep.subr.bf16.mxu0 %v687
        %815 = vmatpush1.bf16.msra.mxu0 %v686
        %816 = vmatprep.subr.bf16.mxu0 %v689
        %817 = vmatpush1.bf16.msra.mxu0 %v688
        %818 = vmatprep.subr.bf16.mxu0 %v691
        %819 = vmatpush1.bf16.msra.mxu0 %v690
        %820 = vmatprep.subr.bf16.mxu0 %v693
        %821 = vmatpush1.bf16.msra.mxu0 %v692
        %822 = vmatprep.subr.bf16.mxu0 %v695
        %823 = vmatpush1.bf16.msra.mxu0 %v694
        %824 = vmatprep.subr.bf16.mxu0 %v697
        %825 = vmatpush1.bf16.msra.mxu0 %v696
        %826 = vmatprep.subr.bf16.mxu0 %v699
        %827 = vmatpush1.bf16.msra.mxu0 %v698
        %828 = vmatprep.subr.bf16.mxu0 %v701
        %829 = vmatpush1.bf16.msra.mxu0 %v700
        %830 = vmatprep.subr.bf16.mxu0 %v703
        %831 = vmatpush1.bf16.msra.mxu0 %v702
        %832 = vmatprep.subr.bf16.mxu0 %v705
        %833 = vmatpush1.bf16.msra.mxu0 %v704
        %834 = vmatprep.subr.bf16.mxu0 %v707
        %835 = vmatpush1.bf16.msra.mxu0 %v706
        %836 = vmatprep.subr.bf16.mxu0 %v709
        %837 = vmatpush1.bf16.msra.mxu0 %v708
        %838 = vmatprep.subr.bf16.mxu0 %v711
        %839 = vmatpush1.bf16.msra.mxu0 %v710
        %840 = vmatprep.subr.bf16.mxu0 %v713
        %841 = vmatpush1.bf16.msra.mxu0 %v712
        %842 = vmatprep.subr.bf16.mxu0 %v715
        %843 = vmatpush1.bf16.msra.mxu0 %v714
        %844 = vmatprep.mubr.bf16.mxu0 %v477
        %845 = vmatmul.mubr.bf16.gmra.mrb[0].mxu0 %v476
        %v846 = vpop.f32.mrb[0].mxu0
        %v847 = vadd.f32 0.0, %v846
        %v848 = vpop.f32.mrb[0].mxu0
        %v849 = vadd.f32 0.0, %v848
        %v850 = vpop.f32.mrb[0].mxu0
        %v851 = vadd.f32 0.0, %v850
        %v852 = vpop.f32.mrb[0].mxu0
        %v853 = vadd.f32 0.0, %v852
        %854 = vmatprep.mubr.bf16.mxu0 %v481
        %855 = vmatmul.mubr.bf16.gmra.mrb[0].mxu0 %v480
        %v856 = vpop.f32.mrb[0].mxu0
        %v857 = vadd.f32 0.0, %v856
        %v858 = vpop.f32.mrb[0].mxu0
        %v859 = vadd.f32 0.0, %v858
        %v860 = vpop.f32.mrb[0].mxu0
        %v861 = vadd.f32 0.0, %v860
        %v862 = vpop.f32.mrb[0].mxu0
        %v863 = vadd.f32 0.0, %v862
        %864 = vdwg.mxu0
        %865 = vmatprep.subr.bf16.mxu0 %v717
        %866 = vmatpush1.bf16.msra.mxu0 %v716
        %867 = vmatprep.subr.bf16.mxu0 %v719
        %868 = vmatpush1.bf16.msra.mxu0 %v718
        %869 = vmatprep.subr.bf16.mxu0 %v721
        %870 = vmatpush1.bf16.msra.mxu0 %v720
        %871 = vmatprep.subr.bf16.mxu0 %v723
        %872 = vmatpush1.bf16.msra.mxu0 %v722
        %873 = vmatprep.subr.bf16.mxu0 %v725
        %874 = vmatpush1.bf16.msra.mxu0 %v724
        %875 = vmatprep.subr.bf16.mxu0 %v727
        %876 = vmatpush1.bf16.msra.mxu0 %v726
        %877 = vmatprep.subr.bf16.mxu0 %v729
        %878 = vmatpush1.bf16.msra.mxu0 %v728
        %879 = vmatprep.subr.bf16.mxu0 %v731
        %880 = vmatpush1.bf16.msra.mxu0 %v730
        %881 = vmatprep.subr.bf16.mxu0 %v733
        %882 = vmatpush1.bf16.msra.mxu0 %v732
        %883 = vmatprep.subr.bf16.mxu0 %v735
        %884 = vmatpush1.bf16.msra.mxu0 %v734
        %885 = vmatprep.subr.bf16.mxu0 %v737
        %886 = vmatpush1.bf16.msra.mxu0 %v736
        %887 = vmatprep.subr.bf16.mxu0 %v739
        %888 = vmatpush1.bf16.msra.mxu0 %v738
        %889 = vmatprep.subr.bf16.mxu0 %v741
        %890 = vmatpush1.bf16.msra.mxu0 %v740
        %891 = vmatprep.subr.bf16.mxu0 %v743
        %892 = vmatpush1.bf16.msra.mxu0 %v742
        %893 = vmatprep.subr.bf16.mxu0 %v745
        %894 = vmatpush1.bf16.msra.mxu0 %v744
        %895 = vmatprep.subr.bf16.mxu0 %v747
        %896 = vmatpush1.bf16.msra.mxu0 %v746
        %897 = vmatprep.mubr.bf16.mxu0 %v479
        %898 = vmatmul.mubr.bf16.gmra.mrb[0].mxu0 %v478
        %v899 = vpop.f32.mrb[0].mxu0
        %v900 = vadd.f32 %v847, %v899
        %v901 = vpop.f32.mrb[0].mxu0
        %v902 = vadd.f32 %v849, %v901
        %v903 = vpop.f32.mrb[0].mxu0
        %v904 = vadd.f32 %v851, %v903
        %v905 = vpop.f32.mrb[0].mxu0
        %v906 = vadd.f32 %v853, %v905
        %907 = vmatprep.mubr.bf16.mxu0 %v483
        %908 = vmatmul.mubr.bf16.gmra.mrb[0].mxu0 %v482
        %v909 = vpop.f32.mrb[0].mxu0
        %v910 = vadd.f32 %v857, %v909
        %v911 = vpop.f32.mrb[0].mxu0
        %v912 = vadd.f32 %v859, %v911
        %v913 = vpop.f32.mrb[0].mxu0
        %v914 = vadd.f32 %v861, %v913
        %v915 = vpop.f32.mrb[0].mxu0
        %v916 = vadd.f32 %v863, %v915
        %917 = vdwg.mxu0
        %v918 = vadd.f32 %v372, %v900
        %v919 = vadd.f32 %v373, %v902
        %v920 = vadd.f32 %v374, %v904
        %v921 = vadd.f32 %v375, %v906
        %v922 = vadd.f32 %v376, %v910
        %v923 = vadd.f32 %v377, %v912
        %v924 = vadd.f32 %v378, %v914
        %v925 = vadd.f32 %v379, %v916
        %926 = vst [vmem:[%s337] sm:$0xff] %v918
        %927 = vst [vmem:[%s337 + $0x8] sm:$0xff] %v919
        %928 = vst [vmem:[%s337 + $0x10] sm:$0xff] %v920
        %929 = vst [vmem:[%s337 + $0x18] sm:$0xff] %v921
        %930 = vst [vmem:[%s337 + $0x20] sm:$0xff] %v922
        %931 = vst [vmem:[%s337 + $0x28] sm:$0xff] %v923
        %932 = vst [vmem:[%s337 + $0x30] sm:$0xff] %v924
        %933 = vst [vmem:[%s337 + $0x38] sm:$0xff] %v925
        %p934 = scmp.eq.s32.totalorder %s23, 3
        // Predicated region
        $region56: #{_lambda_.11} parent=46 // pred_check
          %p935 = pneg %p934
        $region57: #{_lambda_.11} parent=46 // pred_check_branch
          %937 = sbr.rel (%p935) target = $region59
        $region58: #{_lambda_.11} parent=46 // pred_region
          %v938 = vld [vmem:[%s337] sm:$0xff]
          %v939 = vld [vmem:[%s337 + $0x8] sm:$0xff]
          %v940 = vld [vmem:[%s337 + $0x10] sm:$0xff]
          %v941 = vld [vmem:[%s337 + $0x18] sm:$0xff]
          %v942 = vld [vmem:[%s337 + $0x20] sm:$0xff]
          %v943 = vld [vmem:[%s337 + $0x28] sm:$0xff]
          %v944 = vld [vmem:[%s337 + $0x30] sm:$0xff]
          %v945 = vld [vmem:[%s337 + $0x38] sm:$0xff]
          %v946 = vadd.f32 %v938, %v940
          %v947 = vadd.f32 %v946, %v942
          %v948 = vadd.f32 %v947, %v944
          %v949 = vrot.slane %v948, 4
          %v950 = vadd.f32 %v948, %v949
          %v951 = vrot.slane %v950, 2
          %v952 = vadd.f32 %v950, %v951
          %v953 = vrot.slane %v952, 1
          %v954 = vadd.f32 %v952, %v953
          %v955 = vadd.f32 %v939, %v941
          %v956 = vadd.f32 %v955, %v943
          %v957 = vadd.f32 %v956, %v945
          %v958 = vrot.slane %v957, 4
          %v959 = vadd.f32 %v957, %v958
          %v960 = vrot.slane %v959, 2
          %v961 = vadd.f32 %v959, %v960
          %v962 = vrot.slane %v961, 1
          %v963 = vadd.f32 %v961, %v962
          %v964 = vmul.f32 %v938, %v938
          %v965 = vmul.f32 %v939, %v939
          %v966 = vmul.f32 %v940, %v940
          %v967 = vmul.f32 %v941, %v941
          %v968 = vmul.f32 %v942, %v942
          %v969 = vmul.f32 %v943, %v943
          %v970 = vmul.f32 %v944, %v944
          %v971 = vmul.f32 %v945, %v945
          %v972 = vadd.f32 %v964, %v966
          %v973 = vadd.f32 %v972, %v968
          %v974 = vadd.f32 %v973, %v970
          %v975 = vrot.slane %v974, 4
          %v976 = vadd.f32 %v974, %v975
          %v977 = vrot.slane %v976, 2
          %v978 = vadd.f32 %v976, %v977
          %v979 = vrot.slane %v978, 1
          %v980 = vadd.f32 %v978, %v979
          %v981 = vadd.f32 %v965, %v967
          %v982 = vadd.f32 %v981, %v969
          %v983 = vadd.f32 %v982, %v971
          %v984 = vrot.slane %v983, 4
          %v985 = vadd.f32 %v983, %v984
          %v986 = vrot.slane %v985, 2
          %v987 = vadd.f32 %v985, %v986
          %v988 = vrot.slane %v987, 1
          %v989 = vadd.f32 %v987, %v988
          %990 = vst [vmem:[%s348] sm:$0xff] %v954
          %991 = vst [vmem:[%s348 + $0x8] sm:$0xff] %v963
          %992 = vst [vmem:[%s358] sm:$0xff] %v980
          %993 = vst [vmem:[%s358 + $0x8] sm:$0xff] %v989
        $region59: #{_lambda_.11} parent=46 // pred_fallthru
          _
        %s994 = smul.u32 4, %s21
        %s995 = smul.u32 2, %s22
        %p996 = scmp.lt.s32.totalorder %s994, 3
        %s997 = scalar_select %p996, %s994, 3
        %p998 = scmp.lt.s32.totalorder %s995, 1
        %s999 = scalar_select %p998, %s995, 1
        %s1000 = smul.addr %s997, 2
        %s1001 = sadd.s32 %s999, %s1000
        %s1002 = smul.addr %s1001, 8
        %s1003 = scalar_lea.vmem %s2, %s1002
        %s1004 = smul.u32 2, %s22
        %p1005 = scmp.lt.s32.totalorder %s21, 0
        %s1006 = scalar_select %p1005, %s21, 0
        %p1007 = scmp.lt.s32.totalorder %s1004, 1
        %s1008 = scalar_select %p1007, %s1004, 1
        %s1009 = smul.addr %s1006, 2
        %s1010 = sadd.s32 %s1008, %s1009
        %s1011 = smul.addr %s1010, 8
        %s1012 = scalar_lea.vmem %s3, %s1011
        %s1013 = smul.u32 2, %s22
        %p1014 = scmp.lt.s32.totalorder %s21, 0
        %s1015 = scalar_select %p1014, %s21, 0
        %p1016 = scmp.lt.s32.totalorder %s1013, 1
        %s1017 = scalar_select %p1016, %s1013, 1
        %s1018 = smul.addr %s1015, 2
        %s1019 = sadd.s32 %s1017, %s1018
        %s1020 = smul.addr %s1019, 8
        %s1021 = scalar_lea.vmem %s4, %s1020
        // Predicated region
        $region60: #{_lambda_.11} parent=46 // pred_check
          %p1022 = pneg %p111
        $region61: #{_lambda_.11} parent=46 // pred_check_branch
          %1024 = sbr.rel (%p1022) target = $region63
        $region62: #{_lambda_.11} parent=46 // pred_region
          %s1025 = smul.u32 4, %s21
          %s1026 = smul.u32 2, %s22
        $region63: #{_lambda_.11} parent=46 // pred_fallthru
          _
        // Predicated region
        $region64: #{_lambda_.11} parent=46 // pred_check
          %p1027 = pneg %p139
        $region65: #{_lambda_.11} parent=46 // pred_check_branch
          %1029 = sbr.rel (%p1027) target = $region67
        $region66: #{_lambda_.11} parent=46 // pred_region
          %s1030 = smul.u32 2, %s22
        $region67: #{_lambda_.11} parent=46 // pred_fallthru
          _
        // Predicated region
        $region68: #{_lambda_.11} parent=46 // pred_check
          %p1031 = pneg %p167
        $region69: #{_lambda_.11} parent=46 // pred_check_branch
          %1033 = sbr.rel (%p1031) target = $region71
        $region70: #{_lambda_.11} parent=46 // pred_region
          %s1034 = smul.u32 2, %s22
        $region71: #{_lambda_.11} parent=46 // pred_fallthru
          _
        // Predicated region
        $region72: #{_lambda_.11} parent=46 // pred_check
          %p1035 = pneg %p111
        $region73: #{_lambda_.11} parent=46 // pred_check_branch
          %1037 = sbr.rel (%p1035) target = $region75
        $region74: #{_lambda_.11} parent=46 // pred_region
          %s1038 = smul.u32 4, %s21
          %s1039 = smul.u32 2, %s22
          %p1040 = scmp.lt.s32.totalorder %s1038, 3
          %s1041 = scalar_select %p1040, %s1038, 3
          %p1042 = scmp.lt.s32.totalorder %s1039, 1
          %s1043 = scalar_select %p1042, %s1039, 1
          %s1044 = smul.addr %s1041, 2
          %s1045 = sadd.s32 %s1043, %s1044
          %s1046 = smul.addr %s1045, 8
          %s1047 = scalar_lea.vmem %s2, %s1046
        $region75: #{_lambda_.11} parent=46 // pred_fallthru
          _
        // Predicated region
        $region76: #{_lambda_.11} parent=46 // pred_check
          %p1048 = pneg %p139
        $region77: #{_lambda_.11} parent=46 // pred_check_branch
          %1050 = sbr.rel (%p1048) target = $region79
        $region78: #{_lambda_.11} parent=46 // pred_region
          %s1051 = smul.u32 2, %s22
          %p1052 = scmp.lt.s32.totalorder %s21, 0
          %s1053 = scalar_select %p1052, %s21, 0
          %p1054 = scmp.lt.s32.totalorder %s1051, 1
          %s1055 = scalar_select %p1054, %s1051, 1
          %s1056 = smul.addr %s1053, 2
          %s1057 = sadd.s32 %s1055, %s1056
          %s1058 = smul.addr %s1057, 8
          %s1059 = scalar_lea.vmem %s3, %s1058
        $region79: #{_lambda_.11} parent=46 // pred_fallthru
          _
        // Predicated region
        $region80: #{_lambda_.11} parent=46 // pred_check
          %p1060 = pneg %p167
        $region81: #{_lambda_.11} parent=46 // pred_check_branch
          %1062 = sbr.rel (%p1060) target = $region83
        $region82: #{_lambda_.11} parent=46 // pred_region
          %s1063 = smul.u32 2, %s22
          %p1064 = scmp.lt.s32.totalorder %s21, 0
          %s1065 = scalar_select %p1064, %s21, 0
          %p1066 = scmp.lt.s32.totalorder %s1063, 1
          %s1067 = scalar_select %p1066, %s1063, 1
          %s1068 = smul.addr %s1065, 2
          %s1069 = sadd.s32 %s1067, %s1068
          %s1070 = smul.addr %s1069, 8
          %s1071 = scalar_lea.vmem %s4, %s1070
        $region83: #{_lambda_.11} parent=46 // pred_fallthru
          _
      $region47: #{_lambda_.11} parent=5 // pred_fallthru
        _
      %p1072 = scmp.le.s32.totalorder 2, %s11
      // Predicated region
      $region84: #{_lambda_.11} parent=5 // pred_check
        %p1073 = pneg %p1072
      $region85: #{_lambda_.11} parent=5 // pred_check_branch
        %1075 = sbr.rel (%p1073) target = $region87
      $region86: #{_lambda_.11} parent=5 // pred_region
        %s1076 = ssub.s32 %s11, 2
      $region87: #{_lambda_.11} parent=5 // pred_fallthru
        _
    $region6: #{_lambda_.11} parent=1 // loop_footer
      %s15 = sadd.s32 1, %s11
    $region7: #{_lambda_.11} parent=1 // loop_footer_branch
      %10 = sbr.rel target = $region3
    $region8: #{_lambda_.11} parent=1 // loop_exit
      _

// kernel: _lambda_.14
$region0: #{_lambda_.14}
  #allocation0 [shape = 'u32[]', space=smem, size = 0x4, offset = 0x4, fixed_abs, tag = 'smem constant byte address 0x4 - core index']
  #allocation1 [shape = 'u32[144,128]{1,0:T(1,128)}', space=vmem, size = 0x12000, scoped, tag = 'internal scratch']
  %s0 = inlined_call_operand.vmem [shape: f32[24,512], index: 0, kind: input, shape index: {}]
  %s1 = inlined_call_operand.vmem [shape: f32[1,512], index: 1, kind: input, shape index: {}]
  %s2 = inlined_call_operand.vmem [shape: f32[1,512], index: 2, kind: input, shape index: {}]
  %s3 = inlined_call_operand.vmem [shape: f32[24,512], index: 3, kind: output, shape index: {}]
  %s4 = sld [smem:[#allocation0]]
  $region22: #{_lambda_.14} parent=0
    _
  %s6 = ssub.s32 1, %s4
  %s7 = scalar_select 0, %s6, %s4
  // Predicated region
  $region2: #{_lambda_.14} parent=0 // pred_check
    _
  $region3: #{_lambda_.14} parent=0 // pred_check_branch
    %9 = sbr.rel (0) target = $region5
  $region4: #{_lambda_.14} parent=0 // pred_region
    _
  $region5: #{_lambda_.14} parent=0 // pred_fallthru
    _
  // Predicated region
  $region6: #{_lambda_.14} parent=0 // pred_check
    _
  $region7: #{_lambda_.14} parent=0 // pred_check_branch
    %11 = sbr.rel (0) target = $region9
  $region8: #{_lambda_.14} parent=0 // pred_region
    _
  $region9: #{_lambda_.14} parent=0 // pred_fallthru
    _
  // Predicated region
  $region10: #{_lambda_.14} parent=0 // pred_check
    _
  $region11: #{_lambda_.14} parent=0 // pred_check_branch
    %13 = sbr.rel (0) target = $region13
  $region12: #{_lambda_.14} parent=0 // pred_region
    _
  $region13: #{_lambda_.14} parent=0 // pred_fallthru
    _
  %v14 = vld [vmem:[%s0] sm:$0xff]
  %v15 = vld [vmem:[%s0 + $0x8] sm:$0xff]
  %v16 = vld [vmem:[%s0 + $0x10] sm:$0xff]
  %v17 = vld [vmem:[%s0 + $0x18] sm:$0xff]
  %v18 = vld [vmem:[%s0 + $0x20] sm:$0xff]
  %v19 = vld [vmem:[%s0 + $0x28] sm:$0xff]
  %v20 = vld [vmem:[%s0 + $0x30] sm:$0xff]
  %v21 = vld [vmem:[%s0 + $0x38] sm:$0xff]
  %v22 = vld [vmem:[%s0 + $0x40] sm:$0xff]
  %v23 = vld [vmem:[%s0 + $0x48] sm:$0xff]
  %v24 = vld [vmem:[%s0 + $0x50] sm:$0xff]
  %v25 = vld [vmem:[%s0 + $0x58] sm:$0xff]
  %v26 = vld [vmem:[%s1] sm:$0xf]
  %v28 = vlaneseq
  %v29 = vshrl.u32 %v28, 7
  %v30 = vsub.s32 0, %v29
  %v31 = vrot.slane %v26, %v30
  %v32 = vlaneseq
  %v33 = vshrl.u32 %v32, 7
  %v34 = vsub.s32 1, %v33
  %v35 = vrot.slane %v26, %v34
  %v36 = vlaneseq
  %v37 = vshrl.u32 %v36, 7
  %v38 = vsub.s32 2, %v37
  %v39 = vrot.slane %v26, %v38
  %v40 = vlaneseq
  %v41 = vshrl.u32 %v40, 7
  %v42 = vsub.s32 3, %v41
  %v43 = vrot.slane %v26, %v42
  %v48 = vmul.f32 %v14, %v31
  %v49 = vmul.f32 %v15, %v35
  %v50 = vmul.f32 %v16, %v39
  %v51 = vmul.f32 %v17, %v43
  %v52 = vmul.f32 %v18, %v31
  %v53 = vmul.f32 %v19, %v35
  %v54 = vmul.f32 %v20, %v39
  %v55 = vmul.f32 %v21, %v43
  %v56 = vmul.f32 %v22, %v31
  %v57 = vmul.f32 %v23, %v35
  %v58 = vmul.f32 %v24, %v39
  %v59 = vmul.f32 %v25, %v43
  %v60 = vld [vmem:[%s2] sm:$0xf]
  %v62 = vlaneseq
  %v63 = vshrl.u32 %v62, 7
  %v64 = vsub.s32 0, %v63
  %v65 = vrot.slane %v60, %v64
  %v66 = vlaneseq
  %v67 = vshrl.u32 %v66, 7
  %v68 = vsub.s32 1, %v67
  %v69 = vrot.slane %v60, %v68
  %v70 = vlaneseq
  %v71 = vshrl.u32 %v70, 7
  %v72 = vsub.s32 2, %v71
  %v73 = vrot.slane %v60, %v72
  %v74 = vlaneseq
  %v75 = vshrl.u32 %v74, 7
  %v76 = vsub.s32 3, %v75
  %v77 = vrot.slane %v60, %v76
  %v82 = vadd.f32 %v48, %v65
  %v83 = vadd.f32 %v49, %v69
  %v84 = vadd.f32 %v50, %v73
  %v85 = vadd.f32 %v51, %v77
  %v86 = vadd.f32 %v52, %v65
  %v87 = vadd.f32 %v53, %v69
  %v88 = vadd.f32 %v54, %v73
  %v89 = vadd.f32 %v55, %v77
  %v90 = vadd.f32 %v56, %v65
  %v91 = vadd.f32 %v57, %v69
  %v92 = vadd.f32 %v58, %v73
  %v93 = vadd.f32 %v59, %v77
  %vm94 = vcmp.ge.f32.partialorder %v82, 0.0
  %vm95 = vcmp.ge.f32.partialorder %v83, 0.0
  %vm96 = vcmp.ge.f32.partialorder %v84, 0.0
  %vm97 = vcmp.ge.f32.partialorder %v85, 0.0
  %vm98 = vcmp.ge.f32.partialorder %v86, 0.0
  %vm99 = vcmp.ge.f32.partialorder %v87, 0.0
  %vm100 = vcmp.ge.f32.partialorder %v88, 0.0
  %vm101 = vcmp.ge.f32.partialorder %v89, 0.0
  %vm102 = vcmp.ge.f32.partialorder %v90, 0.0
  %vm103 = vcmp.ge.f32.partialorder %v91, 0.0
  %vm104 = vcmp.ge.f32.partialorder %v92, 0.0
  %vm105 = vcmp.ge.f32.partialorder %v93, 0.0
  %v106 = vmul.f32 %v82, 0.2
  %v107 = vmul.f32 %v83, 0.2
  %v108 = vmul.f32 %v84, 0.2
  %v109 = vmul.f32 %v85, 0.2
  %v110 = vmul.f32 %v86, 0.2
  %v111 = vmul.f32 %v87, 0.2
  %v112 = vmul.f32 %v88, 0.2
  %v113 = vmul.f32 %v89, 0.2
  %v114 = vmul.f32 %v90, 0.2
  %v115 = vmul.f32 %v91, 0.2
  %v116 = vmul.f32 %v92, 0.2
  %v117 = vmul.f32 %v93, 0.2
  %v118 = vsel %vm94, %v82, %v106
  %v119 = vsel %vm95, %v83, %v107
  %v120 = vsel %vm96, %v84, %v108
  %v121 = vsel %vm97, %v85, %v109
  %v122 = vsel %vm98, %v86, %v110
  %v123 = vsel %vm99, %v87, %v111
  %v124 = vsel %vm100, %v88, %v112
  %v125 = vsel %vm101, %v89, %v113
  %v126 = vsel %vm102, %v90, %v114
  %v127 = vsel %vm103, %v91, %v115
  %v128 = vsel %vm104, %v92, %v116
  %v129 = vsel %vm105, %v93, %v117
  %130 = vst [vmem:[%s3] sm:$0xff] %v118
  %131 = vst [vmem:[%s3 + $0x8] sm:$0xff] %v119
  %132 = vst [vmem:[%s3 + $0x10] sm:$0xff] %v120
  %133 = vst [vmem:[%s3 + $0x18] sm:$0xff] %v121
  %134 = vst [vmem:[%s3 + $0x20] sm:$0xff] %v122
  %135 = vst [vmem:[%s3 + $0x28] sm:$0xff] %v123
  %136 = vst [vmem:[%s3 + $0x30] sm:$0xff] %v124
  %137 = vst [vmem:[%s3 + $0x38] sm:$0xff] %v125
  %138 = vst [vmem:[%s3 + $0x40] sm:$0xff] %v126
  %139 = vst [vmem:[%s3 + $0x48] sm:$0xff] %v127
  %140 = vst [vmem:[%s3 + $0x50] sm:$0xff] %v128
  %141 = vst [vmem:[%s3 + $0x58] sm:$0xff] %v129
  // Predicated region
  $region14: #{_lambda_.14} parent=0 // pred_check
    _
  $region15: #{_lambda_.14} parent=0 // pred_check_branch
    %143 = sbr.rel (0) target = $region17
  $region16: #{_lambda_.14} parent=0 // pred_region
    _
  $region17: #{_lambda_.14} parent=0 // pred_fallthru
    _
  // Predicated region
  $region18: #{_lambda_.14} parent=0 // pred_check
    _
  $region19: #{_lambda_.14} parent=0 // pred_check_branch
    %145 = sbr.rel (0) target = $region21
  $region20: #{_lambda_.14} parent=0 // pred_region
    _
  $region21: #{_lambda_.14} parent=0 // pred_fallthru
    _

// kernel: _lambda_.13
$region0: #{_lambda_.13}
  #allocation0 [shape = 'u32[]', space=smem, size = 0x4, offset = 0x4, fixed_abs, tag = 'smem constant byte address 0x4 - core index']
  #allocation1 [shape = 'u32[144,128]{1,0:T(1,128)}', space=vmem, size = 0x12000, scoped, tag = 'internal scratch']
  %s0 = inlined_call_operand.vmem [shape: bf16[24,4096], index: 0, kind: input, shape index: {}]
  %s1 = inlined_call_operand.vmem [shape: bf16[4096,512], index: 1, kind: input, shape index: {}]
  %s2 = inlined_call_operand.vmem [shape: f32[24,512], index: 2, kind: output, shape index: {0}]
  %s3 = inlined_call_operand.vmem [shape: f32[8,512], index: 3, kind: output, shape index: {1}]
  %s4 = inlined_call_operand.vmem [shape: f32[8,512], index: 4, kind: output, shape index: {2}]
  %5 = xla_tuple %s2, %s3, %s4
  %s6 = sld [smem:[#allocation0]]
  $region88: #{_lambda_.13} parent=0
    _
  %s8 = ssub.s32 1, %s6
  %s9 = scalar_select 0, %s8, %s6
  $region1: #{_lambda_.13} parent=0
    #allocation2 [shape = 'u8[49152]{0}', space=vmem, size = 0xc000, scoped, tag = 'input window, operand 0']
    loop: start=0, step=1, limit=10
    $region2: #{_lambda_.13} parent=1 // loop_pre_header
      _
    $region3: #{_lambda_.13} parent=1 // loop_header
      %s11 = sphi 0, %s15
      %p12 = scmp.ge.s32.totalorder %s11, 10
      %s18 = sphi 0, %s37
      %s19 = sphi 0, %s33
      %s20 = sphi 0, %s29
      %s21 = sphi 0, %s18
      %s22 = sphi 0, %s19
      %s23 = sphi 0, %s20
      %s24 = sphi 0, %s21
      %s25 = sphi 0, %s22
      %s26 = sphi 0, %s23
      %s42 = sphi 0, %s44
      %s45 = sphi 0, %s42
      %s46 = sphi 0, %s45
      %s62 = sphi 0, %s46
      %s70 = sphi 0, %s72
      %s73 = sphi 0, %s70
      %s74 = sphi 0, %s73
      %s90 = sphi 0, %s74
      %s98 = sphi 0, %s100
      %s101 = sphi 0, %s98
      %s102 = sphi 0, %s101
      %s118 = sphi 0, %s102
      %s126 = sphi 0, %s128
      %s129 = sphi 0, %s126
      %s130 = sphi 0, %s129
      %s146 = sphi 0, %s130
      %s154 = sphi 0, %s156
      %s157 = sphi 0, %s154
      %s158 = sphi 0, %s157
      %s174 = sphi 0, %s158
    $region4: #{_lambda_.13} parent=1 // loop_header_branch
      %14 = sbr.rel (%p12) target = $region8
    $region5: #{_lambda_.13} parent=1 // loop_body
      %s16 = ssub.s32 %s11, 1
      %s17 = ssub.s32 %s11, 2
      %s27 = sadd.s32 1, %s20
      %p28 = scmp.ge.s32.totalorder %s27, 8
      %s29 = scalar_select %p28, 0, %s27
      %s30 = sadd.s32 1, %s19
      %s31 = scalar_select %p28, %s30, %s19
      %p32 = scmp.ge.s32.totalorder %s31, 1
      %s33 = scalar_select %p32, 0, %s31
      %s34 = sadd.s32 1, %s18
      %s35 = scalar_select %p32, %s34, %s18
      %p36 = scmp.ge.s32.totalorder %s35, 1
      %s37 = scalar_select %p36, 0, %s35
      %s38 = ssub.s32 %s18, %s37
      %s39 = ssub.s32 %s20, %s29
      %s40 = sor.u32 %s38, %s39
      %p41 = scmp.eq.s32.totalorder %s40, 0
      %s43 = sadd.s32 %s42, 1
      %s44 = scalar_select %p41, %s42, %s43
      %p47 = pneg %p41
      %p48 = scmp.eq.s32.totalorder %s11, 7
      %p49 = por %p47, %p48
      %p50 = scmp.ne.s32.totalorder %s42, %s45
      %p51 = scmp.eq.s32.totalorder %s11, 0
      %p52 = por %p50, %p51
      %p53 = scmp.ne.s32.totalorder %s42, %s45
      %p54 = scmp.eq.s32.totalorder %s16, 7
      %p55 = por %p53, %p54
      %p56 = scmp.ne.s32.totalorder %s45, %s46
      %p57 = scmp.eq.s32.totalorder %s16, 0
      %p58 = por %p56, %p57
      %p59 = scmp.ne.s32.totalorder %s45, %s46
      %p60 = scmp.eq.s32.totalorder %s17, 7
      %p61 = por %p59, %p60
      %p63 = scmp.ne.s32.totalorder %s46, %s62
      %p64 = scmp.eq.s32.totalorder %s17, 0
      %p65 = por %p63, %p64
      %s66 = ssub.s32 %s20, %s29
      %s67 = ssub.s32 %s19, %s33
      %s68 = sor.u32 %s66, %s67
      %p69 = scmp.eq.s32.totalorder %s68, 0
      %s71 = sadd.s32 %s70, 1
      %s72 = scalar_select %p69, %s70, %s71
      %p75 = pneg %p69
      %p76 = scmp.eq.s32.totalorder %s11, 7
      %p77 = por %p75, %p76
      %p78 = scmp.ne.s32.totalorder %s70, %s73
      %p79 = scmp.eq.s32.totalorder %s11, 0
      %p80 = por %p78, %p79
      %p81 = scmp.ne.s32.totalorder %s70, %s73
      %p82 = scmp.eq.s32.totalorder %s16, 7
      %p83 = por %p81, %p82
      %p84 = scmp.ne.s32.totalorder %s73, %s74
      %p85 = scmp.eq.s32.totalorder %s16, 0
      %p86 = por %p84, %p85
      %p87 = scmp.ne.s32.totalorder %s73, %s74
      %p88 = scmp.eq.s32.totalorder %s17, 7
      %p89 = por %p87, %p88
      %p91 = scmp.ne.s32.totalorder %s74, %s90
      %p92 = scmp.eq.s32.totalorder %s17, 0
      %p93 = por %p91, %p92
      %s94 = ssub.s32 %s18, %s37
      %s95 = ssub.s32 %s19, %s33
      %s96 = sor.u32 %s94, %s95
      %p97 = scmp.eq.s32.totalorder %s96, 0
      %s99 = sadd.s32 %s98, 1
      %s100 = scalar_select %p97, %s98, %s99
      %p103 = pneg %p97
      %p104 = scmp.eq.s32.totalorder %s11, 7
      %p105 = por %p103, %p104
      %p106 = scmp.ne.s32.totalorder %s98, %s101
      %p107 = scmp.eq.s32.totalorder %s11, 0
      %p108 = por %p106, %p107
      %p109 = scmp.ne.s32.totalorder %s98, %s101
      %p110 = scmp.eq.s32.totalorder %s16, 7
      %p111 = por %p109, %p110
      %p112 = scmp.ne.s32.totalorder %s101, %s102
      %p113 = scmp.eq.s32.totalorder %s16, 0
      %p114 = por %p112, %p113
      %p115 = scmp.ne.s32.totalorder %s101, %s102
      %p116 = scmp.eq.s32.totalorder %s17, 7
      %p117 = por %p115, %p116
      %p119 = scmp.ne.s32.totalorder %s102, %s118
      %p120 = scmp.eq.s32.totalorder %s17, 0
      %p121 = por %p119, %p120
      %s122 = ssub.s32 %s18, %s37
      %s123 = ssub.s32 %s19, %s33
      %s124 = sor.u32 %s122, %s123
      %p125 = scmp.eq.s32.totalorder %s124, 0
      %s127 = sadd.s32 %s126, 1
      %s128 = scalar_select %p125, %s126, %s127
      %p131 = pneg %p125
      %p132 = scmp.eq.s32.totalorder %s11, 7
      %p133 = por %p131, %p132
      %p134 = scmp.ne.s32.totalorder %s126, %s129
      %p135 = scmp.eq.s32.totalorder %s11, 0
      %p136 = por %p134, %p135
      %p137 = scmp.ne.s32.totalorder %s126, %s129
      %p138 = scmp.eq.s32.totalorder %s16, 7
      %p139 = por %p137, %p138
      %p140 = scmp.ne.s32.totalorder %s129, %s130
      %p141 = scmp.eq.s32.totalorder %s16, 0
      %p142 = por %p140, %p141
      %p143 = scmp.ne.s32.totalorder %s129, %s130
      %p144 = scmp.eq.s32.totalorder %s17, 7
      %p145 = por %p143, %p144
      %p147 = scmp.ne.s32.totalorder %s130, %s146
      %p148 = scmp.eq.s32.totalorder %s17, 0
      %p149 = por %p147, %p148
      %s150 = ssub.s32 %s18, %s37
      %s151 = ssub.s32 %s19, %s33
      %s152 = sor.u32 %s150, %s151
      %p153 = scmp.eq.s32.totalorder %s152, 0
      %s155 = sadd.s32 %s154, 1
      %s156 = scalar_select %p153, %s154, %s155
      %p159 = pneg %p153
      %p160 = scmp.eq.s32.totalorder %s11, 7
      %p161 = por %p159, %p160
      %p162 = scmp.ne.s32.totalorder %s154, %s157
      %p163 = scmp.eq.s32.totalorder %s11, 0
      %p164 = por %p162, %p163
      %p165 = scmp.ne.s32.totalorder %s154, %s157
      %p166 = scmp.eq.s32.totalorder %s16, 7
      %p167 = por %p165, %p166
      %p168 = scmp.ne.s32.totalorder %s157, %s158
      %p169 = scmp.eq.s32.totalorder %s16, 0
      %p170 = por %p168, %p169
      %p171 = scmp.ne.s32.totalorder %s157, %s158
      %p172 = scmp.eq.s32.totalorder %s17, 7
      %p173 = por %p171, %p172
      %p175 = scmp.ne.s32.totalorder %s158, %s174
      %p176 = scmp.eq.s32.totalorder %s17, 0
      %p177 = por %p175, %p176
      %p178 = scmp.le.s32.totalorder 1, %s11
      %p179 = scmp.lt.s32.totalorder %s11, 9
      %p180 = pnand %p178, %p179
      %p181 = pneg %p180
      // Predicated region
      $region9: #{_lambda_.13} parent=5 // pred_check
        _
      $region10: #{_lambda_.13} parent=5 // pred_check_branch
        %183 = sbr.rel (%p180) target = $region12
      $region11: #{_lambda_.13} parent=5 // pred_region
        %s184 = ssub.s32 %s11, 1
      $region12: #{_lambda_.13} parent=5 // pred_fallthru
        _
      %p185 = scmp.lt.s32.totalorder %s11, 8
      // Predicated region
      $region13: #{_lambda_.13} parent=5 // pred_check
        %p186 = pneg %p185
      $region14: #{_lambda_.13} parent=5 // pred_check_branch
        %188 = sbr.rel (%p186) target = $region16
      $region15: #{_lambda_.13} parent=5 // pred_region
        // Predicated region
        $region17: #{_lambda_.13} parent=15 // pred_check
          %p189 = pneg %p52
        $region18: #{_lambda_.13} parent=15 // pred_check_branch
          %191 = sbr.rel (%p189) target = $region20
        $region19: #{_lambda_.13} parent=15 // pred_region
          %s192 = sand.u32 %s42, 1
          %s193 = sand.u32 %s42, 1
          %s194 = smul.addr %s193, 48
          %s195 = scalar_lea.vmem [#allocation2], %s194
          %s196 = smul.u32 3, %s18
          %s197 = smul.u32 4, %s20
          %s198 = smul.addr %s196, 32
          %s199 = sadd.s32 %s197, %s198
          %s200 = smul.addr %s199, 4
          %s201 = scalar_lea.vmem %s0, %s200
          // Predicated region
          $region21: #{_lambda_.13} parent=19 // pred_check
            _
          $region22: #{_lambda_.13} parent=19 // pred_check_branch
            %203 = sbr.rel (0) target = $region24
          $region23: #{_lambda_.13} parent=19 // pred_region
            // Predicated region
            $region25: #{_lambda_.13} parent=23 // pred_check
              _
            $region26: #{_lambda_.13} parent=23 // pred_check_branch
              %205 = sbr.rel (0) target = $region28
            $region27: #{_lambda_.13} parent=23 // pred_region
              loop: start=0, step=1, limit=1
              $region29: #{_lambda_.13} parent=27 // loop_pre_header
                _
              $region30: #{_lambda_.13} parent=27 // loop_header
                %s207 = sphi 0, %s211
                %p208 = scmp.ge.s32.totalorder %s207, 1
                %s212 = sphi %s201, %s201
                %s213 = sphi %s195, %s195
              $region31: #{_lambda_.13} parent=27 // loop_header_branch
                %210 = sbr.rel (%p208) target = $region35
              $region32: #{_lambda_.13} parent=27 // loop_body
                %v214 = vld [vmem:[%s212] sm:$0xff]
                %215 = vst [vmem:[%s213] sm:$0xff] %v214
                %v216 = vld [vmem:[%s212 + $0x8] sm:$0xff]
                %217 = vst [vmem:[%s213 + $0x8] sm:$0xff] %v216
                %v218 = vld [vmem:[%s212 + $0x80] sm:$0xff]
                %219 = vst [vmem:[%s213 + $0x10] sm:$0xff] %v218
                %v220 = vld [vmem:[%s212 + $0x88] sm:$0xff]
                %221 = vst [vmem:[%s213 + $0x18] sm:$0xff] %v220
                %v222 = vld [vmem:[%s212 + $0x100] sm:$0xff]
                %223 = vst [vmem:[%s213 + $0x20] sm:$0xff] %v222
                %v224 = vld [vmem:[%s212 + $0x108] sm:$0xff]
                %225 = vst [vmem:[%s213 + $0x28] sm:$0xff] %v224
              $region33: #{_lambda_.13} parent=27 // loop_footer
                %s211 = sadd.s32 1, %s207
              $region34: #{_lambda_.13} parent=27 // loop_footer_branch
                %206 = sbr.rel target = $region30
              $region35: #{_lambda_.13} parent=27 // loop_exit
                _
            $region28: #{_lambda_.13} parent=23 // pred_fallthru
              _
            // Predicated region
            $region36: #{_lambda_.13} parent=23 // pred_check
              _
            $region37: #{_lambda_.13} parent=23 // pred_check_branch
              %227 = sbr.rel target = $region39
            $region38: #{_lambda_.13} parent=23 // pred_region
              _
            $region39: #{_lambda_.13} parent=23 // pred_fallthru
              _
          $region24: #{_lambda_.13} parent=19 // pred_fallthru
            _
          %228 = vnop
        $region20: #{_lambda_.13} parent=15 // pred_fallthru
          _
        // Predicated region
        $region40: #{_lambda_.13} parent=15 // pred_check
          %p229 = pneg %p80
        $region41: #{_lambda_.13} parent=15 // pred_check_branch
          %231 = sbr.rel (%p229) target = $region43
        $region42: #{_lambda_.13} parent=15 // pred_region
          %s232 = smul.u32 64, %s20
          %s233 = smul.u32 4, %s19
          %p234 = scmp.lt.s32.totalorder %s232, 511
          %s235 = scalar_select %p234, %s232, 511
          %p236 = scmp.lt.s32.totalorder %s233, 3
          %s237 = scalar_select %p236, %s233, 3
          %s238 = smul.addr %s235, 4
          %s239 = sadd.s32 %s237, %s238
          %s240 = smul.addr %s239, 4
          %s241 = scalar_lea.vmem %s1, %s240
          %s242 = smul.u32 64, %s20
          %s243 = smul.u32 4, %s19
        $region43: #{_lambda_.13} parent=15 // pred_fallthru
          _
      $region16: #{_lambda_.13} parent=5 // pred_fallthru
        _
      %p244 = scmp.le.s32.totalorder 1, %s11
      %p245 = scmp.lt.s32.totalorder %s11, 9
      %p246 = pnand %p244, %p245
      %p247 = pneg %p246
      // Predicated region
      $region44: #{_lambda_.13} parent=5 // pred_check
        _
      $region45: #{_lambda_.13} parent=5 // pred_check_branch
        %249 = sbr.rel (%p246) target = $region47
      $region46: #{_lambda_.13} parent=5 // pred_region
        %s250 = ssub.s32 %s11, 1
        %s251 = sand.u32 %s45, 1
        %s252 = sand.u32 %s45, 1
        %s253 = smul.addr %s252, 48
        %s254 = scalar_lea.vmem [#allocation2], %s253
        // Predicated region
        $region48: #{_lambda_.13} parent=46 // pred_check
          %p255 = pneg %p58
        $region49: #{_lambda_.13} parent=46 // pred_check_branch
          %257 = sbr.rel (%p255) target = $region51
        $region50: #{_lambda_.13} parent=46 // pred_region
          _
        $region51: #{_lambda_.13} parent=46 // pred_fallthru
          _
        %s258 = sand.u32 %s45, 1
        %s259 = sand.u32 %s45, 1
        %s260 = smul.addr %s259, 48
        %s261 = scalar_lea.vmem [#allocation2], %s260
        %p262 = pneg %p58
        %p263 = pneg %p55
        %s264 = smul.u32 64, %s23
        %s265 = smul.u32 4, %s22
        %p266 = scmp.lt.s32.totalorder %s264, 511
        %s267 = scalar_select %p266, %s264, 511
        %p268 = scmp.lt.s32.totalorder %s265, 3
        %s269 = scalar_select %p268, %s265, 3
        %s270 = smul.addr %s267, 4
        %s271 = sadd.s32 %s269, %s270
        %s272 = smul.addr %s271, 4
        %s273 = scalar_lea.vmem %s1, %s272
        %p274 = pneg %p86
        %p275 = pneg %p83
        %p276 = pneg %p114
        %p277 = pneg %p111
        %s278 = smul.u32 3, %s21
        %s279 = smul.u32 4, %s22
        %p280 = scmp.lt.s32.totalorder %s278, 2
        %s281 = scalar_select %p280, %s278, 2
        %p282 = scmp.lt.s32.totalorder %s279, 3
        %s283 = scalar_select %p282, %s279, 3
        %s284 = smul.addr %s281, 4
        %s285 = sadd.s32 %s283, %s284
        %s286 = smul.addr %s285, 8
        %s287 = scalar_lea.vmem %s2, %s286
        %p288 = pneg %p142
        %p289 = pneg %p139
        %s290 = smul.u32 4, %s22
        %p291 = scmp.lt.s32.totalorder %s21, 0
        %s292 = scalar_select %p291, %s21, 0
        %p293 = scmp.lt.s32.totalorder %s290, 3
        %s294 = scalar_select %p293, %s290, 3
        %s295 = smul.addr %s292, 4
        %s296 = sadd.s32 %s294, %s295
        %s297 = smul.addr %s296, 8
        %s298 = scalar_lea.vmem %s3, %s297
        %p299 = pneg %p170
        %p300 = pneg %p167
        %s301 = smul.u32 4, %s22
        %p302 = scmp.lt.s32.totalorder %s21, 0
        %s303 = scalar_select %p302, %s21, 0
        %p304 = scmp.lt.s32.totalorder %s301, 3
        %s305 = scalar_select %p304, %s301, 3
        %s306 = smul.addr %s303, 4
        %s307 = sadd.s32 %s305, %s306
        %s308 = smul.addr %s307, 8
        %s309 = scalar_lea.vmem %s4, %s308
        %s310 = smul.u32 3, %s21
        %s311 = smul.u32 4, %s23
        %s312 = smul.u32 64, %s23
        %s313 = smul.u32 4, %s22
        %p314 = scmp.lt.s32.totalorder %s312, 511
        %s315 = scalar_select %p314, %s312, 511
        %p316 = scmp.lt.s32.totalorder %s313, 3
        %s317 = scalar_select %p316, %s313, 3
        %s318 = smul.addr %s315, 4
        %s319 = sadd.s32 %s317, %s318
        %s320 = smul.addr %s319, 4
        %s321 = scalar_lea.vmem %s1, %s320
        %s322 = smul.u32 64, %s23
        %s323 = smul.u32 4, %s22
        %s324 = smul.u32 3, %s21
        %s325 = smul.u32 4, %s22
        %p326 = scmp.lt.s32.totalorder %s324, 2
        %s327 = scalar_select %p326, %s324, 2
        %p328 = scmp.lt.s32.totalorder %s325, 3
        %s329 = scalar_select %p328, %s325, 3
        %s330 = smul.addr %s327, 4
        %s331 = sadd.s32 %s329, %s330
        %s332 = smul.addr %s331, 8
        %s333 = scalar_lea.vmem %s2, %s332
        %s334 = smul.u32 3, %s21
        %s335 = smul.u32 4, %s22
        %s336 = smul.u32 4, %s22
        %p337 = scmp.lt.s32.totalorder %s21, 0
        %s338 = scalar_select %p337, %s21, 0
        %p339 = scmp.lt.s32.totalorder %s336, 3
        %s340 = scalar_select %p339, %s336, 3
        %s341 = smul.addr %s338, 4
        %s342 = sadd.s32 %s340, %s341
        %s343 = smul.addr %s342, 8
        %s344 = scalar_lea.vmem %s3, %s343
        %s345 = smul.u32 4, %s22
        %s346 = smul.u32 4, %s22
        %p347 = scmp.lt.s32.totalorder %s21, 0
        %s348 = scalar_select %p347, %s21, 0
        %p349 = scmp.lt.s32.totalorder %s346, 3
        %s350 = scalar_select %p349, %s346, 3
        %s351 = smul.addr %s348, 4
        %s352 = sadd.s32 %s350, %s351
        %s353 = smul.addr %s352, 8
        %s354 = scalar_lea.vmem %s4, %s353
        %s355 = smul.u32 4, %s22
        %p356 = scmp.eq.s32.totalorder %s23, 0
        // Predicated region
        $region52: #{_lambda_.13} parent=46 // pred_check
          %p357 = pneg %p356
        $region53: #{_lambda_.13} parent=46 // pred_check_branch
          %359 = sbr.rel (%p357) target = $region55
        $region54: #{_lambda_.13} parent=46 // pred_region
          %360 = vst [vmem:[%s333] sm:$0xff] 0.0
          %361 = vst [vmem:[%s333 + $0x8] sm:$0xff] 0.0
          %362 = vst [vmem:[%s333 + $0x10] sm:$0xff] 0.0
          %363 = vst [vmem:[%s333 + $0x18] sm:$0xff] 0.0
          %364 = vst [vmem:[%s333 + $0x20] sm:$0xff] 0.0
          %365 = vst [vmem:[%s333 + $0x28] sm:$0xff] 0.0
          %366 = vst [vmem:[%s333 + $0x30] sm:$0xff] 0.0
          %367 = vst [vmem:[%s333 + $0x38] sm:$0xff] 0.0
          %368 = vst [vmem:[%s333 + $0x40] sm:$0xff] 0.0
          %369 = vst [vmem:[%s333 + $0x48] sm:$0xff] 0.0
          %370 = vst [vmem:[%s333 + $0x50] sm:$0xff] 0.0
          %371 = vst [vmem:[%s333 + $0x58] sm:$0xff] 0.0
        $region55: #{_lambda_.13} parent=46 // pred_fallthru
          _
        %v372 = vld [vmem:[%s333] sm:$0xff]
        %v373 = vld [vmem:[%s333 + $0x8] sm:$0xff]
        %v374 = vld [vmem:[%s333 + $0x10] sm:$0xff]
        %v375 = vld [vmem:[%s333 + $0x18] sm:$0xff]
        %v376 = vld [vmem:[%s333 + $0x20] sm:$0xff]
        %v377 = vld [vmem:[%s333 + $0x28] sm:$0xff]
        %v378 = vld [vmem:[%s333 + $0x30] sm:$0xff]
        %v379 = vld [vmem:[%s333 + $0x38] sm:$0xff]
        %v380 = vld [vmem:[%s333 + $0x40] sm:$0xff]
        %v381 = vld [vmem:[%s333 + $0x48] sm:$0xff]
        %v382 = vld [vmem:[%s333 + $0x50] sm:$0xff]
        %v383 = vld [vmem:[%s333 + $0x58] sm:$0xff]
        %v384 = vld [vmem:[%s254] sm:$0xff]
        %v385 = vld [vmem:[%s254 + $0x8] sm:$0xff]
        %v386 = vld [vmem:[%s254 + $0x10] sm:$0xff]
        %v387 = vld [vmem:[%s254 + $0x18] sm:$0xff]
        %v388 = vld [vmem:[%s254 + $0x20] sm:$0xff]
        %v389 = vld [vmem:[%s254 + $0x28] sm:$0xff]
        %v390 = vld [vmem:[%s321] sm:$0xff]
        %v391 = vld [vmem:[%s321 + $0x8] sm:$0xff]
        %v392 = vld [vmem:[%s321 + $0x10] sm:$0xff]
        %v393 = vld [vmem:[%s321 + $0x18] sm:$0xff]
        %v394 = vld [vmem:[%s321 + $0x20] sm:$0xff]
        %v395 = vld [vmem:[%s321 + $0x28] sm:$0xff]
        %v396 = vld [vmem:[%s321 + $0x30] sm:$0xff]
        %v397 = vld [vmem:[%s321 + $0x38] sm:$0xff]
        %v398 = vld [vmem:[%s321 + $0x40] sm:$0xff]
        %v399 = vld [vmem:[%s321 + $0x48] sm:$0xff]
        %v400 = vld [vmem:[%s321 + $0x50] sm:$0xff]
        %v401 = vld [vmem:[%s321 + $0x58] sm:$0xff]
        %v402 = vld [vmem:[%s321 + $0x60] sm:$0xff]
        %v403 = vld [vmem:[%s321 + $0x68] sm:$0xff]
        %v404 = vld [vmem:[%s321 + $0x70] sm:$0xff]
        %v405 = vld [vmem:[%s321 + $0x78] sm:$0xff]
        %v406 = vld [vmem:[%s321 + $0x80] sm:$0xff]
        %v407 = vld [vmem:[%s321 + $0x88] sm:$0xff]
        %v408 = vld [vmem:[%s321 + $0x90] sm:$0xff]
        %v409 = vld [vmem:[%s321 + $0x98] sm:$0xff]
        %v410 = vld [vmem:[%s321 + $0xa0] sm:$0xff]
        %v411 = vld [vmem:[%s321 + $0xa8] sm:$0xff]
        %v412 = vld [vmem:[%s321 + $0xb0] sm:$0xff]
        %v413 = vld [vmem:[%s321 + $0xb8] sm:$0xff]
        %v414 = vld [vmem:[%s321 + $0xc0] sm:$0xff]
        %v415 = vld [vmem:[%s321 + $0xc8] sm:$0xff]
        %v416 = vld [vmem:[%s321 + $0xd0] sm:$0xff]
        %v417 = vld [vmem:[%s321 + $0xd8] sm:$0xff]
        %v418 = vld [vmem:[%s321 + $0xe0] sm:$0xff]
        %v419 = vld [vmem:[%s321 + $0xe8] sm:$0xff]
        %v420 = vld [vmem:[%s321 + $0xf0] sm:$0xff]
        %v421 = vld [vmem:[%s321 + $0xf8] sm:$0xff]
        %v422 = vld [vmem:[%s321 + $0x100] sm:$0xff]
        %v423 = vld [vmem:[%s321 + $0x108] sm:$0xff]
        %v424 = vld [vmem:[%s321 + $0x110] sm:$0xff]
        %v425 = vld [vmem:[%s321 + $0x118] sm:$0xff]
        %v426 = vld [vmem:[%s321 + $0x120] sm:$0xff]
        %v427 = vld [vmem:[%s321 + $0x128] sm:$0xff]
        %v428 = vld [vmem:[%s321 + $0x130] sm:$0xff]
        %v429 = vld [vmem:[%s321 + $0x138] sm:$0xff]
        %v430 = vld [vmem:[%s321 + $0x140] sm:$0xff]
        %v431 = vld [vmem:[%s321 + $0x148] sm:$0xff]
        %v432 = vld [vmem:[%s321 + $0x150] sm:$0xff]
        %v433 = vld [vmem:[%s321 + $0x158] sm:$0xff]
        %v434 = vld [vmem:[%s321 + $0x160] sm:$0xff]
        %v435 = vld [vmem:[%s321 + $0x168] sm:$0xff]
        %v436 = vld [vmem:[%s321 + $0x170] sm:$0xff]
        %v437 = vld [vmem:[%s321 + $0x178] sm:$0xff]
        %v438 = vld [vmem:[%s321 + $0x180] sm:$0xff]
        %v439 = vld [vmem:[%s321 + $0x188] sm:$0xff]
        %v440 = vld [vmem:[%s321 + $0x190] sm:$0xff]
        %v441 = vld [vmem:[%s321 + $0x198] sm:$0xff]
        %v442 = vld [vmem:[%s321 + $0x1a0] sm:$0xff]
        %v443 = vld [vmem:[%s321 + $0x1a8] sm:$0xff]
        %v444 = vld [vmem:[%s321 + $0x1b0] sm:$0xff]
        %v445 = vld [vmem:[%s321 + $0x1b8] sm:$0xff]
        %v446 = vld [vmem:[%s321 + $0x1c0] sm:$0xff]
        %v447 = vld [vmem:[%s321 + $0x1c8] sm:$0xff]
        %v448 = vld [vmem:[%s321 + $0x1d0] sm:$0xff]
        %v449 = vld [vmem:[%s321 + $0x1d8] sm:$0xff]
        %v450 = vld [vmem:[%s321 + $0x1e0] sm:$0xff]
        %v451 = vld [vmem:[%s321 + $0x1e8] sm:$0xff]
        %v452 = vld [vmem:[%s321 + $0x1f0] sm:$0xff]
        %v453 = vld [vmem:[%s321 + $0x1f8] sm:$0xff]
        %v454 = vld [vmem:[%s321 + $0x200] sm:$0xff]
        %v455 = vld [vmem:[%s321 + $0x208] sm:$0xff]
        %v456 = vld [vmem:[%s321 + $0x210] sm:$0xff]
        %v457 = vld [vmem:[%s321 + $0x218] sm:$0xff]
        %v458 = vld [vmem:[%s321 + $0x220] sm:$0xff]
        %v459 = vld [vmem:[%s321 + $0x228] sm:$0xff]
        %v460 = vld [vmem:[%s321 + $0x230] sm:$0xff]
        %v461 = vld [vmem:[%s321 + $0x238] sm:$0xff]
        %v462 = vld [vmem:[%s321 + $0x240] sm:$0xff]
        %v463 = vld [vmem:[%s321 + $0x248] sm:$0xff]
        %v464 = vld [vmem:[%s321 + $0x250] sm:$0xff]
        %v465 = vld [vmem:[%s321 + $0x258] sm:$0xff]
        %v466 = vld [vmem:[%s321 + $0x260] sm:$0xff]
        %v467 = vld [vmem:[%s321 + $0x268] sm:$0xff]
        %v468 = vld [vmem:[%s321 + $0x270] sm:$0xff]
        %v469 = vld [vmem:[%s321 + $0x278] sm:$0xff]
        %v470 = vld [vmem:[%s321 + $0x280] sm:$0xff]
        %v471 = vld [vmem:[%s321 + $0x288] sm:$0xff]
        %v472 = vld [vmem:[%s321 + $0x290] sm:$0xff]
        %v473 = vld [vmem:[%s321 + $0x298] sm:$0xff]
        %v474 = vld [vmem:[%s321 + $0x2a0] sm:$0xff]
        %v475 = vld [vmem:[%s321 + $0x2a8] sm:$0xff]
        %v476 = vld [vmem:[%s321 + $0x2b0] sm:$0xff]
        %v477 = vld [vmem:[%s321 + $0x2b8] sm:$0xff]
        %v478 = vld [vmem:[%s321 + $0x2c0] sm:$0xff]
        %v479 = vld [vmem:[%s321 + $0x2c8] sm:$0xff]
        %v480 = vld [vmem:[%s321 + $0x2d0] sm:$0xff]
        %v481 = vld [vmem:[%s321 + $0x2d8] sm:$0xff]
        %v482 = vld [vmem:[%s321 + $0x2e0] sm:$0xff]
        %v483 = vld [vmem:[%s321 + $0x2e8] sm:$0xff]
        %v484 = vld [vmem:[%s321 + $0x2f0] sm:$0xff]
        %v485 = vld [vmem:[%s321 + $0x2f8] sm:$0xff]
        %v486 = vld [vmem:[%s321 + $0x300] sm:$0xff]
        %v487 = vld [vmem:[%s321 + $0x308] sm:$0xff]
        %v488 = vld [vmem:[%s321 + $0x310] sm:$0xff]
        %v489 = vld [vmem:[%s321 + $0x318] sm:$0xff]
        %v490 = vld [vmem:[%s321 + $0x320] sm:$0xff]
        %v491 = vld [vmem:[%s321 + $0x328] sm:$0xff]
        %v492 = vld [vmem:[%s321 + $0x330] sm:$0xff]
        %v493 = vld [vmem:[%s321 + $0x338] sm:$0xff]
        %v494 = vld [vmem:[%s321 + $0x340] sm:$0xff]
        %v495 = vld [vmem:[%s321 + $0x348] sm:$0xff]
        %v496 = vld [vmem:[%s321 + $0x350] sm:$0xff]
        %v497 = vld [vmem:[%s321 + $0x358] sm:$0xff]
        %v498 = vld [vmem:[%s321 + $0x360] sm:$0xff]
        %v499 = vld [vmem:[%s321 + $0x368] sm:$0xff]
        %v500 = vld [vmem:[%s321 + $0x370] sm:$0xff]
        %v501 = vld [vmem:[%s321 + $0x378] sm:$0xff]
        %v502 = vld [vmem:[%s321 + $0x380] sm:$0xff]
        %v503 = vld [vmem:[%s321 + $0x388] sm:$0xff]
        %v504 = vld [vmem:[%s321 + $0x390] sm:$0xff]
        %v505 = vld [vmem:[%s321 + $0x398] sm:$0xff]
        %v506 = vld [vmem:[%s321 + $0x3a0] sm:$0xff]
        %v507 = vld [vmem:[%s321 + $0x3a8] sm:$0xff]
        %v508 = vld [vmem:[%s321 + $0x3b0] sm:$0xff]
        %v509 = vld [vmem:[%s321 + $0x3b8] sm:$0xff]
        %v510 = vld [vmem:[%s321 + $0x3c0] sm:$0xff]
        %v511 = vld [vmem:[%s321 + $0x3c8] sm:$0xff]
        %v512 = vld [vmem:[%s321 + $0x3d0] sm:$0xff]
        %v513 = vld [vmem:[%s321 + $0x3d8] sm:$0xff]
        %v514 = vld [vmem:[%s321 + $0x3e0] sm:$0xff]
        %v515 = vld [vmem:[%s321 + $0x3e8] sm:$0xff]
        %v516 = vld [vmem:[%s321 + $0x3f0] sm:$0xff]
        %v517 = vld [vmem:[%s321 + $0x3f8] sm:$0xff]
        %v524 = vunpack.c.l.b16 %v384
        %v525 = vunpack.c.h.b16 %v384
        %v526 = vunpack.c.l.b16 %v385
        %v527 = vunpack.c.h.b16 %v385
        %v528 = vunpack.c.l.b16 %v386
        %v529 = vunpack.c.h.b16 %v386
        %v530 = vunpack.c.l.b16 %v387
        %v531 = vunpack.c.h.b16 %v387
        %v532 = vunpack.c.l.b16 %v388
        %v533 = vunpack.c.h.b16 %v388
        %v534 = vunpack.c.l.b16 %v389
        %v535 = vunpack.c.h.b16 %v389
        %v536 = vpack.c.b16 %v528, %v524
        %v537 = vpack.c.b16 %v529, %v525
        %v538 = vpack.c.b16 %v530, %v526
        %v539 = vpack.c.b16 %v531, %v527
        %v540 = vpack.c.b16 %v532, %v532
        %v541 = vpack.c.b16 %v533, %v533
        %v542 = vpack.c.b16 %v534, %v534
        %v543 = vpack.c.b16 %v535, %v535
        %v680 = vunpack.c.l.b16 %v390
        %v681 = vunpack.c.h.b16 %v390
        %v682 = vunpack.c.l.b16 %v391
        %v683 = vunpack.c.h.b16 %v391
        %v684 = vunpack.c.l.b16 %v392
        %v685 = vunpack.c.h.b16 %v392
        %v686 = vunpack.c.l.b16 %v393
        %v687 = vunpack.c.h.b16 %v393
        %v688 = vunpack.c.l.b16 %v394
        %v689 = vunpack.c.h.b16 %v394
        %v690 = vunpack.c.l.b16 %v395
        %v691 = vunpack.c.h.b16 %v395
        %v692 = vunpack.c.l.b16 %v396
        %v693 = vunpack.c.h.b16 %v396
        %v694 = vunpack.c.l.b16 %v397
        %v695 = vunpack.c.h.b16 %v397
        %v696 = vunpack.c.l.b16 %v398
        %v697 = vunpack.c.h.b16 %v398
        %v698 = vunpack.c.l.b16 %v399
        %v699 = vunpack.c.h.b16 %v399
        %v700 = vunpack.c.l.b16 %v400
        %v701 = vunpack.c.h.b16 %v400
        %v702 = vunpack.c.l.b16 %v401
        %v703 = vunpack.c.h.b16 %v401
        %v704 = vunpack.c.l.b16 %v402
        %v705 = vunpack.c.h.b16 %v402
        %v706 = vunpack.c.l.b16 %v403
        %v707 = vunpack.c.h.b16 %v403
        %v708 = vunpack.c.l.b16 %v404
        %v709 = vunpack.c.h.b16 %v404
        %v710 = vunpack.c.l.b16 %v405
        %v711 = vunpack.c.h.b16 %v405
        %v712 = vunpack.c.l.b16 %v406
        %v713 = vunpack.c.h.b16 %v406
        %v714 = vunpack.c.l.b16 %v407
        %v715 = vunpack.c.h.b16 %v407
        %v716 = vunpack.c.l.b16 %v408
        %v717 = vunpack.c.h.b16 %v408
        %v718 = vunpack.c.l.b16 %v409
        %v719 = vunpack.c.h.b16 %v409
        %v720 = vunpack.c.l.b16 %v410
        %v721 = vunpack.c.h.b16 %v410
        %v722 = vunpack.c.l.b16 %v411
        %v723 = vunpack.c.h.b16 %v411
        %v724 = vunpack.c.l.b16 %v412
        %v725 = vunpack.c.h.b16 %v412
        %v726 = vunpack.c.l.b16 %v413
        %v727 = vunpack.c.h.b16 %v413
        %v728 = vunpack.c.l.b16 %v414
        %v729 = vunpack.c.h.b16 %v414
        %v730 = vunpack.c.l.b16 %v415
        %v731 = vunpack.c.h.b16 %v415
        %v732 = vunpack.c.l.b16 %v416
        %v733 = vunpack.c.h.b16 %v416
        %v734 = vunpack.c.l.b16 %v417
        %v735 = vunpack.c.h.b16 %v417
        %v736 = vunpack.c.l.b16 %v418
        %v737 = vunpack.c.h.b16 %v418
        %v738 = vunpack.c.l.b16 %v419
        %v739 = vunpack.c.h.b16 %v419
        %v740 = vunpack.c.l.b16 %v420
        %v741 = vunpack.c.h.b16 %v420
        %v742 = vunpack.c.l.b16 %v421
        %v743 = vunpack.c.h.b16 %v421
        %v744 = vunpack.c.l.b16 %v422
        %v745 = vunpack.c.h.b16 %v422
        %v746 = vunpack.c.l.b16 %v423
        %v747 = vunpack.c.h.b16 %v423
        %v748 = vunpack.c.l.b16 %v424
        %v749 = vunpack.c.h.b16 %v424
        %v750 = vunpack.c.l.b16 %v425
        %v751 = vunpack.c.h.b16 %v425
        %v752 = vunpack.c.l.b16 %v426
        %v753 = vunpack.c.h.b16 %v426
        %v754 = vunpack.c.l.b16 %v427
        %v755 = vunpack.c.h.b16 %v427
        %v756 = vunpack.c.l.b16 %v428
        %v757 = vunpack.c.h.b16 %v428
        %v758 = vunpack.c.l.b16 %v429
        %v759 = vunpack.c.h.b16 %v429
        %v760 = vunpack.c.l.b16 %v430
        %v761 = vunpack.c.h.b16 %v430
        %v762 = vunpack.c.l.b16 %v431
        %v763 = vunpack.c.h.b16 %v431
        %v764 = vunpack.c.l.b16 %v432
        %v765 = vunpack.c.h.b16 %v432
        %v766 = vunpack.c.l.b16 %v433
        %v767 = vunpack.c.h.b16 %v433
        %v768 = vunpack.c.l.b16 %v434
        %v769 = vunpack.c.h.b16 %v434
        %v770 = vunpack.c.l.b16 %v435
        %v771 = vunpack.c.h.b16 %v435
        %v772 = vunpack.c.l.b16 %v436
        %v773 = vunpack.c.h.b16 %v436
        %v774 = vunpack.c.l.b16 %v437
        %v775 = vunpack.c.h.b16 %v437
        %v776 = vunpack.c.l.b16 %v438
        %v777 = vunpack.c.h.b16 %v438
        %v778 = vunpack.c.l.b16 %v439
        %v779 = vunpack.c.h.b16 %v439
        %v780 = vunpack.c.l.b16 %v440
        %v781 = vunpack.c.h.b16 %v440
        %v782 = vunpack.c.l.b16 %v441
        %v783 = vunpack.c.h.b16 %v441
        %v784 = vunpack.c.l.b16 %v442
        %v785 = vunpack.c.h.b16 %v442
        %v786 = vunpack.c.l.b16 %v443
        %v787 = vunpack.c.h.b16 %v443
        %v788 = vunpack.c.l.b16 %v444
        %v789 = vunpack.c.h.b16 %v444
        %v790 = vunpack.c.l.b16 %v445
        %v791 = vunpack.c.h.b16 %v445
        %v792 = vunpack.c.l.b16 %v446
        %v793 = vunpack.c.h.b16 %v446
        %v794 = vunpack.c.l.b16 %v447
        %v795 = vunpack.c.h.b16 %v447
        %v796 = vunpack.c.l.b16 %v448
        %v797 = vunpack.c.h.b16 %v448
        %v798 = vunpack.c.l.b16 %v449
        %v799 = vunpack.c.h.b16 %v449
        %v800 = vunpack.c.l.b16 %v450
        %v801 = vunpack.c.h.b16 %v450
        %v802 = vunpack.c.l.b16 %v451
        %v803 = vunpack.c.h.b16 %v451
        %v804 = vunpack.c.l.b16 %v452
        %v805 = vunpack.c.h.b16 %v452
        %v806 = vunpack.c.l.b16 %v453
        %v807 = vunpack.c.h.b16 %v453
        %v808 = vunpack.c.l.b16 %v454
        %v809 = vunpack.c.h.b16 %v454
        %v810 = vunpack.c.l.b16 %v455
        %v811 = vunpack.c.h.b16 %v455
        %v812 = vunpack.c.l.b16 %v456
        %v813 = vunpack.c.h.b16 %v456
        %v814 = vunpack.c.l.b16 %v457
        %v815 = vunpack.c.h.b16 %v457
        %v816 = vunpack.c.l.b16 %v458
        %v817 = vunpack.c.h.b16 %v458
        %v818 = vunpack.c.l.b16 %v459
        %v819 = vunpack.c.h.b16 %v459
        %v820 = vunpack.c.l.b16 %v460
        %v821 = vunpack.c.h.b16 %v460
        %v822 = vunpack.c.l.b16 %v461
        %v823 = vunpack.c.h.b16 %v461
        %v824 = vunpack.c.l.b16 %v462
        %v825 = vunpack.c.h.b16 %v462
        %v826 = vunpack.c.l.b16 %v463
        %v827 = vunpack.c.h.b16 %v463
        %v828 = vunpack.c.l.b16 %v464
        %v829 = vunpack.c.h.b16 %v464
        %v830 = vunpack.c.l.b16 %v465
        %v831 = vunpack.c.h.b16 %v465
        %v832 = vunpack.c.l.b16 %v466
        %v833 = vunpack.c.h.b16 %v466
        %v834 = vunpack.c.l.b16 %v467
        %v835 = vunpack.c.h.b16 %v467
        %v836 = vunpack.c.l.b16 %v468
        %v837 = vunpack.c.h.b16 %v468
        %v838 = vunpack.c.l.b16 %v469
        %v839 = vunpack.c.h.b16 %v469
        %v840 = vunpack.c.l.b16 %v470
        %v841 = vunpack.c.h.b16 %v470
        %v842 = vunpack.c.l.b16 %v471
        %v843 = vunpack.c.h.b16 %v471
        %v844 = vunpack.c.l.b16 %v472
        %v845 = vunpack.c.h.b16 %v472
        %v846 = vunpack.c.l.b16 %v473
        %v847 = vunpack.c.h.b16 %v473
        %v848 = vunpack.c.l.b16 %v474
        %v849 = vunpack.c.h.b16 %v474
        %v850 = vunpack.c.l.b16 %v475
        %v851 = vunpack.c.h.b16 %v475
        %v852 = vunpack.c.l.b16 %v476
        %v853 = vunpack.c.h.b16 %v476
        %v854 = vunpack.c.l.b16 %v477
        %v855 = vunpack.c.h.b16 %v477
        %v856 = vunpack.c.l.b16 %v478
        %v857 = vunpack.c.h.b16 %v478
        %v858 = vunpack.c.l.b16 %v479
        %v859 = vunpack.c.h.b16 %v479
        %v860 = vunpack.c.l.b16 %v480
        %v861 = vunpack.c.h.b16 %v480
        %v862 = vunpack.c.l.b16 %v481
        %v863 = vunpack.c.h.b16 %v481
        %v864 = vunpack.c.l.b16 %v482
        %v865 = vunpack.c.h.b16 %v482
        %v866 = vunpack.c.l.b16 %v483
        %v867 = vunpack.c.h.b16 %v483
        %v868 = vunpack.c.l.b16 %v484
        %v869 = vunpack.c.h.b16 %v484
        %v870 = vunpack.c.l.b16 %v485
        %v871 = vunpack.c.h.b16 %v485
        %v872 = vunpack.c.l.b16 %v486
        %v873 = vunpack.c.h.b16 %v486
        %v874 = vunpack.c.l.b16 %v487
        %v875 = vunpack.c.h.b16 %v487
        %v876 = vunpack.c.l.b16 %v488
        %v877 = vunpack.c.h.b16 %v488
        %v878 = vunpack.c.l.b16 %v489
        %v879 = vunpack.c.h.b16 %v489
        %v880 = vunpack.c.l.b16 %v490
        %v881 = vunpack.c.h.b16 %v490
        %v882 = vunpack.c.l.b16 %v491
        %v883 = vunpack.c.h.b16 %v491
        %v884 = vunpack.c.l.b16 %v492
        %v885 = vunpack.c.h.b16 %v492
        %v886 = vunpack.c.l.b16 %v493
        %v887 = vunpack.c.h.b16 %v493
        %v888 = vunpack.c.l.b16 %v494
        %v889 = vunpack.c.h.b16 %v494
        %v890 = vunpack.c.l.b16 %v495
        %v891 = vunpack.c.h.b16 %v495
        %v892 = vunpack.c.l.b16 %v496
        %v893 = vunpack.c.h.b16 %v496
        %v894 = vunpack.c.l.b16 %v497
        %v895 = vunpack.c.h.b16 %v497
        %v896 = vunpack.c.l.b16 %v498
        %v897 = vunpack.c.h.b16 %v498
        %v898 = vunpack.c.l.b16 %v499
        %v899 = vunpack.c.h.b16 %v499
        %v900 = vunpack.c.l.b16 %v500
        %v901 = vunpack.c.h.b16 %v500
        %v902 = vunpack.c.l.b16 %v501
        %v903 = vunpack.c.h.b16 %v501
        %v904 = vunpack.c.l.b16 %v502
        %v905 = vunpack.c.h.b16 %v502
        %v906 = vunpack.c.l.b16 %v503
        %v907 = vunpack.c.h.b16 %v503
        %v908 = vunpack.c.l.b16 %v504
        %v909 = vunpack.c.h.b16 %v504
        %v910 = vunpack.c.l.b16 %v505
        %v911 = vunpack.c.h.b16 %v505
        %v912 = vunpack.c.l.b16 %v506
        %v913 = vunpack.c.h.b16 %v506
        %v914 = vunpack.c.l.b16 %v507
        %v915 = vunpack.c.h.b16 %v507
        %v916 = vunpack.c.l.b16 %v508
        %v917 = vunpack.c.h.b16 %v508
        %v918 = vunpack.c.l.b16 %v509
        %v919 = vunpack.c.h.b16 %v509
        %v920 = vunpack.c.l.b16 %v510
        %v921 = vunpack.c.h.b16 %v510
        %v922 = vunpack.c.l.b16 %v511
        %v923 = vunpack.c.h.b16 %v511
        %v924 = vunpack.c.l.b16 %v512
        %v925 = vunpack.c.h.b16 %v512
        %v926 = vunpack.c.l.b16 %v513
        %v927 = vunpack.c.h.b16 %v513
        %v928 = vunpack.c.l.b16 %v514
        %v929 = vunpack.c.h.b16 %v514
        %v930 = vunpack.c.l.b16 %v515
        %v931 = vunpack.c.h.b16 %v515
        %v932 = vunpack.c.l.b16 %v516
        %v933 = vunpack.c.h.b16 %v516
        %v934 = vunpack.c.l.b16 %v517
        %v935 = vunpack.c.h.b16 %v517
        %v936 = vpack.c.b16 %v684, %v680
        %v937 = vpack.c.b16 %v685, %v681
        %v938 = vpack.c.b16 %v686, %v682
        %v939 = vpack.c.b16 %v687, %v683
        %v940 = vpack.c.b16 %v692, %v688
        %v941 = vpack.c.b16 %v693, %v689
        %v942 = vpack.c.b16 %v694, %v690
        %v943 = vpack.c.b16 %v695, %v691
        %v944 = vpack.c.b16 %v700, %v696
        %v945 = vpack.c.b16 %v701, %v697
        %v946 = vpack.c.b16 %v702, %v698
        %v947 = vpack.c.b16 %v703, %v699
        %v948 = vpack.c.b16 %v708, %v704
        %v949 = vpack.c.b16 %v709, %v705
        %v950 = vpack.c.b16 %v710, %v706
        %v951 = vpack.c.b16 %v711, %v707
        %v952 = vpack.c.b16 %v716, %v712
        %v953 = vpack.c.b16 %v717, %v713
        %v954 = vpack.c.b16 %v718, %v714
        %v955 = vpack.c.b16 %v719, %v715
        %v956 = vpack.c.b16 %v724, %v720
        %v957 = vpack.c.b16 %v725, %v721
        %v958 = vpack.c.b16 %v726, %v722
        %v959 = vpack.c.b16 %v727, %v723
        %v960 = vpack.c.b16 %v732, %v728
        %v961 = vpack.c.b16 %v733, %v729
        %v962 = vpack.c.b16 %v734, %v730
        %v963 = vpack.c.b16 %v735, %v731
        %v964 = vpack.c.b16 %v740, %v736
        %v965 = vpack.c.b16 %v741, %v737
        %v966 = vpack.c.b16 %v742, %v738
        %v967 = vpack.c.b16 %v743, %v739
        %v968 = vpack.c.b16 %v748, %v744
        %v969 = vpack.c.b16 %v749, %v745
        %v970 = vpack.c.b16 %v750, %v746
        %v971 = vpack.c.b16 %v751, %v747
        %v972 = vpack.c.b16 %v756, %v752
        %v973 = vpack.c.b16 %v757, %v753
        %v974 = vpack.c.b16 %v758, %v754
        %v975 = vpack.c.b16 %v759, %v755
        %v976 = vpack.c.b16 %v764, %v760
        %v977 = vpack.c.b16 %v765, %v761
        %v978 = vpack.c.b16 %v766, %v762
        %v979 = vpack.c.b16 %v767, %v763
        %v980 = vpack.c.b16 %v772, %v768
        %v981 = vpack.c.b16 %v773, %v769
        %v982 = vpack.c.b16 %v774, %v770
        %v983 = vpack.c.b16 %v775, %v771
        %v984 = vpack.c.b16 %v780, %v776
        %v985 = vpack.c.b16 %v781, %v777
        %v986 = vpack.c.b16 %v782, %v778
        %v987 = vpack.c.b16 %v783, %v779
        %v988 = vpack.c.b16 %v788, %v784
        %v989 = vpack.c.b16 %v789, %v785
        %v990 = vpack.c.b16 %v790, %v786
        %v991 = vpack.c.b16 %v791, %v787
        %v992 = vpack.c.b16 %v796, %v792
        %v993 = vpack.c.b16 %v797, %v793
        %v994 = vpack.c.b16 %v798, %v794
        %v995 = vpack.c.b16 %v799, %v795
        %v996 = vpack.c.b16 %v804, %v800
        %v997 = vpack.c.b16 %v805, %v801
        %v998 = vpack.c.b16 %v806, %v802
        %v999 = vpack.c.b16 %v807, %v803
        %v1000 = vpack.c.b16 %v812, %v808
        %v1001 = vpack.c.b16 %v813, %v809
        %v1002 = vpack.c.b16 %v814, %v810
        %v1003 = vpack.c.b16 %v815, %v811
        %v1004 = vpack.c.b16 %v820, %v816
        %v1005 = vpack.c.b16 %v821, %v817
        %v1006 = vpack.c.b16 %v822, %v818
        %v1007 = vpack.c.b16 %v823, %v819
        %v1008 = vpack.c.b16 %v828, %v824
        %v1009 = vpack.c.b16 %v829, %v825
        %v1010 = vpack.c.b16 %v830, %v826
        %v1011 = vpack.c.b16 %v831, %v827
        %v1012 = vpack.c.b16 %v836, %v832
        %v1013 = vpack.c.b16 %v837, %v833
        %v1014 = vpack.c.b16 %v838, %v834
        %v1015 = vpack.c.b16 %v839, %v835
        %v1016 = vpack.c.b16 %v844, %v840
        %v1017 = vpack.c.b16 %v845, %v841
        %v1018 = vpack.c.b16 %v846, %v842
        %v1019 = vpack.c.b16 %v847, %v843
        %v1020 = vpack.c.b16 %v852, %v848
        %v1021 = vpack.c.b16 %v853, %v849
        %v1022 = vpack.c.b16 %v854, %v850
        %v1023 = vpack.c.b16 %v855, %v851
        %v1024 = vpack.c.b16 %v860, %v856
        %v1025 = vpack.c.b16 %v861, %v857
        %v1026 = vpack.c.b16 %v862, %v858
        %v1027 = vpack.c.b16 %v863, %v859
        %v1028 = vpack.c.b16 %v868, %v864
        %v1029 = vpack.c.b16 %v869, %v865
        %v1030 = vpack.c.b16 %v870, %v866
        %v1031 = vpack.c.b16 %v871, %v867
        %v1032 = vpack.c.b16 %v876, %v872
        %v1033 = vpack.c.b16 %v877, %v873
        %v1034 = vpack.c.b16 %v878, %v874
        %v1035 = vpack.c.b16 %v879, %v875
        %v1036 = vpack.c.b16 %v884, %v880
        %v1037 = vpack.c.b16 %v885, %v881
        %v1038 = vpack.c.b16 %v886, %v882
        %v1039 = vpack.c.b16 %v887, %v883
        %v1040 = vpack.c.b16 %v892, %v888
        %v1041 = vpack.c.b16 %v893, %v889
        %v1042 = vpack.c.b16 %v894, %v890
        %v1043 = vpack.c.b16 %v895, %v891
        %v1044 = vpack.c.b16 %v900, %v896
        %v1045 = vpack.c.b16 %v901, %v897
        %v1046 = vpack.c.b16 %v902, %v898
        %v1047 = vpack.c.b16 %v903, %v899
        %v1048 = vpack.c.b16 %v908, %v904
        %v1049 = vpack.c.b16 %v909, %v905
        %v1050 = vpack.c.b16 %v910, %v906
        %v1051 = vpack.c.b16 %v911, %v907
        %v1052 = vpack.c.b16 %v916, %v912
        %v1053 = vpack.c.b16 %v917, %v913
        %v1054 = vpack.c.b16 %v918, %v914
        %v1055 = vpack.c.b16 %v919, %v915
        %v1056 = vpack.c.b16 %v924, %v920
        %v1057 = vpack.c.b16 %v925, %v921
        %v1058 = vpack.c.b16 %v926, %v922
        %v1059 = vpack.c.b16 %v927, %v923
        %v1060 = vpack.c.b16 %v932, %v928
        %v1061 = vpack.c.b16 %v933, %v929
        %v1062 = vpack.c.b16 %v934, %v930
        %v1063 = vpack.c.b16 %v935, %v931
        %1192 = vmatprep.subr.bf16.mxu0 %v937
        %1193 = vmatpush1.bf16.msra.mxu0 %v936
        %1194 = vmatprep.subr.bf16.mxu0 %v941
        %1195 = vmatpush1.bf16.msra.mxu0 %v940
        %1196 = vmatprep.subr.bf16.mxu0 %v945
        %1197 = vmatpush1.bf16.msra.mxu0 %v944
        %1198 = vmatprep.subr.bf16.mxu0 %v949
        %1199 = vmatpush1.bf16.msra.mxu0 %v948
        %1200 = vmatprep.subr.bf16.mxu0 %v953
        %1201 = vmatpush1.bf16.msra.mxu0 %v952
        %1202 = vmatprep.subr.bf16.mxu0 %v957
        %1203 = vmatpush1.bf16.msra.mxu0 %v956
        %1204 = vmatprep.subr.bf16.mxu0 %v961
        %1205 = vmatpush1.bf16.msra.mxu0 %v960
        %1206 = vmatprep.subr.bf16.mxu0 %v965
        %1207 = vmatpush1.bf16.msra.mxu0 %v964
        %1208 = vmatprep.subr.bf16.mxu0 %v969
        %1209 = vmatpush1.bf16.msra.mxu0 %v968
        %1210 = vmatprep.subr.bf16.mxu0 %v973
        %1211 = vmatpush1.bf16.msra.mxu0 %v972
        %1212 = vmatprep.subr.bf16.mxu0 %v977
        %1213 = vmatpush1.bf16.msra.mxu0 %v976
        %1214 = vmatprep.subr.bf16.mxu0 %v981
        %1215 = vmatpush1.bf16.msra.mxu0 %v980
        %1216 = vmatprep.subr.bf16.mxu0 %v985
        %1217 = vmatpush1.bf16.msra.mxu0 %v984
        %1218 = vmatprep.subr.bf16.mxu0 %v989
        %1219 = vmatpush1.bf16.msra.mxu0 %v988
        %1220 = vmatprep.subr.bf16.mxu0 %v993
        %1221 = vmatpush1.bf16.msra.mxu0 %v992
        %1222 = vmatprep.subr.bf16.mxu0 %v997
        %1223 = vmatpush1.bf16.msra.mxu0 %v996
        %1224 = vmatprep.mubr.bf16.mxu0 %v537
        %1225 = vmatmul.mubr.bf16.gmra.mrb[0].mxu0 %v536
        %v1226 = vpop.f32.mrb[0].mxu0
        %v1227 = vadd.f32 0.0, %v1226
        %v1228 = vpop.f32.mrb[0].mxu0
        %v1229 = vadd.f32 0.0, %v1228
        %v1230 = vpop.f32.mrb[0].mxu0
        %v1231 = vadd.f32 0.0, %v1230
        %v1232 = vpop.f32.mrb[0].mxu0
        %v1233 = vadd.f32 0.0, %v1232
        %1234 = vmatprep.mubr.bf16.mxu0 %v541
        %1235 = vmatmul.mubr.bf16.gmra.mrb[0].mxu0 %v540
        %v1236 = vpop.f32.mrb[0].mxu0
        %v1237 = vadd.f32 0.0, %v1236
        %v1238 = vpop.f32.mrb[0].mxu0
        %v1239 = vadd.f32 0.0, %v1238
        %v1240 = vpop.f32.mrb[0].mxu0
        %v1241 = vpop.f32.mrb[0].mxu0
        %1242 = vdwg.mxu0
        %1243 = vmatprep.subr.bf16.mxu0 %v1001
        %1244 = vmatpush1.bf16.msra.mxu0 %v1000
        %1245 = vmatprep.subr.bf16.mxu0 %v1005
        %1246 = vmatpush1.bf16.msra.mxu0 %v1004
        %1247 = vmatprep.subr.bf16.mxu0 %v1009
        %1248 = vmatpush1.bf16.msra.mxu0 %v1008
        %1249 = vmatprep.subr.bf16.mxu0 %v1013
        %1250 = vmatpush1.bf16.msra.mxu0 %v1012
        %1251 = vmatprep.subr.bf16.mxu0 %v1017
        %1252 = vmatpush1.bf16.msra.mxu0 %v1016
        %1253 = vmatprep.subr.bf16.mxu0 %v1021
        %1254 = vmatpush1.bf16.msra.mxu0 %v1020
        %1255 = vmatprep.subr.bf16.mxu0 %v1025
        %1256 = vmatpush1.bf16.msra.mxu0 %v1024
        %1257 = vmatprep.subr.bf16.mxu0 %v1029
        %1258 = vmatpush1.bf16.msra.mxu0 %v1028
        %1259 = vmatprep.subr.bf16.mxu0 %v1033
        %1260 = vmatpush1.bf16.msra.mxu0 %v1032
        %1261 = vmatprep.subr.bf16.mxu0 %v1037
        %1262 = vmatpush1.bf16.msra.mxu0 %v1036
        %1263 = vmatprep.subr.bf16.mxu0 %v1041
        %1264 = vmatpush1.bf16.msra.mxu0 %v1040
        %1265 = vmatprep.subr.bf16.mxu0 %v1045
        %1266 = vmatpush1.bf16.msra.mxu0 %v1044
        %1267 = vmatprep.subr.bf16.mxu0 %v1049
        %1268 = vmatpush1.bf16.msra.mxu0 %v1048
        %1269 = vmatprep.subr.bf16.mxu0 %v1053
        %1270 = vmatpush1.bf16.msra.mxu0 %v1052
        %1271 = vmatprep.subr.bf16.mxu0 %v1057
        %1272 = vmatpush1.bf16.msra.mxu0 %v1056
        %1273 = vmatprep.subr.bf16.mxu0 %v1061
        %1274 = vmatpush1.bf16.msra.mxu0 %v1060
        %1275 = vmatprep.mubr.bf16.mxu0 %v539
        %1276 = vmatmul.mubr.bf16.gmra.mrb[0].mxu0 %v538
        %v1277 = vpop.f32.mrb[0].mxu0
        %v1278 = vadd.f32 %v1227, %v1277
        %v1279 = vpop.f32.mrb[0].mxu0
        %v1280 = vadd.f32 %v1229, %v1279
        %v1281 = vpop.f32.mrb[0].mxu0
        %v1282 = vadd.f32 %v1231, %v1281
        %v1283 = vpop.f32.mrb[0].mxu0
        %v1284 = vadd.f32 %v1233, %v1283
        %1285 = vmatprep.mubr.bf16.mxu0 %v543
        %1286 = vmatmul.mubr.bf16.gmra.mrb[0].mxu0 %v542
        %v1287 = vpop.f32.mrb[0].mxu0
        %v1288 = vadd.f32 %v1237, %v1287
        %v1289 = vpop.f32.mrb[0].mxu0
        %v1290 = vadd.f32 %v1239, %v1289
        %v1291 = vpop.f32.mrb[0].mxu0
        %v1292 = vpop.f32.mrb[0].mxu0
        %1293 = vdwg.mxu0
        %1294 = vmatprep.subr.bf16.mxu0 %v939
        %1295 = vmatpush1.bf16.msra.mxu0 %v938
        %1296 = vmatprep.subr.bf16.mxu0 %v943
        %1297 = vmatpush1.bf16.msra.mxu0 %v942
        %1298 = vmatprep.subr.bf16.mxu0 %v947
        %1299 = vmatpush1.bf16.msra.mxu0 %v946
        %1300 = vmatprep.subr.bf16.mxu0 %v951
        %1301 = vmatpush1.bf16.msra.mxu0 %v950
        %1302 = vmatprep.subr.bf16.mxu0 %v955
        %1303 = vmatpush1.bf16.msra.mxu0 %v954
        %1304 = vmatprep.subr.bf16.mxu0 %v959
        %1305 = vmatpush1.bf16.msra.mxu0 %v958
        %1306 = vmatprep.subr.bf16.mxu0 %v963
        %1307 = vmatpush1.bf16.msra.mxu0 %v962
        %1308 = vmatprep.subr.bf16.mxu0 %v967
        %1309 = vmatpush1.bf16.msra.mxu0 %v966
        %1310 = vmatprep.subr.bf16.mxu0 %v971
        %1311 = vmatpush1.bf16.msra.mxu0 %v970
        %1312 = vmatprep.subr.bf16.mxu0 %v975
        %1313 = vmatpush1.bf16.msra.mxu0 %v974
        %1314 = vmatprep.subr.bf16.mxu0 %v979
        %1315 = vmatpush1.bf16.msra.mxu0 %v978
        %1316 = vmatprep.subr.bf16.mxu0 %v983
        %1317 = vmatpush1.bf16.msra.mxu0 %v982
        %1318 = vmatprep.subr.bf16.mxu0 %v987
        %1319 = vmatpush1.bf16.msra.mxu0 %v986
        %1320 = vmatprep.subr.bf16.mxu0 %v991
        %1321 = vmatpush1.bf16.msra.mxu0 %v990
        %1322 = vmatprep.subr.bf16.mxu0 %v995
        %1323 = vmatpush1.bf16.msra.mxu0 %v994
        %1324 = vmatprep.subr.bf16.mxu0 %v999
        %1325 = vmatpush1.bf16.msra.mxu0 %v998
        %1326 = vmatprep.mubr.bf16.mxu0 %v537
        %1327 = vmatmul.mubr.bf16.gmra.mrb[0].mxu0 %v536
        %v1328 = vpop.f32.mrb[0].mxu0
        %v1329 = vadd.f32 0.0, %v1328
        %v1330 = vpop.f32.mrb[0].mxu0
        %v1331 = vadd.f32 0.0, %v1330
        %v1332 = vpop.f32.mrb[0].mxu0
        %v1333 = vadd.f32 0.0, %v1332
        %v1334 = vpop.f32.mrb[0].mxu0
        %v1335 = vadd.f32 0.0, %v1334
        %1336 = vmatprep.mubr.bf16.mxu0 %v541
        %1337 = vmatmul.mubr.bf16.gmra.mrb[0].mxu0 %v540
        %v1338 = vpop.f32.mrb[0].mxu0
        %v1339 = vadd.f32 0.0, %v1338
        %v1340 = vpop.f32.mrb[0].mxu0
        %v1341 = vadd.f32 0.0, %v1340
        %v1342 = vpop.f32.mrb[0].mxu0
        %v1343 = vpop.f32.mrb[0].mxu0
        %1344 = vdwg.mxu0
        %1345 = vmatprep.subr.bf16.mxu0 %v1003
        %1346 = vmatpush1.bf16.msra.mxu0 %v1002
        %1347 = vmatprep.subr.bf16.mxu0 %v1007
        %1348 = vmatpush1.bf16.msra.mxu0 %v1006
        %1349 = vmatprep.subr.bf16.mxu0 %v1011
        %1350 = vmatpush1.bf16.msra.mxu0 %v1010
        %1351 = vmatprep.subr.bf16.mxu0 %v1015
        %1352 = vmatpush1.bf16.msra.mxu0 %v1014
        %1353 = vmatprep.subr.bf16.mxu0 %v1019
        %1354 = vmatpush1.bf16.msra.mxu0 %v1018
        %1355 = vmatprep.subr.bf16.mxu0 %v1023
        %1356 = vmatpush1.bf16.msra.mxu0 %v1022
        %1357 = vmatprep.subr.bf16.mxu0 %v1027
        %1358 = vmatpush1.bf16.msra.mxu0 %v1026
        %1359 = vmatprep.subr.bf16.mxu0 %v1031
        %1360 = vmatpush1.bf16.msra.mxu0 %v1030
        %1361 = vmatprep.subr.bf16.mxu0 %v1035
        %1362 = vmatpush1.bf16.msra.mxu0 %v1034
        %1363 = vmatprep.subr.bf16.mxu0 %v1039
        %1364 = vmatpush1.bf16.msra.mxu0 %v1038
        %1365 = vmatprep.subr.bf16.mxu0 %v1043
        %1366 = vmatpush1.bf16.msra.mxu0 %v1042
        %1367 = vmatprep.subr.bf16.mxu0 %v1047
        %1368 = vmatpush1.bf16.msra.mxu0 %v1046
        %1369 = vmatprep.subr.bf16.mxu0 %v1051
        %1370 = vmatpush1.bf16.msra.mxu0 %v1050
        %1371 = vmatprep.subr.bf16.mxu0 %v1055
        %1372 = vmatpush1.bf16.msra.mxu0 %v1054
        %1373 = vmatprep.subr.bf16.mxu0 %v1059
        %1374 = vmatpush1.bf16.msra.mxu0 %v1058
        %1375 = vmatprep.subr.bf16.mxu0 %v1063
        %1376 = vmatpush1.bf16.msra.mxu0 %v1062
        %1377 = vmatprep.mubr.bf16.mxu0 %v539
        %1378 = vmatmul.mubr.bf16.gmra.mrb[0].mxu0 %v538
        %v1379 = vpop.f32.mrb[0].mxu0
        %v1380 = vadd.f32 %v1329, %v1379
        %v1381 = vpop.f32.mrb[0].mxu0
        %v1382 = vadd.f32 %v1331, %v1381
        %v1383 = vpop.f32.mrb[0].mxu0
        %v1384 = vadd.f32 %v1333, %v1383
        %v1385 = vpop.f32.mrb[0].mxu0
        %v1386 = vadd.f32 %v1335, %v1385
        %1387 = vmatprep.mubr.bf16.mxu0 %v543
        %1388 = vmatmul.mubr.bf16.gmra.mrb[0].mxu0 %v542
        %v1389 = vpop.f32.mrb[0].mxu0
        %v1390 = vadd.f32 %v1339, %v1389
        %v1391 = vpop.f32.mrb[0].mxu0
        %v1392 = vadd.f32 %v1341, %v1391
        %v1393 = vpop.f32.mrb[0].mxu0
        %v1394 = vpop.f32.mrb[0].mxu0
        %1395 = vdwg.mxu0
        %v1396 = vadd.f32 %v372, %v1278
        %v1397 = vadd.f32 %v373, %v1280
        %v1398 = vadd.f32 %v374, %v1380
        %v1399 = vadd.f32 %v375, %v1382
        %v1400 = vadd.f32 %v376, %v1282
        %v1401 = vadd.f32 %v377, %v1284
        %v1402 = vadd.f32 %v378, %v1384
        %v1403 = vadd.f32 %v379, %v1386
        %v1404 = vadd.f32 %v380, %v1288
        %v1405 = vadd.f32 %v381, %v1290
        %v1406 = vadd.f32 %v382, %v1390
        %v1407 = vadd.f32 %v383, %v1392
        %1408 = vst [vmem:[%s333] sm:$0xff] %v1396
        %1409 = vst [vmem:[%s333 + $0x8] sm:$0xff] %v1397
        %1410 = vst [vmem:[%s333 + $0x10] sm:$0xff] %v1398
        %1411 = vst [vmem:[%s333 + $0x18] sm:$0xff] %v1399
        %1412 = vst [vmem:[%s333 + $0x20] sm:$0xff] %v1400
        %1413 = vst [vmem:[%s333 + $0x28] sm:$0xff] %v1401
        %1414 = vst [vmem:[%s333 + $0x30] sm:$0xff] %v1402
        %1415 = vst [vmem:[%s333 + $0x38] sm:$0xff] %v1403
        %1416 = vst [vmem:[%s333 + $0x40] sm:$0xff] %v1404
        %1417 = vst [vmem:[%s333 + $0x48] sm:$0xff] %v1405
        %1418 = vst [vmem:[%s333 + $0x50] sm:$0xff] %v1406
        %1419 = vst [vmem:[%s333 + $0x58] sm:$0xff] %v1407
        %p1420 = scmp.eq.s32.totalorder %s23, 7
        // Predicated region
        $region56: #{_lambda_.13} parent=46 // pred_check
          %p1421 = pneg %p1420
        $region57: #{_lambda_.13} parent=46 // pred_check_branch
          %1423 = sbr.rel (%p1421) target = $region59
        $region58: #{_lambda_.13} parent=46 // pred_region
          %v1424 = vld [vmem:[%s333] sm:$0xff]
          %v1425 = vld [vmem:[%s333 + $0x8] sm:$0xff]
          %v1426 = vld [vmem:[%s333 + $0x10] sm:$0xff]
          %v1427 = vld [vmem:[%s333 + $0x18] sm:$0xff]
          %v1428 = vld [vmem:[%s333 + $0x20] sm:$0xff]
          %v1429 = vld [vmem:[%s333 + $0x28] sm:$0xff]
          %v1430 = vld [vmem:[%s333 + $0x30] sm:$0xff]
          %v1431 = vld [vmem:[%s333 + $0x38] sm:$0xff]
          %v1432 = vld [vmem:[%s333 + $0x40] sm:$0xff]
          %v1433 = vld [vmem:[%s333 + $0x48] sm:$0xff]
          %v1434 = vld [vmem:[%s333 + $0x50] sm:$0xff]
          %v1435 = vld [vmem:[%s333 + $0x58] sm:$0xff]
          %v1436 = vadd.f32 %v1424, %v1428
          %v1437 = vadd.f32 %v1436, %v1432
          %v1438 = vrot.slane %v1437, 4
          %v1439 = vadd.f32 %v1437, %v1438
          %v1440 = vrot.slane %v1439, 2
          %v1441 = vadd.f32 %v1439, %v1440
          %v1442 = vrot.slane %v1441, 1
          %v1443 = vadd.f32 %v1441, %v1442
          %v1444 = vadd.f32 %v1425, %v1429
          %v1445 = vadd.f32 %v1444, %v1433
          %v1446 = vrot.slane %v1445, 4
          %v1447 = vadd.f32 %v1445, %v1446
          %v1448 = vrot.slane %v1447, 2
          %v1449 = vadd.f32 %v1447, %v1448
          %v1450 = vrot.slane %v1449, 1
          %v1451 = vadd.f32 %v1449, %v1450
          %v1452 = vadd.f32 %v1426, %v1430
          %v1453 = vadd.f32 %v1452, %v1434
          %v1454 = vrot.slane %v1453, 4
          %v1455 = vadd.f32 %v1453, %v1454
          %v1456 = vrot.slane %v1455, 2
          %v1457 = vadd.f32 %v1455, %v1456
          %v1458 = vrot.slane %v1457, 1
          %v1459 = vadd.f32 %v1457, %v1458
          %v1460 = vadd.f32 %v1427, %v1431
          %v1461 = vadd.f32 %v1460, %v1435
          %v1462 = vrot.slane %v1461, 4
          %v1463 = vadd.f32 %v1461, %v1462
          %v1464 = vrot.slane %v1463, 2
          %v1465 = vadd.f32 %v1463, %v1464
          %v1466 = vrot.slane %v1465, 1
          %v1467 = vadd.f32 %v1465, %v1466
          %v1468 = vmul.f32 %v1424, %v1424
          %v1469 = vmul.f32 %v1425, %v1425
          %v1470 = vmul.f32 %v1426, %v1426
          %v1471 = vmul.f32 %v1427, %v1427
          %v1472 = vmul.f32 %v1428, %v1428
          %v1473 = vmul.f32 %v1429, %v1429
          %v1474 = vmul.f32 %v1430, %v1430
          %v1475 = vmul.f32 %v1431, %v1431
          %v1476 = vmul.f32 %v1432, %v1432
          %v1477 = vmul.f32 %v1433, %v1433
          %v1478 = vmul.f32 %v1434, %v1434
          %v1479 = vmul.f32 %v1435, %v1435
          %v1480 = vadd.f32 %v1468, %v1472
          %v1481 = vadd.f32 %v1480, %v1476
          %v1482 = vrot.slane %v1481, 4
          %v1483 = vadd.f32 %v1481, %v1482
          %v1484 = vrot.slane %v1483, 2
          %v1485 = vadd.f32 %v1483, %v1484
          %v1486 = vrot.slane %v1485, 1
          %v1487 = vadd.f32 %v1485, %v1486
          %v1488 = vadd.f32 %v1469, %v1473
          %v1489 = vadd.f32 %v1488, %v1477
          %v1490 = vrot.slane %v1489, 4
          %v1491 = vadd.f32 %v1489, %v1490
          %v1492 = vrot.slane %v1491, 2
          %v1493 = vadd.f32 %v1491, %v1492
          %v1494 = vrot.slane %v1493, 1
          %v1495 = vadd.f32 %v1493, %v1494
          %v1496 = vadd.f32 %v1470, %v1474
          %v1497 = vadd.f32 %v1496, %v1478
          %v1498 = vrot.slane %v1497, 4
          %v1499 = vadd.f32 %v1497, %v1498
          %v1500 = vrot.slane %v1499, 2
          %v1501 = vadd.f32 %v1499, %v1500
          %v1502 = vrot.slane %v1501, 1
          %v1503 = vadd.f32 %v1501, %v1502
          %v1504 = vadd.f32 %v1471, %v1475
          %v1505 = vadd.f32 %v1504, %v1479
          %v1506 = vrot.slane %v1505, 4
          %v1507 = vadd.f32 %v1505, %v1506
          %v1508 = vrot.slane %v1507, 2
          %v1509 = vadd.f32 %v1507, %v1508
          %v1510 = vrot.slane %v1509, 1
          %v1511 = vadd.f32 %v1509, %v1510
          %1512 = vst [vmem:[%s344] sm:$0xff] %v1443
          %1513 = vst [vmem:[%s344 + $0x8] sm:$0xff] %v1451
          %1514 = vst [vmem:[%s344 + $0x10] sm:$0xff] %v1459
          %1515 = vst [vmem:[%s344 + $0x18] sm:$0xff] %v1467
          %1516 = vst [vmem:[%s354] sm:$0xff] %v1487
          %1517 = vst [vmem:[%s354 + $0x8] sm:$0xff] %v1495
          %1518 = vst [vmem:[%s354 + $0x10] sm:$0xff] %v1503
          %1519 = vst [vmem:[%s354 + $0x18] sm:$0xff] %v1511
        $region59: #{_lambda_.13} parent=46 // pred_fallthru
          _
        %s1520 = smul.u32 3, %s21
        %s1521 = smul.u32 4, %s22
        %p1522 = scmp.lt.s32.totalorder %s1520, 2
        %s1523 = scalar_select %p1522, %s1520, 2
        %p1524 = scmp.lt.s32.totalorder %s1521, 3
        %s1525 = scalar_select %p1524, %s1521, 3
        %s1526 = smul.addr %s1523, 4
        %s1527 = sadd.s32 %s1525, %s1526
        %s1528 = smul.addr %s1527, 8
        %s1529 = scalar_lea.vmem %s2, %s1528
        %s1530 = smul.u32 4, %s22
        %p1531 = scmp.lt.s32.totalorder %s21, 0
        %s1532 = scalar_select %p1531, %s21, 0
        %p1533 = scmp.lt.s32.totalorder %s1530, 3
        %s1534 = scalar_select %p1533, %s1530, 3
        %s1535 = smul.addr %s1532, 4
        %s1536 = sadd.s32 %s1534, %s1535
        %s1537 = smul.addr %s1536, 8
        %s1538 = scalar_lea.vmem %s3, %s1537
        %s1539 = smul.u32 4, %s22
        %p1540 = scmp.lt.s32.totalorder %s21, 0
        %s1541 = scalar_select %p1540, %s21, 0
        %p1542 = scmp.lt.s32.totalorder %s1539, 3
        %s1543 = scalar_select %p1542, %s1539, 3
        %s1544 = smul.addr %s1541, 4
        %s1545 = sadd.s32 %s1543, %s1544
        %s1546 = smul.addr %s1545, 8
        %s1547 = scalar_lea.vmem %s4, %s1546
        // Predicated region
        $region60: #{_lambda_.13} parent=46 // pred_check
          %p1548 = pneg %p111
        $region61: #{_lambda_.13} parent=46 // pred_check_branch
          %1550 = sbr.rel (%p1548) target = $region63
        $region62: #{_lambda_.13} parent=46 // pred_region
          %s1551 = smul.u32 3, %s21
          %s1552 = smul.u32 4, %s22
        $region63: #{_lambda_.13} parent=46 // pred_fallthru
          _
        // Predicated region
        $region64: #{_lambda_.13} parent=46 // pred_check
          %p1553 = pneg %p139
        $region65: #{_lambda_.13} parent=46 // pred_check_branch
          %1555 = sbr.rel (%p1553) target = $region67
        $region66: #{_lambda_.13} parent=46 // pred_region
          %s1556 = smul.u32 4, %s22
        $region67: #{_lambda_.13} parent=46 // pred_fallthru
          _
        // Predicated region
        $region68: #{_lambda_.13} parent=46 // pred_check
          %p1557 = pneg %p167
        $region69: #{_lambda_.13} parent=46 // pred_check_branch
          %1559 = sbr.rel (%p1557) target = $region71
        $region70: #{_lambda_.13} parent=46 // pred_region
          %s1560 = smul.u32 4, %s22
        $region71: #{_lambda_.13} parent=46 // pred_fallthru
          _
        // Predicated region
        $region72: #{_lambda_.13} parent=46 // pred_check
          %p1561 = pneg %p111
        $region73: #{_lambda_.13} parent=46 // pred_check_branch
          %1563 = sbr.rel (%p1561) target = $region75
        $region74: #{_lambda_.13} parent=46 // pred_region
          %s1564 = smul.u32 3, %s21
          %s1565 = smul.u32 4, %s22
          %p1566 = scmp.lt.s32.totalorder %s1564, 2
          %s1567 = scalar_select %p1566, %s1564, 2
          %p1568 = scmp.lt.s32.totalorder %s1565, 3
          %s1569 = scalar_select %p1568, %s1565, 3
          %s1570 = smul.addr %s1567, 4
          %s1571 = sadd.s32 %s1569, %s1570
          %s1572 = smul.addr %s1571, 8
          %s1573 = scalar_lea.vmem %s2, %s1572
        $region75: #{_lambda_.13} parent=46 // pred_fallthru
          _
        // Predicated region
        $region76: #{_lambda_.13} parent=46 // pred_check
          %p1574 = pneg %p139
        $region77: #{_lambda_.13} parent=46 // pred_check_branch
          %1576 = sbr.rel (%p1574) target = $region79
        $region78: #{_lambda_.13} parent=46 // pred_region
          %s1577 = smul.u32 4, %s22
          %p1578 = scmp.lt.s32.totalorder %s21, 0
          %s1579 = scalar_select %p1578, %s21, 0
          %p1580 = scmp.lt.s32.totalorder %s1577, 3
          %s1581 = scalar_select %p1580, %s1577, 3
          %s1582 = smul.addr %s1579, 4
          %s1583 = sadd.s32 %s1581, %s1582
          %s1584 = smul.addr %s1583, 8
          %s1585 = scalar_lea.vmem %s3, %s1584
        $region79: #{_lambda_.13} parent=46 // pred_fallthru
          _
        // Predicated region
        $region80: #{_lambda_.13} parent=46 // pred_check
          %p1586 = pneg %p167
        $region81: #{_lambda_.13} parent=46 // pred_check_branch
          %1588 = sbr.rel (%p1586) target = $region83
        $region82: #{_lambda_.13} parent=46 // pred_region
          %s1589 = smul.u32 4, %s22
          %p1590 = scmp.lt.s32.totalorder %s21, 0
          %s1591 = scalar_select %p1590, %s21, 0
          %p1592 = scmp.lt.s32.totalorder %s1589, 3
          %s1593 = scalar_select %p1592, %s1589, 3
          %s1594 = smul.addr %s1591, 4
          %s1595 = sadd.s32 %s1593, %s1594
          %s1596 = smul.addr %s1595, 8
          %s1597 = scalar_lea.vmem %s4, %s1596
        $region83: #{_lambda_.13} parent=46 // pred_fallthru
          _
      $region47: #{_lambda_.13} parent=5 // pred_fallthru
        _
      %p1598 = scmp.le.s32.totalorder 2, %s11
      // Predicated region
      $region84: #{_lambda_.13} parent=5 // pred_check
        %p1599 = pneg %p1598
      $region85: #{_lambda_.13} parent=5 // pred_check_branch
        %1601 = sbr.rel (%p1599) target = $region87
      $region86: #{_lambda_.13} parent=5 // pred_region
        %s1602 = ssub.s32 %s11, 2
      $region87: #{_lambda_.13} parent=5 // pred_fallthru
        _
    $region6: #{_lambda_.13} parent=1 // loop_footer
      %s15 = sadd.s32 1, %s11
    $region7: #{_lambda_.13} parent=1 // loop_footer_branch
      %10 = sbr.rel target = $region3
    $region8: #{_lambda_.13} parent=1 // loop_exit
      _

// kernel: _lambda_.15
$region0: #{_lambda_.15}
  #allocation0 [shape = 'u32[]', space=smem, size = 0x4, offset = 0x4, fixed_abs, tag = 'smem constant byte address 0x4 - core index']
  #allocation1 [shape = 'u32[144,128]{1,0:T(1,128)}', space=vmem, size = 0x12000, scoped, tag = 'internal scratch']
  %s0 = inlined_call_operand.vmem [shape: bf16[8,8192], index: 0, kind: input, shape index: {}]
  %s1 = inlined_call_operand.vmem [shape: bf16[8192,128], index: 1, kind: input, shape index: {}]
  %s2 = inlined_call_operand.vmem [shape: f32[1,128], index: 2, kind: input, shape index: {}]
  %s3 = inlined_call_operand.vmem [shape: f32[8,128], index: 3, kind: output, shape index: {}]
  %s4 = sld [smem:[#allocation0]]
  $region53: #{_lambda_.15} parent=0
    _
  %s6 = ssub.s32 1, %s4
  %s7 = scalar_select 0, %s6, %s4
  loop: start=0, step=1, limit=18
  $region2: #{_lambda_.15} parent=0 // loop_pre_header
    _
  $region3: #{_lambda_.15} parent=0 // loop_header
    %s9 = sphi 0, %s13
    %p10 = scmp.ge.s32.totalorder %s9, 18
    %s16 = sphi 0, %s35
    %s17 = sphi 0, %s31
    %s18 = sphi 0, %s27
    %s19 = sphi 0, %s16
    %s20 = sphi 0, %s17
    %s21 = sphi 0, %s18
    %s22 = sphi 0, %s19
    %s23 = sphi 0, %s20
    %s24 = sphi 0, %s21
    %s40 = sphi 0, %s42
    %s43 = sphi 0, %s40
    %s44 = sphi 0, %s43
    %s60 = sphi 0, %s44
    %s68 = sphi 0, %s70
    %s71 = sphi 0, %s68
    %s72 = sphi 0, %s71
    %s88 = sphi 0, %s72
    %s94 = sphi 0, %s96
    %s97 = sphi 0, %s94
    %s98 = sphi 0, %s97
    %s114 = sphi 0, %s98
    %s122 = sphi 0, %s124
    %s125 = sphi 0, %s122
    %s126 = sphi 0, %s125
    %s142 = sphi 0, %s126
  $region4: #{_lambda_.15} parent=0 // loop_header_branch
    %12 = sbr.rel (%p10) target = $region8
  $region5: #{_lambda_.15} parent=0 // loop_body
    %s14 = ssub.s32 %s9, 1
    %s15 = ssub.s32 %s9, 2
    %s25 = sadd.s32 1, %s18
    %p26 = scmp.ge.s32.totalorder %s25, 16
    %s27 = scalar_select %p26, 0, %s25
    %s28 = sadd.s32 1, %s17
    %s29 = scalar_select %p26, %s28, %s17
    %p30 = scmp.ge.s32.totalorder %s29, 1
    %s31 = scalar_select %p30, 0, %s29
    %s32 = sadd.s32 1, %s16
    %s33 = scalar_select %p30, %s32, %s16
    %p34 = scmp.ge.s32.totalorder %s33, 1
    %s35 = scalar_select %p34, 0, %s33
    %s36 = ssub.s32 %s16, %s35
    %s37 = ssub.s32 %s18, %s27
    %s38 = sor.u32 %s36, %s37
    %p39 = scmp.eq.s32.totalorder %s38, 0
    %s41 = sadd.s32 %s40, 1
    %s42 = scalar_select %p39, %s40, %s41
    %p45 = pneg %p39
    %p46 = scmp.eq.s32.totalorder %s9, 15
    %p47 = por %p45, %p46
    %p48 = scmp.ne.s32.totalorder %s40, %s43
    %p49 = scmp.eq.s32.totalorder %s9, 0
    %p50 = por %p48, %p49
    %p51 = scmp.ne.s32.totalorder %s40, %s43
    %p52 = scmp.eq.s32.totalorder %s14, 15
    %p53 = por %p51, %p52
    %p54 = scmp.ne.s32.totalorder %s43, %s44
    %p55 = scmp.eq.s32.totalorder %s14, 0
    %p56 = por %p54, %p55
    %p57 = scmp.ne.s32.totalorder %s43, %s44
    %p58 = scmp.eq.s32.totalorder %s15, 15
    %p59 = por %p57, %p58
    %p61 = scmp.ne.s32.totalorder %s44, %s60
    %p62 = scmp.eq.s32.totalorder %s15, 0
    %p63 = por %p61, %p62
    %s64 = ssub.s32 %s18, %s27
    %s65 = ssub.s32 %s17, %s31
    %s66 = sor.u32 %s64, %s65
    %p67 = scmp.eq.s32.totalorder %s66, 0
    %s69 = sadd.s32 %s68, 1
    %s70 = scalar_select %p67, %s68, %s69
    %p73 = pneg %p67
    %p74 = scmp.eq.s32.totalorder %s9, 15
    %p75 = por %p73, %p74
    %p76 = scmp.ne.s32.totalorder %s68, %s71
    %p77 = scmp.eq.s32.totalorder %s9, 0
    %p78 = por %p76, %p77
    %p79 = scmp.ne.s32.totalorder %s68, %s71
    %p80 = scmp.eq.s32.totalorder %s14, 15
    %p81 = por %p79, %p80
    %p82 = scmp.ne.s32.totalorder %s71, %s72
    %p83 = scmp.eq.s32.totalorder %s14, 0
    %p84 = por %p82, %p83
    %p85 = scmp.ne.s32.totalorder %s71, %s72
    %p86 = scmp.eq.s32.totalorder %s15, 15
    %p87 = por %p85, %p86
    %p89 = scmp.ne.s32.totalorder %s72, %s88
    %p90 = scmp.eq.s32.totalorder %s15, 0
    %p91 = por %p89, %p90
    %s92 = ssub.s32 %s17, %s31
    %p93 = scmp.eq.s32.totalorder %s92, 0
    %s95 = sadd.s32 %s94, 1
    %s96 = scalar_select %p93, %s94, %s95
    %p99 = pneg %p93
    %p100 = scmp.eq.s32.totalorder %s9, 15
    %p101 = por %p99, %p100
    %p102 = scmp.ne.s32.totalorder %s94, %s97
    %p103 = scmp.eq.s32.totalorder %s9, 0
    %p104 = por %p102, %p103
    %p105 = scmp.ne.s32.totalorder %s94, %s97
    %p106 = scmp.eq.s32.totalorder %s14, 15
    %p107 = por %p105, %p106
    %p108 = scmp.ne.s32.totalorder %s97, %s98
    %p109 = scmp.eq.s32.totalorder %s14, 0
    %p110 = por %p108, %p109
    %p111 = scmp.ne.s32.totalorder %s97, %s98
    %p112 = scmp.eq.s32.totalorder %s15, 15
    %p113 = por %p111, %p112
    %p115 = scmp.ne.s32.totalorder %s98, %s114
    %p116 = scmp.eq.s32.totalorder %s15, 0
    %p117 = por %p115, %p116
    %s118 = ssub.s32 %s16, %s35
    %s119 = ssub.s32 %s17, %s31
    %s120 = sor.u32 %s118, %s119
    %p121 = scmp.eq.s32.totalorder %s120, 0
    %s123 = sadd.s32 %s122, 1
    %s124 = scalar_select %p121, %s122, %s123
    %p127 = pneg %p121
    %p128 = scmp.eq.s32.totalorder %s9, 15
    %p129 = por %p127, %p128
    %p130 = scmp.ne.s32.totalorder %s122, %s125
    %p131 = scmp.eq.s32.totalorder %s9, 0
    %p132 = por %p130, %p131
    %p133 = scmp.ne.s32.totalorder %s122, %s125
    %p134 = scmp.eq.s32.totalorder %s14, 15
    %p135 = por %p133, %p134
    %p136 = scmp.ne.s32.totalorder %s125, %s126
    %p137 = scmp.eq.s32.totalorder %s14, 0
    %p138 = por %p136, %p137
    %p139 = scmp.ne.s32.totalorder %s125, %s126
    %p140 = scmp.eq.s32.totalorder %s15, 15
    %p141 = por %p139, %p140
    %p143 = scmp.ne.s32.totalorder %s126, %s142
    %p144 = scmp.eq.s32.totalorder %s15, 0
    %p145 = por %p143, %p144
    %p146 = scmp.le.s32.totalorder 1, %s9
    %p147 = scmp.lt.s32.totalorder %s9, 17
    %p148 = pnand %p146, %p147
    %p149 = pneg %p148
    // Predicated region
    $region9: #{_lambda_.15} parent=5 // pred_check
      _
    $region10: #{_lambda_.15} parent=5 // pred_check_branch
      %151 = sbr.rel (%p148) target = $region12
    $region11: #{_lambda_.15} parent=5 // pred_region
      %s152 = ssub.s32 %s9, 1
      // Predicated region
      $region13: #{_lambda_.15} parent=11 // pred_check
        %p153 = pneg %p110
      $region14: #{_lambda_.15} parent=11 // pred_check_branch
        %155 = sbr.rel (%p153) target = $region16
      $region15: #{_lambda_.15} parent=11 // pred_region
        %p156 = scmp.lt.s32.totalorder %s20, 0
        %s157 = scalar_select %p156, %s20, 0
        %s158 = scalar_lea.vmem %s2, %s157
      $region16: #{_lambda_.15} parent=11 // pred_fallthru
        _
    $region12: #{_lambda_.15} parent=5 // pred_fallthru
      _
    %p159 = scmp.lt.s32.totalorder %s9, 16
    // Predicated region
    $region17: #{_lambda_.15} parent=5 // pred_check
      %p160 = pneg %p159
    $region18: #{_lambda_.15} parent=5 // pred_check_branch
      %162 = sbr.rel (%p160) target = $region20
    $region19: #{_lambda_.15} parent=5 // pred_region
      // Predicated region
      $region21: #{_lambda_.15} parent=19 // pred_check
        %p163 = pneg %p50
      $region22: #{_lambda_.15} parent=19 // pred_check_branch
        %165 = sbr.rel (%p163) target = $region24
      $region23: #{_lambda_.15} parent=19 // pred_region
        %s166 = smul.u32 4, %s18
        %p167 = scmp.lt.s32.totalorder %s16, 0
        %s168 = scalar_select %p167, %s16, 0
        %p169 = scmp.lt.s32.totalorder %s166, 63
        %s170 = scalar_select %p169, %s166, 63
        %s171 = smul.addr %s168, 64
        %s172 = sadd.s32 %s170, %s171
        %s173 = smul.addr %s172, 4
        %s174 = scalar_lea.vmem %s0, %s173
        %s175 = smul.u32 4, %s18
      $region24: #{_lambda_.15} parent=19 // pred_fallthru
        _
      // Predicated region
      $region25: #{_lambda_.15} parent=19 // pred_check
        %p176 = pneg %p78
      $region26: #{_lambda_.15} parent=19 // pred_check_branch
        %178 = sbr.rel (%p176) target = $region28
      $region27: #{_lambda_.15} parent=19 // pred_region
        %s179 = smul.u32 64, %s18
        %p180 = scmp.lt.s32.totalorder %s179, 1023
        %s181 = scalar_select %p180, %s179, 1023
        %p182 = scmp.lt.s32.totalorder %s17, 0
        %s183 = scalar_select %p182, %s17, 0
        %s184 = sadd.s32 %s183, %s181
        %s185 = smul.addr %s184, 4
        %s186 = scalar_lea.vmem %s1, %s185
        %s187 = smul.u32 64, %s18
      $region28: #{_lambda_.15} parent=19 // pred_fallthru
        _
    $region20: #{_lambda_.15} parent=5 // pred_fallthru
      _
    %p188 = scmp.le.s32.totalorder 1, %s9
    %p189 = scmp.lt.s32.totalorder %s9, 17
    %p190 = pnand %p188, %p189
    %p191 = pneg %p190
    // Predicated region
    $region29: #{_lambda_.15} parent=5 // pred_check
      _
    $region30: #{_lambda_.15} parent=5 // pred_check_branch
      %193 = sbr.rel (%p190) target = $region32
    $region31: #{_lambda_.15} parent=5 // pred_region
      %s194 = ssub.s32 %s9, 1
      %s195 = smul.u32 4, %s21
      %p196 = scmp.lt.s32.totalorder %s19, 0
      %s197 = scalar_select %p196, %s19, 0
      %p198 = scmp.lt.s32.totalorder %s195, 63
      %s199 = scalar_select %p198, %s195, 63
      %s200 = smul.addr %s197, 64
      %s201 = sadd.s32 %s199, %s200
      %s202 = smul.addr %s201, 4
      %s203 = scalar_lea.vmem %s0, %s202
      %p204 = pneg %p56
      %p205 = pneg %p53
      %s206 = smul.u32 64, %s21
      %p207 = scmp.lt.s32.totalorder %s206, 1023
      %s208 = scalar_select %p207, %s206, 1023
      %p209 = scmp.lt.s32.totalorder %s20, 0
      %s210 = scalar_select %p209, %s20, 0
      %s211 = sadd.s32 %s210, %s208
      %s212 = smul.addr %s211, 4
      %s213 = scalar_lea.vmem %s1, %s212
      %p214 = pneg %p84
      %p215 = pneg %p81
      %p216 = scmp.lt.s32.totalorder %s20, 0
      %s217 = scalar_select %p216, %s20, 0
      %s218 = scalar_lea.vmem %s2, %s217
      %p219 = pneg %p110
      %p220 = pneg %p107
      %p221 = pneg %p138
      %p222 = pneg %p135
      %p223 = scmp.lt.s32.totalorder %s19, 0
      %s224 = scalar_select %p223, %s19, 0
      %p225 = scmp.lt.s32.totalorder %s20, 0
      %s226 = scalar_select %p225, %s20, 0
      %s227 = sadd.s32 %s226, %s224
      %s228 = smul.addr %s227, 8
      %s229 = scalar_lea.vmem %s3, %s228
      %s230 = smul.u32 4, %s21
      %p231 = scmp.lt.s32.totalorder %s19, 0
      %s232 = scalar_select %p231, %s19, 0
      %p233 = scmp.lt.s32.totalorder %s230, 63
      %s234 = scalar_select %p233, %s230, 63
      %s235 = smul.addr %s232, 64
      %s236 = sadd.s32 %s234, %s235
      %s237 = smul.addr %s236, 4
      %s238 = scalar_lea.vmem %s0, %s237
      %s239 = smul.u32 4, %s21
      %s240 = smul.u32 64, %s21
      %p241 = scmp.lt.s32.totalorder %s240, 1023
      %s242 = scalar_select %p241, %s240, 1023
      %p243 = scmp.lt.s32.totalorder %s20, 0
      %s244 = scalar_select %p243, %s20, 0
      %s245 = sadd.s32 %s244, %s242
      %s246 = smul.addr %s245, 4
      %s247 = scalar_lea.vmem %s1, %s246
      %s248 = smul.u32 64, %s21
      %p249 = scmp.lt.s32.totalorder %s20, 0
      %s250 = scalar_select %p249, %s20, 0
      %s251 = scalar_lea.vmem %s2, %s250
      %p252 = scmp.lt.s32.totalorder %s19, 0
      %s253 = scalar_select %p252, %s19, 0
      %p254 = scmp.lt.s32.totalorder %s20, 0
      %s255 = scalar_select %p254, %s20, 0
      %s256 = sadd.s32 %s255, %s253
      %s257 = smul.addr %s256, 8
      %s258 = scalar_lea.vmem %s3, %s257
      %p260 = scmp.eq.s32.totalorder %s21, 0
      // Predicated region
      $region33: #{_lambda_.15} parent=31 // pred_check
        %p261 = pneg %p260
      $region34: #{_lambda_.15} parent=31 // pred_check_branch
        %263 = sbr.rel (%p261) target = $region36
      $region35: #{_lambda_.15} parent=31 // pred_region
        %264 = vst [vmem:[%s258] sm:$0xff] 0.0
      $region36: #{_lambda_.15} parent=31 // pred_fallthru
        _
      %v265 = vld [vmem:[%s258] sm:$0xff]
      %v266 = vld [vmem:[%s238] sm:$0xff]
      %v267 = vld [vmem:[%s238 + $0x8] sm:$0xff]
      %v268 = vld [vmem:[%s247] sm:$0xf]
      %v269 = vld [vmem:[%s247 + $0x4] sm:$0xf]
      %v270 = vld [vmem:[%s247 + $0x8] sm:$0xf]
      %v271 = vld [vmem:[%s247 + $0xc] sm:$0xf]
      %v272 = vld [vmem:[%s247 + $0x10] sm:$0xf]
      %v273 = vld [vmem:[%s247 + $0x14] sm:$0xf]
      %v274 = vld [vmem:[%s247 + $0x18] sm:$0xf]
      %v275 = vld [vmem:[%s247 + $0x1c] sm:$0xf]
      %v276 = vld [vmem:[%s247 + $0x20] sm:$0xf]
      %v277 = vld [vmem:[%s247 + $0x24] sm:$0xf]
      %v278 = vld [vmem:[%s247 + $0x28] sm:$0xf]
      %v279 = vld [vmem:[%s247 + $0x2c] sm:$0xf]
      %v280 = vld [vmem:[%s247 + $0x30] sm:$0xf]
      %v281 = vld [vmem:[%s247 + $0x34] sm:$0xf]
      %v282 = vld [vmem:[%s247 + $0x38] sm:$0xf]
      %v283 = vld [vmem:[%s247 + $0x3c] sm:$0xf]
      %v284 = vld [vmem:[%s247 + $0x40] sm:$0xf]
      %v285 = vld [vmem:[%s247 + $0x44] sm:$0xf]
      %v286 = vld [vmem:[%s247 + $0x48] sm:$0xf]
      %v287 = vld [vmem:[%s247 + $0x4c] sm:$0xf]
      %v288 = vld [vmem:[%s247 + $0x50] sm:$0xf]
      %v289 = vld [vmem:[%s247 + $0x54] sm:$0xf]
      %v290 = vld [vmem:[%s247 + $0x58] sm:$0xf]
      %v291 = vld [vmem:[%s247 + $0x5c] sm:$0xf]
      %v292 = vld [vmem:[%s247 + $0x60] sm:$0xf]
      %v293 = vld [vmem:[%s247 + $0x64] sm:$0xf]
      %v294 = vld [vmem:[%s247 + $0x68] sm:$0xf]
      %v295 = vld [vmem:[%s247 + $0x6c] sm:$0xf]
      %v296 = vld [vmem:[%s247 + $0x70] sm:$0xf]
      %v297 = vld [vmem:[%s247 + $0x74] sm:$0xf]
      %v298 = vld [vmem:[%s247 + $0x78] sm:$0xf]
      %v299 = vld [vmem:[%s247 + $0x7c] sm:$0xf]
      %v300 = vld [vmem:[%s247 + $0x80] sm:$0xf]
      %v301 = vld [vmem:[%s247 + $0x84] sm:$0xf]
      %v302 = vld [vmem:[%s247 + $0x88] sm:$0xf]
      %v303 = vld [vmem:[%s247 + $0x8c] sm:$0xf]
      %v304 = vld [vmem:[%s247 + $0x90] sm:$0xf]
      %v305 = vld [vmem:[%s247 + $0x94] sm:$0xf]
      %v306 = vld [vmem:[%s247 + $0x98] sm:$0xf]
      %v307 = vld [vmem:[%s247 + $0x9c] sm:$0xf]
      %v308 = vld [vmem:[%s247 + $0xa0] sm:$0xf]
      %v309 = vld [vmem:[%s247 + $0xa4] sm:$0xf]
      %v310 = vld [vmem:[%s247 + $0xa8] sm:$0xf]
      %v311 = vld [vmem:[%s247 + $0xac] sm:$0xf]
      %v312 = vld [vmem:[%s247 + $0xb0] sm:$0xf]
      %v313 = vld [vmem:[%s247 + $0xb4] sm:$0xf]
      %v314 = vld [vmem:[%s247 + $0xb8] sm:$0xf]
      %v315 = vld [vmem:[%s247 + $0xbc] sm:$0xf]
      %v316 = vld [vmem:[%s247 + $0xc0] sm:$0xf]
      %v317 = vld [vmem:[%s247 + $0xc4] sm:$0xf]
      %v318 = vld [vmem:[%s247 + $0xc8] sm:$0xf]
      %v319 = vld [vmem:[%s247 + $0xcc] sm:$0xf]
      %v320 = vld [vmem:[%s247 + $0xd0] sm:$0xf]
      %v321 = vld [vmem:[%s247 + $0xd4] sm:$0xf]
      %v322 = vld [vmem:[%s247 + $0xd8] sm:$0xf]
      %v323 = vld [vmem:[%s247 + $0xdc] sm:$0xf]
      %v324 = vld [vmem:[%s247 + $0xe0] sm:$0xf]
      %v325 = vld [vmem:[%s247 + $0xe4] sm:$0xf]
      %v326 = vld [vmem:[%s247 + $0xe8] sm:$0xf]
      %v327 = vld [vmem:[%s247 + $0xec] sm:$0xf]
      %v328 = vld [vmem:[%s247 + $0xf0] sm:$0xf]
      %v329 = vld [vmem:[%s247 + $0xf4] sm:$0xf]
      %v330 = vld [vmem:[%s247 + $0xf8] sm:$0xf]
      %v331 = vld [vmem:[%s247 + $0xfc] sm:$0xf]
      %v334 = vunpack.c.l.b16 %v266
      %v335 = vunpack.c.h.b16 %v266
      %v336 = vunpack.c.l.b16 %v267
      %v337 = vunpack.c.h.b16 %v267
      %v338 = vpack.c.b16 %v334, %v334
      %v339 = vpack.c.b16 %v335, %v335
      %v340 = vpack.c.b16 %v336, %v336
      %v341 = vpack.c.b16 %v337, %v337
      %v410 = vunpack.c.l.b16 %v268
      %v411 = vunpack.c.l.b16 %v269
      %v412 = vunpack.c.l.b16 %v270
      %v413 = vunpack.c.l.b16 %v271
      %v414 = vunpack.c.l.b16 %v272
      %v415 = vunpack.c.l.b16 %v273
      %v416 = vunpack.c.l.b16 %v274
      %v417 = vunpack.c.l.b16 %v275
      %v418 = vunpack.c.l.b16 %v276
      %v419 = vunpack.c.l.b16 %v277
      %v420 = vunpack.c.l.b16 %v278
      %v421 = vunpack.c.l.b16 %v279
      %v422 = vunpack.c.l.b16 %v280
      %v423 = vunpack.c.l.b16 %v281
      %v424 = vunpack.c.l.b16 %v282
      %v425 = vunpack.c.l.b16 %v283
      %v426 = vunpack.c.l.b16 %v284
      %v427 = vunpack.c.l.b16 %v285
      %v428 = vunpack.c.l.b16 %v286
      %v429 = vunpack.c.l.b16 %v287
      %v430 = vunpack.c.l.b16 %v288
      %v431 = vunpack.c.l.b16 %v289
      %v432 = vunpack.c.l.b16 %v290
      %v433 = vunpack.c.l.b16 %v291
      %v434 = vunpack.c.l.b16 %v292
      %v435 = vunpack.c.l.b16 %v293
      %v436 = vunpack.c.l.b16 %v294
      %v437 = vunpack.c.l.b16 %v295
      %v438 = vunpack.c.l.b16 %v296
      %v439 = vunpack.c.l.b16 %v297
      %v440 = vunpack.c.l.b16 %v298
      %v441 = vunpack.c.l.b16 %v299
      %v442 = vunpack.c.l.b16 %v300
      %v443 = vunpack.c.l.b16 %v301
      %v444 = vunpack.c.l.b16 %v302
      %v445 = vunpack.c.l.b16 %v303
      %v446 = vunpack.c.l.b16 %v304
      %v447 = vunpack.c.l.b16 %v305
      %v448 = vunpack.c.l.b16 %v306
      %v449 = vunpack.c.l.b16 %v307
      %v450 = vunpack.c.l.b16 %v308
      %v451 = vunpack.c.l.b16 %v309
      %v452 = vunpack.c.l.b16 %v310
      %v453 = vunpack.c.l.b16 %v311
      %v454 = vunpack.c.l.b16 %v312
      %v455 = vunpack.c.l.b16 %v313
      %v456 = vunpack.c.l.b16 %v314
      %v457 = vunpack.c.l.b16 %v315
      %v458 = vunpack.c.l.b16 %v316
      %v459 = vunpack.c.l.b16 %v317
      %v460 = vunpack.c.l.b16 %v318
      %v461 = vunpack.c.l.b16 %v319
      %v462 = vunpack.c.l.b16 %v320
      %v463 = vunpack.c.l.b16 %v321
      %v464 = vunpack.c.l.b16 %v322
      %v465 = vunpack.c.l.b16 %v323
      %v466 = vunpack.c.l.b16 %v324
      %v467 = vunpack.c.l.b16 %v325
      %v468 = vunpack.c.l.b16 %v326
      %v469 = vunpack.c.l.b16 %v327
      %v470 = vunpack.c.l.b16 %v328
      %v471 = vunpack.c.l.b16 %v329
      %v472 = vunpack.c.l.b16 %v330
      %v473 = vunpack.c.l.b16 %v331
      %v474 = vpack.c.b16 %v411, %v410
      %v475 = vpack.c.b16 %v413, %v412
      %v476 = vpack.c.b16 %v415, %v414
      %v477 = vpack.c.b16 %v417, %v416
      %v478 = vpack.c.b16 %v419, %v418
      %v479 = vpack.c.b16 %v421, %v420
      %v480 = vpack.c.b16 %v423, %v422
      %v481 = vpack.c.b16 %v425, %v424
      %v482 = vpack.c.b16 %v427, %v426
      %v483 = vpack.c.b16 %v429, %v428
      %v484 = vpack.c.b16 %v431, %v430
      %v485 = vpack.c.b16 %v433, %v432
      %v486 = vpack.c.b16 %v435, %v434
      %v487 = vpack.c.b16 %v437, %v436
      %v488 = vpack.c.b16 %v439, %v438
      %v489 = vpack.c.b16 %v441, %v440
      %v490 = vpack.c.b16 %v443, %v442
      %v491 = vpack.c.b16 %v445, %v444
      %v492 = vpack.c.b16 %v447, %v446
      %v493 = vpack.c.b16 %v449, %v448
      %v494 = vpack.c.b16 %v451, %v450
      %v495 = vpack.c.b16 %v453, %v452
      %v496 = vpack.c.b16 %v455, %v454
      %v497 = vpack.c.b16 %v457, %v456
      %v498 = vpack.c.b16 %v459, %v458
      %v499 = vpack.c.b16 %v461, %v460
      %v500 = vpack.c.b16 %v463, %v462
      %v501 = vpack.c.b16 %v465, %v464
      %v502 = vpack.c.b16 %v467, %v466
      %v503 = vpack.c.b16 %v469, %v468
      %v504 = vpack.c.b16 %v471, %v470
      %v505 = vpack.c.b16 %v473, %v472
      %538 = vmatprep.subr.bf16.mxu0 0
      %539 = vmatpush1.bf16.msra.mxu0 %v474
      %540 = vmatprep.subr.bf16.mxu0 0
      %541 = vmatpush1.bf16.msra.mxu0 %v475
      %542 = vmatprep.subr.bf16.mxu0 0
      %543 = vmatpush1.bf16.msra.mxu0 %v476
      %544 = vmatprep.subr.bf16.mxu0 0
      %545 = vmatpush1.bf16.msra.mxu0 %v477
      %546 = vmatprep.subr.bf16.mxu0 0
      %547 = vmatpush1.bf16.msra.mxu0 %v478
      %548 = vmatprep.subr.bf16.mxu0 0
      %549 = vmatpush1.bf16.msra.mxu0 %v479
      %550 = vmatprep.subr.bf16.mxu0 0
      %551 = vmatpush1.bf16.msra.mxu0 %v480
      %552 = vmatprep.subr.bf16.mxu0 0
      %553 = vmatpush1.bf16.msra.mxu0 %v481
      %554 = vmatprep.subr.bf16.mxu0 0
      %555 = vmatpush1.bf16.msra.mxu0 %v482
      %556 = vmatprep.subr.bf16.mxu0 0
      %557 = vmatpush1.bf16.msra.mxu0 %v483
      %558 = vmatprep.subr.bf16.mxu0 0
      %559 = vmatpush1.bf16.msra.mxu0 %v484
      %560 = vmatprep.subr.bf16.mxu0 0
      %561 = vmatpush1.bf16.msra.mxu0 %v485
      %562 = vmatprep.subr.bf16.mxu0 0
      %563 = vmatpush1.bf16.msra.mxu0 %v486
      %564 = vmatprep.subr.bf16.mxu0 0
      %565 = vmatpush1.bf16.msra.mxu0 %v487
      %566 = vmatprep.subr.bf16.mxu0 0
      %567 = vmatpush1.bf16.msra.mxu0 %v488
      %568 = vmatprep.subr.bf16.mxu0 0
      %569 = vmatpush1.bf16.msra.mxu0 %v489
      %570 = vmatprep.mubr.bf16.mxu0 %v339
      %571 = vmatmul.mubr.bf16.gmra.mrb[0].mxu0 %v338
      %v572 = vpop.f32.mrb[0].mxu0
      %v573 = vadd.f32 0.0, %v572
      %v574 = vpop.f32.mrb[0].mxu0
      %v575 = vpop.f32.mrb[0].mxu0
      %v576 = vpop.f32.mrb[0].mxu0
      %577 = vdwg.mxu0
      %578 = vmatprep.subr.bf16.mxu0 0
      %579 = vmatpush1.bf16.msra.mxu0 %v490
      %580 = vmatprep.subr.bf16.mxu0 0
      %581 = vmatpush1.bf16.msra.mxu0 %v491
      %582 = vmatprep.subr.bf16.mxu0 0
      %583 = vmatpush1.bf16.msra.mxu0 %v492
      %584 = vmatprep.subr.bf16.mxu0 0
      %585 = vmatpush1.bf16.msra.mxu0 %v493
      %586 = vmatprep.subr.bf16.mxu0 0
      %587 = vmatpush1.bf16.msra.mxu0 %v494
      %588 = vmatprep.subr.bf16.mxu0 0
      %589 = vmatpush1.bf16.msra.mxu0 %v495
      %590 = vmatprep.subr.bf16.mxu0 0
      %591 = vmatpush1.bf16.msra.mxu0 %v496
      %592 = vmatprep.subr.bf16.mxu0 0
      %593 = vmatpush1.bf16.msra.mxu0 %v497
      %594 = vmatprep.subr.bf16.mxu0 0
      %595 = vmatpush1.bf16.msra.mxu0 %v498
      %596 = vmatprep.subr.bf16.mxu0 0
      %597 = vmatpush1.bf16.msra.mxu0 %v499
      %598 = vmatprep.subr.bf16.mxu0 0
      %599 = vmatpush1.bf16.msra.mxu0 %v500
      %600 = vmatprep.subr.bf16.mxu0 0
      %601 = vmatpush1.bf16.msra.mxu0 %v501
      %602 = vmatprep.subr.bf16.mxu0 0
      %603 = vmatpush1.bf16.msra.mxu0 %v502
      %604 = vmatprep.subr.bf16.mxu0 0
      %605 = vmatpush1.bf16.msra.mxu0 %v503
      %606 = vmatprep.subr.bf16.mxu0 0
      %607 = vmatpush1.bf16.msra.mxu0 %v504
      %608 = vmatprep.subr.bf16.mxu0 0
      %609 = vmatpush1.bf16.msra.mxu0 %v505
      %610 = vmatprep.mubr.bf16.mxu0 %v341
      %611 = vmatmul.mubr.bf16.gmra.mrb[0].mxu0 %v340
      %v612 = vpop.f32.mrb[0].mxu0
      %v613 = vadd.f32 %v573, %v612
      %v614 = vpop.f32.mrb[0].mxu0
      %v615 = vpop.f32.mrb[0].mxu0
      %v616 = vpop.f32.mrb[0].mxu0
      %617 = vdwg.mxu0
      %v618 = vadd.f32 %v265, %v613
      %619 = vst [vmem:[%s258] sm:$0xff] %v618
      %p620 = scmp.eq.s32.totalorder %s21, 15
      // Predicated region
      $region37: #{_lambda_.15} parent=31 // pred_check
        %p621 = pneg %p620
      $region38: #{_lambda_.15} parent=31 // pred_check_branch
        %623 = sbr.rel (%p621) target = $region40
      $region39: #{_lambda_.15} parent=31 // pred_region
        %v624 = vld [vmem:[%s258] sm:$0xff]
        %v625 = vld [vmem:[%s251] sm:$0x1]
        %v627 = vlaneseq
        %v628 = vshrl.u32 %v627, 7
        %v629 = vsub.s32 0, %v628
        %v630 = vrot.slane %v625, %v629
        %v632 = vadd.f32 %v624, %v630
        %633 = vst [vmem:[%s258] sm:$0xff] %v632
      $region40: #{_lambda_.15} parent=31 // pred_fallthru
        _
      %p634 = scmp.lt.s32.totalorder %s19, 0
      %s635 = scalar_select %p634, %s19, 0
      %p636 = scmp.lt.s32.totalorder %s20, 0
      %s637 = scalar_select %p636, %s20, 0
      %s638 = sadd.s32 %s637, %s635
      %s639 = smul.addr %s638, 8
      %s640 = scalar_lea.vmem %s3, %s639
      // Predicated region
      $region41: #{_lambda_.15} parent=31 // pred_check
        %p641 = pneg %p135
      $region42: #{_lambda_.15} parent=31 // pred_check_branch
        %643 = sbr.rel (%p641) target = $region44
      $region43: #{_lambda_.15} parent=31 // pred_region
        _
      $region44: #{_lambda_.15} parent=31 // pred_fallthru
        _
      // Predicated region
      $region45: #{_lambda_.15} parent=31 // pred_check
        %p644 = pneg %p135
      $region46: #{_lambda_.15} parent=31 // pred_check_branch
        %646 = sbr.rel (%p644) target = $region48
      $region47: #{_lambda_.15} parent=31 // pred_region
        %p647 = scmp.lt.s32.totalorder %s19, 0
        %s648 = scalar_select %p647, %s19, 0
        %p649 = scmp.lt.s32.totalorder %s20, 0
        %s650 = scalar_select %p649, %s20, 0
        %s651 = sadd.s32 %s650, %s648
        %s652 = smul.addr %s651, 8
        %s653 = scalar_lea.vmem %s3, %s652
      $region48: #{_lambda_.15} parent=31 // pred_fallthru
        _
    $region32: #{_lambda_.15} parent=5 // pred_fallthru
      _
    %p654 = scmp.le.s32.totalorder 2, %s9
    // Predicated region
    $region49: #{_lambda_.15} parent=5 // pred_check
      %p655 = pneg %p654
    $region50: #{_lambda_.15} parent=5 // pred_check_branch
      %657 = sbr.rel (%p655) target = $region52
    $region51: #{_lambda_.15} parent=5 // pred_region
      %s658 = ssub.s32 %s9, 2
    $region52: #{_lambda_.15} parent=5 // pred_fallthru
      _
  $region6: #{_lambda_.15} parent=0 // loop_footer
    %s13 = sadd.s32 1, %s9
  $region7: #{_lambda_.15} parent=0 // loop_footer_branch
    %8 = sbr.rel target = $region3
  $region8: #{_lambda_.15} parent=0 // loop_exit
    _

</llo_original>
